<compile_context>
chip_gen: v7x
topology: tpu7x:2x2x1
jax: 0.10.0
libtpu: 0.0.40
codegen_flags: <defaults>
</compile_context>

<pallas_src>
import functools

import jax
import jax.numpy as jnp
from jax.experimental import pallas as pl
from jax.experimental.pallas import tpu as pltpu

TILE_DST = 128
TILE_SRC = 128


def lasage_s_conv_kernel(
    adj_ref,        # (TILE_DST, TILE_SRC) bf16   dst x src
    feat_src_ref,   # (TILE_SRC, F)        f32
    lab_ref,        # (TILE_SRC, 1)        int32
    hself_ref,      # (TILE_DST, F)        f32
    w_self_ref, b_self_ref,   # (F, 4F+4H+H+O), (1, same)
    w_l1_ref, b_l1_ref,       # (4F, 4H), (1, 4H)   block-diag [f,b,f,b]
    w_l2_ref, b_l2_ref,       # (4H, 4O), (1, 4O)   block-diag [f,b,f,b]
    bal_w2_ref, bal_b2_ref,   # (1, H), (1, 1)
    out_ref,                  # (TILE_DST, O)
    neigh_acc,                # scratch VMEM (TILE_DST, 4F) f32
):
    f32 = jnp.float32
    j = pl.program_id(1)

    @pl.when(j == 0)
    def _init():
        neigh_acc[...] = jnp.zeros_like(neigh_acc)

    # ---- aggregation: mask FEATURES by src label, one adj MXU pass per tile ----
    feat_src = feat_src_ref[...]                       # f32
    lab = lab_ref[...]                                 # (TILE_SRC, 1) int32
    m_fr = jnp.where(lab == 1, feat_src, 0.0)
    m_be = jnp.where(lab == 0, feat_src, 0.0)
    m_unk = jnp.where(lab == 2, feat_src, 0.0)
    # [fraud | benign | unknown | unknown] -> 4F = 128 lanes, full MXU RHS width.
    packed_src = jnp.concatenate([m_fr, m_be, m_unk, m_unk], axis=-1).astype(jnp.bfloat16)
    neigh_acc[...] += jnp.dot(adj_ref[...], packed_src, preferred_element_type=f32)

    # ---- finalize this dst tile on the last src step ----
    @pl.when(j == pl.num_programs(1) - 1)
    def _finalize():
        F = hself_ref.shape[1]
        H = w_l1_ref.shape[1] // 4
        O = w_l2_ref.shape[1] // 4

        h_self = hself_ref[...]                        # (TILE_DST, F) f32
        # One wide matmul for everything that depends only on h_self:
        # [t1(f,b,f,b) | t2(f,b,f,b) | bal_hidden | fc_self]
        proj = jnp.dot(h_self, w_self_ref[...], preferred_element_type=f32) + b_self_ref[...]
        t1 = proj[:, 0:4 * F]
        t2 = proj[:, 4 * F:4 * F + 4 * H]
        bal_h = jnp.maximum(proj[:, 4 * F + 4 * H:4 * F + 5 * H], 0.0)
        self_out = proj[:, 4 * F + 5 * H:4 * F + 5 * H + O]

        # Four LIMLP streams [fraud(fr) | benign(be) | fraud(unk) | benign(unk)]
        # through two block-diagonal 128-wide matmuls.
        x = neigh_acc[...]                             # (TILE_DST, 4F) f32
        z1 = jnp.dot(x * t1, w_l1_ref[...], preferred_element_type=f32) + b_l1_ref[...]
        # NOTE: LISeq.forward silently skips the plain nn.ReLU between LILinears.
        z2 = jnp.dot(z1 * t2, w_l2_ref[...], preferred_element_type=f32) + b_l2_ref[...]
        out_fr = z2[:, 0:O]
        out_be = z2[:, O:2 * O]
        unk_fr = z2[:, 2 * O:3 * O]
        unk_be = z2[:, 3 * O:4 * O]

        # balance = sigmoid(MLP(h_self)); final (H -> 1) layer as VPU mul + reduce.
        bal_logit = jnp.sum(bal_h * bal_w2_ref[...], axis=-1, keepdims=True) + bal_b2_ref[...]
        balance = jax.nn.sigmoid(bal_logit)            # (TILE_DST, 1)

        out_unk = balance * unk_fr + (1.0 - balance) * unk_be
        h_neigh = out_fr + out_be + out_unk
        out_ref[...] = jnp.maximum(self_out + h_neigh, 0.0)   # activation = ReLU


def make_params(key, in_feats, hid_feats, out_feats):
    """Deterministic synthetic init. Weights stored pre-transposed as (in, out)."""
    def lin(k, fan_in, fan_out):
        kw, kb = jax.random.split(k)
        bound = 1.0 / jnp.sqrt(jnp.float32(fan_in))
        w = jax.random.uniform(kw, (fan_in, fan_out), jnp.float32, -bound, bound)
        b = jax.random.uniform(kb, (1, fan_out), jnp.float32, -bound, bound)
        return w, b

    ks = jax.random.split(key, 12)
    p = {}
    # fraud LIMLP: LILinear(in->hid) + LILinear(hid->out); trans_src: Linear(in -> layer_in)
    p["f_ts1_w"], p["f_ts1_b"] = lin(ks[0], in_feats, in_feats)
    p["f_l1_w"], p["f_l1_b"] = lin(ks[1], in_feats, hid_feats)
    p["f_ts2_w"], p["f_ts2_b"] = lin(ks[2], in_feats, hid_feats)
    p["f_l2_w"], p["f_l2_b"] = lin(ks[3], hid_feats, out_feats)
    # benign LIMLP
    p["b_ts1_w"], p["b_ts1_b"] = lin(ks[4], in_feats, in_feats)
    p["b_l1_w"], p["b_l1_b"] = lin(ks[5], in_feats, hid_feats)
    p["b_ts2_w"], p["b_ts2_b"] = lin(ks[6], in_feats, hid_feats)
    p["b_l2_w"], p["b_l2_b"] = lin(ks[7], hid_feats, out_feats)
    # fc_balance MLP (in -> hid -> 1)   TODO(synk): MLP structure assumed (not in source).
    p["bal_w1"], p["bal_b1"] = lin(ks[8], in_feats, hid_feats)
    p["bal_w2"], p["bal_b2"] = lin(ks[9], hid_feats, 1)
    # fc_self
    p["self_w"], p["self_b"] = lin(ks[10], in_feats, out_feats)
    return p


def _block_diag4(wf, wb):
    blocks = [wf, wb, wf, wb]
    n_in = sum(b.shape[0] for b in blocks)
    n_out = sum(b.shape[1] for b in blocks)
    out = jnp.zeros((n_in, n_out), wf.dtype)
    ri = ci = 0
    for b in blocks:
        out = out.at[ri:ri + b.shape[0], ci:ci + b.shape[1]].set(b)
        ri += b.shape[0]
        ci += b.shape[1]
    return out


def pack_params(p):
    """Host-side weight packing: wide h_self projection + block-diag LIMLP stages."""
    cat = lambda names: jnp.concatenate([p[n] for n in names], axis=1)
    w_ts1_4 = cat(["f_ts1_w", "b_ts1_w", "f_ts1_w", "b_ts1_w"])        # (F, 4F)
    w_ts2_4 = cat(["f_ts2_w", "b_ts2_w", "f_ts2_w", "b_ts2_w"])        # (F, 4H)
    w_self = jnp.concatenate([w_ts1_4, w_ts2_4, p["bal_w1"], p["self_w"]], axis=1)
    b_ts1_4 = cat(["f_ts1_b", "b_ts1_b", "f_ts1_b", "b_ts1_b"])
    b_ts2_4 = cat(["f_ts2_b", "b_ts2_b", "f_ts2_b", "b_ts2_b"])
    b_self = jnp.concatenate([b_ts1_4, b_ts2_4, p["bal_b1"], p["self_b"]], axis=1)
    return {
        "w_self": w_self, "b_self": b_self,
        "w_l1": _block_diag4(p["f_l1_w"], p["b_l1_w"]),
        "b_l1": cat(["f_l1_b", "b_l1_b", "f_l1_b", "b_l1_b"]),
        "w_l2": _block_diag4(p["f_l2_w"], p["b_l2_w"]),
        "b_l2": cat(["f_l2_b", "b_l2_b", "f_l2_b", "b_l2_b"]),
        "bal_w2_row": p["bal_w2"].T,   # (1, H)
        "bal_b2": p["bal_b2"],         # (1, 1)
    }


@jax.jit
def lasage_s_conv(feat, adj_bf16, labels_col, packed):
    n, f = feat.shape
    h = packed["w_l1"].shape[1] // 4
    o = packed["w_l2"].shape[1] // 4
    assert n % TILE_DST == 0 and n % TILE_SRC == 0, "toy driver requires N % 128 == 0"
    grid = (n // TILE_DST, n // TILE_SRC)
    full = lambda a: pl.BlockSpec(a.shape, lambda i, j: (0, 0))   # resident weights

    grid_spec = pltpu.PrefetchScalarGridSpec(
        num_scalar_prefetch=0,
        grid=grid,
        in_specs=[
            pl.BlockSpec((TILE_DST, TILE_SRC), lambda i, j: (i, j)),   # adjacency tile
            pl.BlockSpec((TILE_SRC, f), lambda i, j: (j, 0)),          # src features
            pl.BlockSpec((TILE_SRC, 1), lambda i, j: (j, 0)),          # src labels (column)
            pl.BlockSpec((TILE_DST, f), lambda i, j: (i, 0)),          # dst features (h_self)
            full(packed["w_self"]), full(packed["b_self"]),
            full(packed["w_l1"]), full(packed["b_l1"]),
            full(packed["w_l2"]), full(packed["b_l2"]),
            full(packed["bal_w2_row"]), full(packed["bal_b2"]),
        ],
        out_specs=pl.BlockSpec((TILE_DST, o), lambda i, j: (i, 0)),
        scratch_shapes=[pltpu.VMEM((TILE_DST, 4 * f), jnp.float32)],
    )
    return pl.pallas_call(
        lasage_s_conv_kernel,
        out_shape=jax.ShapeDtypeStruct((n, o), jnp.float32),
        grid_spec=grid_spec,
        compiler_params=pltpu.CompilerParams(
            dimension_semantics=("parallel", "arbitrary")),
    )(
        adj_bf16, feat, labels_col, feat,
        packed["w_self"], packed["b_self"],
        packed["w_l1"], packed["b_l1"],
        packed["w_l2"], packed["b_l2"],
        packed["bal_w2_row"], packed["bal_b2"],
    )


def lasage_s_conv_ref(feat, adj, labels_col, params):
    """Pure-JAX f32 reference mirroring the PyTorch forward for this config."""
    h_self = feat
    lab = labels_col[:, 0]
    agg = lambda c: (adj * (lab == c).astype(feat.dtype)[None, :]) @ feat
    neigh_fr, neigh_be, neigh_unk = agg(1), agg(0), agg(2)

    def limlp(x, pre):
        t1 = h_self @ params[pre + "_ts1_w"] + params[pre + "_ts1_b"]
        z1 = (x * t1) @ params[pre + "_l1_w"] + params[pre + "_l1_b"]
        t2 = h_self @ params[pre + "_ts2_w"] + params[pre + "_ts2_b"]
        return (z1 * t2) @ params[pre + "_l2_w"] + params[pre + "_l2_b"]

    out_fr = limlp(neigh_fr, "f")
    out_be = limlp(neigh_be, "b")
    bal_h = jnp.maximum(h_self @ params["bal_w1"] + params["bal_b1"], 0.0)
    balance = jax.nn.sigmoid(bal_h @ params["bal_w2"] + params["bal_b2"])
    out_unk = balance * limlp(neigh_unk, "f") + (1.0 - balance) * limlp(neigh_unk, "b")
    h_neigh = out_fr + out_be + out_unk
    rst = h_self @ params["self_w"] + params["self_b"] + h_neigh
    return jnp.maximum(rst, 0.0)


if __name__ == "__main__":
    N, IN_FEATS, HID_FEATS, OUT_FEATS = 256, 32, 32, 32

    key = jax.random.PRNGKey(0)
    k_feat, k_adj, k_lab, k_par = jax.random.split(key, 4)

    feat = jax.random.normal(k_feat, (N, IN_FEATS), jnp.float32)
    adj = (jax.random.uniform(k_adj, (N, N)) < 0.3).astype(jnp.float32)   # dst x src
    labels = jax.random.randint(k_lab, (N, 1), 0, 3, jnp.int32)           # {0,1,2} column
    params = make_params(k_par, IN_FEATS, HID_FEATS, OUT_FEATS)
    packed = pack_params(params)

    # bf16 adjacency is exact for {0,1}; halves HBM/VMEM traffic of the dominant operand.
    adj_bf16 = adj.astype(jnp.bfloat16)

    out = lasage_s_conv(feat, adj_bf16, labels, packed)
    out = jax.block_until_ready(out)

    ref = lasage_s_conv_ref(feat, adj, labels, params)
    assert out.shape == (N, OUT_FEATS)
    # Only low-precision step is bf16 rounding of the (masked) features feeding the
    # aggregation matmul (f32 accumulation) -> a few-percent tolerance is ample.
    assert jnp.allclose(out, ref, atol=3e-2, rtol=3e-2), "mismatch vs. JAX reference"
    print("KERNEL_OK")
</pallas_src>

<mosaic_0001>
module attributes {stable_mosaic.version = 11 : i64} {
  func.func @lasage_s_conv_kernel(%arg0: i32, %arg1: i32, %arg2: memref<128x128xbf16, #tpu.memory_space<vmem>>, %arg3: memref<128x32xf32, #tpu.memory_space<vmem>>, %arg4: memref<128x1xi32, #tpu.memory_space<vmem>>, %arg5: memref<128x32xf32, #tpu.memory_space<vmem>>, %arg6: memref<32x320xf32, #tpu.memory_space<vmem>>, %arg7: memref<1x320xf32, #tpu.memory_space<vmem>>, %arg8: memref<128x128xf32, #tpu.memory_space<vmem>>, %arg9: memref<1x128xf32, #tpu.memory_space<vmem>>, %arg10: memref<128x128xf32, #tpu.memory_space<vmem>>, %arg11: memref<1x128xf32, #tpu.memory_space<vmem>>, %arg12: memref<1x32xf32, #tpu.memory_space<vmem>>, %arg13: memref<1x1xf32, #tpu.memory_space<vmem>>, %arg14: memref<128x32xf32, #tpu.memory_space<vmem>>, %arg15: memref<128x128xf32, #tpu.memory_space<vmem>>) attributes {dimension_semantics = [#tpu.dimension_semantics<parallel>, #tpu.dimension_semantics<arbitrary>], iteration_bounds = array<i64: 2, 2>, scalar_prefetch = 0 : i64, scratch_operands = 1 : i64, tpu.core_type = #tpu.core_type<tc>, window_params = [{transform_indices = @transform_0, window_bounds = array<i64: 128, 128>}, {transform_indices = @transform_1, window_bounds = array<i64: 128, 32>}, {transform_indices = @transform_2, window_bounds = array<i64: 128, 1>}, {transform_indices = @transform_3, window_bounds = array<i64: 128, 32>}, {pipeline_mode = #tpu.pipeline_mode<synchronous>, transform_indices = @transform_4, window_bounds = array<i64: 32, 320>}, {pipeline_mode = #tpu.pipeline_mode<synchronous>, transform_indices = @transform_5, window_bounds = array<i64: 1, 320>}, {pipeline_mode = #tpu.pipeline_mode<synchronous>, transform_indices = @transform_6, window_bounds = array<i64: 128, 128>}, {pipeline_mode = #tpu.pipeline_mode<synchronous>, transform_indices = @transform_7, window_bounds = array<i64: 1, 128>}, {pipeline_mode = #tpu.pipeline_mode<synchronous>, transform_indices = @transform_8, window_bounds = array<i64: 128, 128>}, {pipeline_mode = #tpu.pipeline_mode<synchronous>, transform_indices = @transform_9, window_bounds = array<i64: 1, 128>}, {pipeline_mode = #tpu.pipeline_mode<synchronous>, transform_indices = @transform_10, window_bounds = array<i64: 1, 32>}, {pipeline_mode = #tpu.pipeline_mode<synchronous>, transform_indices = @transform_11, window_bounds = array<i64: 1, 1>}, {transform_indices = @transform_12, window_bounds = array<i64: 128, 32>}]} {
    %c0_i32 = arith.constant 0 : i32
    %0 = arith.cmpi eq, %arg1, %c0_i32 : i32
    %1 = arith.extui %0 : i1 to i32
    %c0_i32_0 = arith.constant 0 : i32
    %2 = arith.cmpi ne, %1, %c0_i32_0 : i32
    scf.if %2 {
      %cst_16 = arith.constant 0.000000e+00 : f32
      %33 = vector.broadcast %cst_16 : f32 to vector<128x128xf32>
      %c0_17 = arith.constant 0 : index
      %c0_18 = arith.constant 0 : index
      %34 = vector.load %arg15[%c0_17, %c0_18] : memref<128x128xf32, #tpu.memory_space<vmem>>, vector<128x128xf32>
      tpu.vector_store %arg15[%c0_17, %c0_18], %33 {strides = array<i32>} : memref<128x128xf32, #tpu.memory_space<vmem>>, vector<128x128xf32>,
    } else {
    }
    %c0 = arith.constant 0 : index
    %c0_1 = arith.constant 0 : index
    %3 = vector.load %arg3[%c0, %c0_1] : memref<128x32xf32, #tpu.memory_space<vmem>>, vector<128x32xf32>
    %c0_2 = arith.constant 0 : index
    %c0_3 = arith.constant 0 : index
    %4 = vector.load %arg4[%c0_2, %c0_3] : memref<128x1xi32, #tpu.memory_space<vmem>>, vector<128x1xi32>
    %c1_i32 = arith.constant 1 : i32
    %5 = vector.broadcast %c1_i32 : i32 to vector<128x1xi32>
    %6 = arith.cmpi eq, %4, %5 : vector<128x1xi32>
    %cst = arith.constant 0.000000e+00 : f32
    %7 = vector.shape_cast %6 : vector<128x1xi1> to vector<128x1xi1>
    %8 = vector.broadcast %7 : vector<128x1xi1> to vector<128x32xi1>
    %9 = vector.broadcast %cst : f32 to vector<128x32xf32>
    %10 = arith.select %8, %3, %9 : vector<128x32xi1>, vector<128x32xf32>
    %c0_i32_4 = arith.constant 0 : i32
    %11 = vector.broadcast %c0_i32_4 : i32 to vector<128x1xi32>
    %12 = arith.cmpi eq, %4, %11 : vector<128x1xi32>
    %cst_5 = arith.constant 0.000000e+00 : f32
    %13 = vector.shape_cast %12 : vector<128x1xi1> to vector<128x1xi1>
    %14 = vector.broadcast %13 : vector<128x1xi1> to vector<128x32xi1>
    %15 = vector.broadcast %cst_5 : f32 to vector<128x32xf32>
    %16 = arith.select %14, %3, %15 : vector<128x32xi1>, vector<128x32xf32>
    %c2_i32 = arith.constant 2 : i32
    %17 = vector.broadcast %c2_i32 : i32 to vector<128x1xi32>
    %18 = arith.cmpi eq, %4, %17 : vector<128x1xi32>
    %cst_6 = arith.constant 0.000000e+00 : f32
    %19 = vector.shape_cast %18 : vector<128x1xi1> to vector<128x1xi1>
    %20 = vector.broadcast %19 : vector<128x1xi1> to vector<128x32xi1>
    %21 = vector.broadcast %cst_6 : f32 to vector<128x32xf32>
    %22 = arith.select %20, %3, %21 : vector<128x32xi1>, vector<128x32xf32>
    %23 = tpu.concatenate %10, %16, %22, %22 in 1 : vector<128x32xf32>, vector<128x32xf32>, vector<128x32xf32>, vector<128x32xf32> -> vector<128x128xf32>
    %24 = arith.truncf %23 : vector<128x128xf32> to vector<128x128xbf16>
    %c0_7 = arith.constant 0 : index
    %c0_8 = arith.constant 0 : index
    %25 = vector.load %arg15[%c0_7, %c0_8] : memref<128x128xf32, #tpu.memory_space<vmem>>, vector<128x128xf32>
    %c0_9 = arith.constant 0 : index
    %c0_10 = arith.constant 0 : index
    %26 = vector.load %arg2[%c0_9, %c0_10] : memref<128x128xbf16, #tpu.memory_space<vmem>>, vector<128x128xbf16>
    %cst_11 = arith.constant dense<0.000000e+00> : vector<128x128xf32>
    %27 = tpu.matmul %26, %24, %cst_11 {dimension_numbers = #tpu.dot_dimension_numbers<[1], [0], [0], [1], [0, 0, 1, 1], [], []>} : vector<128x128xbf16>, vector<128x128xbf16>, vector<128x128xf32> -> vector<128x128xf32>
    %28 = arith.addf %25, %27 : vector<128x128xf32>
    %c0_12 = arith.constant 0 : index
    %c0_13 = arith.constant 0 : index
    %29 = vector.load %arg15[%c0_12, %c0_13] : memref<128x128xf32, #tpu.memory_space<vmem>>, vector<128x128xf32>
    tpu.vector_store %arg15[%c0_12, %c0_13], %28 {strides = array<i32>} : memref<128x128xf32, #tpu.memory_space<vmem>>, vector<128x128xf32>,
    %c1_i32_14 = arith.constant 1 : i32
    %30 = arith.cmpi eq, %arg1, %c1_i32_14 : i32
    %31 = arith.extui %30 : i1 to i32
    %c0_i32_15 = arith.constant 0 : i32
    %32 = arith.cmpi ne, %31, %c0_i32_15 : i32
    scf.if %32 {
      %c0_16 = arith.constant 0 : index
      %c0_17 = arith.constant 0 : index
      %33 = vector.load %arg5[%c0_16, %c0_17] : memref<128x32xf32, #tpu.memory_space<vmem>>, vector<128x32xf32>
      %c0_18 = arith.constant 0 : index
      %c0_19 = arith.constant 0 : index
      %34 = vector.load %arg6[%c0_18, %c0_19] : memref<32x320xf32, #tpu.memory_space<vmem>>, vector<32x320xf32>
      %cst_20 = arith.constant dense<0.000000e+00> : vector<128x320xf32>
      %35 = tpu.matmul %33, %34, %cst_20 {dimension_numbers = #tpu.dot_dimension_numbers<[1], [0], [0], [1], [0, 0, 1, 1], [], []>} : vector<128x32xf32>, vector<32x320xf32>, vector<128x320xf32> -> vector<128x320xf32>
      %c0_21 = arith.constant 0 : index
      %c0_22 = arith.constant 0 : index
      %36 = vector.load %arg7[%c0_21, %c0_22] : memref<1x320xf32, #tpu.memory_space<vmem>>, vector<1x320xf32>
      %37 = vector.broadcast %36 : vector<1x320xf32> to vector<128x320xf32>
      %38 = arith.addf %35, %37 : vector<128x320xf32>
      %39 = vector.extract_strided_slice %38 {offsets = [0, 0], sizes = [128, 128], strides = [1, 1]} : vector<128x320xf32> to vector<128x128xf32>
      %40 = vector.extract_strided_slice %38 {offsets = [0, 128], sizes = [128, 128], strides = [1, 1]} : vector<128x320xf32> to vector<128x128xf32>
      %41 = vector.extract_strided_slice %38 {offsets = [0, 256], sizes = [128, 32], strides = [1, 1]} : vector<128x320xf32> to vector<128x32xf32>
      %cst_23 = arith.constant 0.000000e+00 : f32
      %42 = vector.broadcast %cst_23 : f32 to vector<128x32xf32>
      %43 = arith.maximumf %41, %42 : vector<128x32xf32>
      %44 = vector.extract_strided_slice %38 {offsets = [0, 288], sizes = [128, 32], strides = [1, 1]} : vector<128x320xf32> to vector<128x32xf32>
      %c0_24 = arith.constant 0 : index
      %c0_25 = arith.constant 0 : index
      %45 = vector.load %arg15[%c0_24, %c0_25] : memref<128x128xf32, #tpu.memory_space<vmem>>, vector<128x128xf32>
      %46 = arith.mulf %45, %39 : vector<128x128xf32>
      %c0_26 = arith.constant 0 : index
      %c0_27 = arith.constant 0 : index
      %47 = vector.load %arg8[%c0_26, %c0_27] : memref<128x128xf32, #tpu.memory_space<vmem>>, vector<128x128xf32>
      %cst_28 = arith.constant dense<0.000000e+00> : vector<128x128xf32>
      %48 = tpu.matmul %46, %47, %cst_28 {dimension_numbers = #tpu.dot_dimension_numbers<[1], [0], [0], [1], [0, 0, 1, 1], [], []>} : vector<128x128xf32>, vector<128x128xf32>, vector<128x128xf32> -> vector<128x128xf32>
      %c0_29 = arith.constant 0 : index
      %c0_30 = arith.constant 0 : index
      %49 = vector.load %arg9[%c0_29, %c0_30] : memref<1x128xf32, #tpu.memory_space<vmem>>, vector<1x128xf32>
      %50 = vector.broadcast %49 : vector<1x128xf32> to vector<128x128xf32>
      %51 = arith.addf %48, %50 : vector<128x128xf32>
      %52 = arith.mulf %51, %40 : vector<128x128xf32>
      %c0_31 = arith.constant 0 : index
      %c0_32 = arith.constant 0 : index
      %53 = vector.load %arg10[%c0_31, %c0_32] : memref<128x128xf32, #tpu.memory_space<vmem>>, vector<128x128xf32>
      %cst_33 = arith.constant dense<0.000000e+00> : vector<128x128xf32>
      %54 = tpu.matmul %52, %53, %cst_33 {dimension_numbers = #tpu.dot_dimension_numbers<[1], [0], [0], [1], [0, 0, 1, 1], [], []>} : vector<128x128xf32>, vector<128x128xf32>, vector<128x128xf32> -> vector<128x128xf32>
      %c0_34 = arith.constant 0 : index
      %c0_35 = arith.constant 0 : index
      %55 = vector.load %arg11[%c0_34, %c0_35] : memref<1x128xf32, #tpu.memory_space<vmem>>, vector<1x128xf32>
      %56 = vector.broadcast %55 : vector<1x128xf32> to vector<128x128xf32>
      %57 = arith.addf %54, %56 : vector<128x128xf32>
      %58 = vector.extract_strided_slice %57 {offsets = [0, 0], sizes = [128, 32], strides = [1, 1]} : vector<128x128xf32> to vector<128x32xf32>
      %59 = vector.extract_strided_slice %57 {offsets = [0, 32], sizes = [128, 32], strides = [1, 1]} : vector<128x128xf32> to vector<128x32xf32>
      %60 = vector.extract_strided_slice %57 {offsets = [0, 64], sizes = [128, 32], strides = [1, 1]} : vector<128x128xf32> to vector<128x32xf32>
      %61 = vector.extract_strided_slice %57 {offsets = [0, 96], sizes = [128, 32], strides = [1, 1]} : vector<128x128xf32> to vector<128x32xf32>
      %c0_36 = arith.constant 0 : index
      %c0_37 = arith.constant 0 : index
      %62 = vector.load %arg12[%c0_36, %c0_37] : memref<1x32xf32, #tpu.memory_space<vmem>>, vector<1x32xf32>
      %63 = vector.broadcast %62 : vector<1x32xf32> to vector<128x32xf32>
      %64 = arith.mulf %43, %63 : vector<128x32xf32>
      %cst_38 = arith.constant dense<0.000000e+00> : vector<128xf32>
      %65 = vector.multi_reduction <add>, %64, %cst_38 [1] : vector<128x32xf32> to vector<128xf32>
      %66 = vector.shape_cast %65 : vector<128xf32> to vector<128x1xf32>
      %c0_39 = arith.constant 0 : index
      %c0_40 = arith.constant 0 : index
      %67 = vector.load %arg13[%c0_39, %c0_40] : memref<1x1xf32, #tpu.memory_space<vmem>>, vector<1x1xf32>
      %68 = vector.broadcast %67 : vector<1x1xf32> to vector<128x1xf32>
      %69 = arith.addf %66, %68 : vector<128x1xf32>
      %70 = arith.negf %69 : vector<128x1xf32>
      %71 = math.exp %70 : vector<128x1xf32>
      %cst_41 = arith.constant 1.000000e+00 : f32
      %72 = vector.broadcast %cst_41 : f32 to vector<128x1xf32>
      %73 = arith.addf %72, %71 : vector<128x1xf32>
      %74 = arith.divf %72, %73 : vector<128x1xf32>
      %75 = vector.broadcast %74 : vector<128x1xf32> to vector<128x32xf32>
      %76 = arith.mulf %75, %60 : vector<128x32xf32>
      %cst_42 = arith.constant 1.000000e+00 : f32
      %77 = vector.broadcast %cst_42 : f32 to vector<128x1xf32>
      %78 = arith.subf %77, %74 : vector<128x1xf32>
      %79 = vector.broadcast %78 : vector<128x1xf32> to vector<128x32xf32>
      %80 = arith.mulf %79, %61 : vector<128x32xf32>
      %81 = arith.addf %76, %80 : vector<128x32xf32>
      %82 = arith.addf %58, %59 : vector<128x32xf32>
      %83 = arith.addf %82, %81 : vector<128x32xf32>
      %84 = arith.addf %44, %83 : vector<128x32xf32>
      %cst_43 = arith.constant 0.000000e+00 : f32
      %85 = vector.broadcast %cst_43 : f32 to vector<128x32xf32>
      %86 = arith.maximumf %84, %85 : vector<128x32xf32>
      %c0_44 = arith.constant 0 : index
      %c0_45 = arith.constant 0 : index
      %87 = vector.load %arg14[%c0_44, %c0_45] : memref<128x32xf32, #tpu.memory_space<vmem>>, vector<128x32xf32>
      tpu.vector_store %arg14[%c0_44, %c0_45], %86 {strides = array<i32>} : memref<128x32xf32, #tpu.memory_space<vmem>>, vector<128x32xf32>,
    } else {
    }
    return
  }
  func.func @transform_0(%arg0: i32, %arg1: i32) -> (i32, i32) {
    %c0_i32 = arith.constant 0 : i32
    return %arg0, %arg1 : i32, i32
  }
  func.func @transform_1(%arg0: i32, %arg1: i32) -> (i32, i32) {
    %c0_i32 = arith.constant 0 : i32
    %c0_i32_0 = arith.constant 0 : i32
    return %arg1, %c0_i32 : i32, i32
  }
  func.func @transform_2(%arg0: i32, %arg1: i32) -> (i32, i32) {
    %c0_i32 = arith.constant 0 : i32
    %c0_i32_0 = arith.constant 0 : i32
    return %arg1, %c0_i32 : i32, i32
  }
  func.func @transform_3(%arg0: i32, %arg1: i32) -> (i32, i32) {
    %c0_i32 = arith.constant 0 : i32
    %c0_i32_0 = arith.constant 0 : i32
    return %arg0, %c0_i32 : i32, i32
  }
  func.func @transform_4(%arg0: i32, %arg1: i32) -> (i32, i32) {
    %c0_i32 = arith.constant 0 : i32
    %c0_i32_0 = arith.constant 0 : i32
    %c0_i32_1 = arith.constant 0 : i32
    return %c0_i32, %c0_i32_0 : i32, i32
  }
  func.func @transform_5(%arg0: i32, %arg1: i32) -> (i32, i32) {
    %c0_i32 = arith.constant 0 : i32
    %c0_i32_0 = arith.constant 0 : i32
    %c0_i32_1 = arith.constant 0 : i32
    return %c0_i32, %c0_i32_0 : i32, i32
  }
  func.func @transform_6(%arg0: i32, %arg1: i32) -> (i32, i32) {
    %c0_i32 = arith.constant 0 : i32
    %c0_i32_0 = arith.constant 0 : i32
    %c0_i32_1 = arith.constant 0 : i32
    return %c0_i32, %c0_i32_0 : i32, i32
  }
  func.func @transform_7(%arg0: i32, %arg1: i32) -> (i32, i32) {
    %c0_i32 = arith.constant 0 : i32
    %c0_i32_0 = arith.constant 0 : i32
    %c0_i32_1 = arith.constant 0 : i32
    return %c0_i32, %c0_i32_0 : i32, i32
  }
  func.func @transform_8(%arg0: i32, %arg1: i32) -> (i32, i32) {
    %c0_i32 = arith.constant 0 : i32
    %c0_i32_0 = arith.constant 0 : i32
    %c0_i32_1 = arith.constant 0 : i32
    return %c0_i32, %c0_i32_0 : i32, i32
  }
  func.func @transform_9(%arg0: i32, %arg1: i32) -> (i32, i32) {
    %c0_i32 = arith.constant 0 : i32
    %c0_i32_0 = arith.constant 0 : i32
    %c0_i32_1 = arith.constant 0 : i32
    return %c0_i32, %c0_i32_0 : i32, i32
  }
  func.func @transform_10(%arg0: i32, %arg1: i32) -> (i32, i32) {
    %c0_i32 = arith.constant 0 : i32
    %c0_i32_0 = arith.constant 0 : i32
    %c0_i32_1 = arith.constant 0 : i32
    return %c0_i32, %c0_i32_0 : i32, i32
  }
  func.func @transform_11(%arg0: i32, %arg1: i32) -> (i32, i32) {
    %c0_i32 = arith.constant 0 : i32
    %c0_i32_0 = arith.constant 0 : i32
    %c0_i32_1 = arith.constant 0 : i32
    return %c0_i32, %c0_i32_0 : i32, i32
  }
  func.func @transform_12(%arg0: i32, %arg1: i32) -> (i32, i32) {
    %c0_i32 = arith.constant 0 : i32
    %c0_i32_0 = arith.constant 0 : i32
    return %arg0, %c0_i32 : i32, i32
  }
}

</mosaic_0001>

<llo_original>
// kernel: lasage_s_conv.1
$region0: #{lasage_s_conv.1}
  #allocation0 [shape = 'u32[]', space=smem, size = 0x4, offset = 0x4, fixed_abs, tag = 'smem constant byte address 0x4 - core index']
  #allocation1 [shape = 'u32[144,128]{1,0:T(1,128)}', space=vmem, size = 0x12000, scoped, tag = 'internal scratch']
  #allocation2 [shape = 'f32[128,128]{1,0:T(8,128)}', space=vmem, size = 0x10000, scoped, tag = 'scratch operand']
  #allocation3 [shape = 'f32[1,1]{1,0:T(1,128)S(1)}', space=vmem, size = 0x200, scoped, tag = 'scoped memory for lasage_s_conv.1']
  %s0 = inlined_call_operand.vmem [shape: bf16[256,256], index: 0, kind: input, shape index: {}]
  %s1 = inlined_call_operand.vmem [shape: f32[256,32], index: 1, kind: input, shape index: {}, may-alias: {1,3}]
  %s2 = inlined_call_operand.vmem [shape: s32[256,1], index: 2, kind: input, shape index: {}]
  %s3 = inlined_call_operand.vmem [shape: f32[256,32], index: 3, kind: input, shape index: {}, may-alias: {1,3}]
  %s4 = inlined_call_operand.vmem [shape: f32[32,320], index: 4, kind: input, shape index: {}]
  %s5 = inlined_call_operand.hbm [shape: f32[1,320], index: 5, kind: input, shape index: {}]
  %s6 = inlined_call_operand.vmem [shape: f32[128,128], index: 6, kind: input, shape index: {}]
  %s7 = inlined_call_operand.hbm [shape: f32[1,128], index: 7, kind: input, shape index: {}]
  %s8 = inlined_call_operand.vmem [shape: f32[128,128], index: 8, kind: input, shape index: {}]
  %s9 = inlined_call_operand.hbm [shape: f32[1,128], index: 9, kind: input, shape index: {}]
  %s10 = inlined_call_operand.hbm [shape: f32[1,32], index: 10, kind: input, shape index: {}]
  %s11 = inlined_call_operand.<no memory space> [shape: f32[1,1], index: 11, kind: input, shape index: {}]
  %s12 = inlined_call_operand.vmem [shape: f32[256,32], index: 12, kind: output, shape index: {}]
  %s13 = sld [smem:[#allocation0]]
  $region146: #{lasage_s_conv.1} parent=0
    _
  %s15 = ssub.s32 1, %s13
  %s16 = scalar_select 0, %s15, %s13
  %v17 = vstv %s11
  %18 = vst [vmem:[#allocation3] sm:$0x1] %v17
  $region1: #{lasage_s_conv.1} parent=0
    #allocation4 [shape = 'u8[65536]{0}', space=vmem, size = 0x10000, scoped, tag = 'input window, operand 0']
    #allocation5 [shape = 'u8[1536]{0}', space=vmem, size = 0x800, scoped, tag = 'input window, operand 5, single buffered']
    #allocation6 [shape = 's32[2]{0}', space=sflag, size = 0x8, scoped, tag = 'scoped memory for lasage_s_conv.1']
    #allocation7 [shape = 'u8[512]{0}', space=vmem, size = 0x400, scoped, tag = 'input window, operand 7, single buffered']
    #allocation8 [shape = 's32[1]{0}', space=sflag, size = 0x4, scoped, tag = 'scoped memory for lasage_s_conv.1']
    #allocation9 [shape = 'u8[512]{0}', space=vmem, size = 0x400, scoped, tag = 'input window, operand 9, single buffered']
    #allocation10 [shape = 'u8[512]{0}', space=vmem, size = 0x400, scoped, tag = 'input window, operand 10, single buffered']
    #allocation11 [shape = 's32[1]{0}', space=sflag, size = 0x4, scoped, tag = 'scoped memory for lasage_s_conv.1']
    %19 = vsyncpa [#allocation6], 0
    %20 = vsyncpa [#allocation8], 0
    %21 = vsyncpa [#allocation11], 0
    loop: start=0, step=1, limit=6
    $region2: #{lasage_s_conv.1} parent=1 // loop_pre_header
      _
    $region3: #{lasage_s_conv.1} parent=1 // loop_header
      %s23 = sphi 0, %s27
      %p24 = scmp.ge.s32.totalorder %s23, 6
      %s30 = sphi 0, %s42
      %s31 = sphi 0, %s38
      %s32 = sphi 0, %s30
      %s33 = sphi 0, %s31
      %s34 = sphi 0, %s32
      %s35 = sphi 0, %s33
      %s47 = sphi 0, %s49
      %s50 = sphi 0, %s47
      %s51 = sphi 0, %s50
      %s67 = sphi 0, %s51
      %s73 = sphi 0, %s75
      %s76 = sphi 0, %s73
      %s77 = sphi 0, %s76
      %s93 = sphi 0, %s77
      %s99 = sphi 0, %s101
      %s102 = sphi 0, %s99
      %s103 = sphi 0, %s102
      %s119 = sphi 0, %s103
      %s125 = sphi 0, %s127
      %s128 = sphi 0, %s125
      %s129 = sphi 0, %s128
      %s145 = sphi 0, %s129
      %s149 = sphi 0, %s149
      %s151 = sphi 0, %s149
      %s152 = sphi 0, %s151
      %s166 = sphi 0, %s152
      %s170 = sphi 0, %s170
      %s172 = sphi 0, %s170
      %s173 = sphi 0, %s172
      %s187 = sphi 0, %s173
      %s191 = sphi 0, %s191
      %s193 = sphi 0, %s191
      %s194 = sphi 0, %s193
      %s208 = sphi 0, %s194
      %s212 = sphi 0, %s212
      %s214 = sphi 0, %s212
      %s215 = sphi 0, %s214
      %s229 = sphi 0, %s215
      %s233 = sphi 0, %s233
      %s235 = sphi 0, %s233
      %s236 = sphi 0, %s235
      %s250 = sphi 0, %s236
      %s254 = sphi 0, %s254
      %s256 = sphi 0, %s254
      %s257 = sphi 0, %s256
      %s271 = sphi 0, %s257
      %s275 = sphi 0, %s275
      %s277 = sphi 0, %s275
      %s278 = sphi 0, %s277
      %s292 = sphi 0, %s278
      %s296 = sphi 0, %s296
      %s298 = sphi 0, %s296
      %s299 = sphi 0, %s298
      %s313 = sphi 0, %s299
      %s319 = sphi 0, %s321
      %s322 = sphi 0, %s319
      %s323 = sphi 0, %s322
      %s339 = sphi 0, %s323
    $region4: #{lasage_s_conv.1} parent=1 // loop_header_branch
      %26 = sbr.rel (%p24) target = $region8
    $region5: #{lasage_s_conv.1} parent=1 // loop_body
      %s28 = ssub.s32 %s23, 1
      %s29 = ssub.s32 %s23, 2
      %s36 = sadd.s32 1, %s31
      %p37 = scmp.ge.s32.totalorder %s36, 2
      %s38 = scalar_select %p37, 0, %s36
      %s39 = sadd.s32 1, %s30
      %s40 = scalar_select %p37, %s39, %s30
      %p41 = scmp.ge.s32.totalorder %s40, 2
      %s42 = scalar_select %p41, 0, %s40
      %s43 = ssub.s32 %s30, %s42
      %s44 = ssub.s32 %s31, %s38
      %s45 = sor.u32 %s43, %s44
      %p46 = scmp.eq.s32.totalorder %s45, 0
      %s48 = sadd.s32 %s47, 1
      %s49 = scalar_select %p46, %s47, %s48
      %p52 = pneg %p46
      %p53 = scmp.eq.s32.totalorder %s23, 3
      %p54 = por %p52, %p53
      %p55 = scmp.ne.s32.totalorder %s47, %s50
      %p56 = scmp.eq.s32.totalorder %s23, 0
      %p57 = por %p55, %p56
      %p58 = scmp.ne.s32.totalorder %s47, %s50
      %p59 = scmp.eq.s32.totalorder %s28, 3
      %p60 = por %p58, %p59
      %p61 = scmp.ne.s32.totalorder %s50, %s51
      %p62 = scmp.eq.s32.totalorder %s28, 0
      %p63 = por %p61, %p62
      %p64 = scmp.ne.s32.totalorder %s50, %s51
      %p65 = scmp.eq.s32.totalorder %s29, 3
      %p66 = por %p64, %p65
      %p68 = scmp.ne.s32.totalorder %s51, %s67
      %p69 = scmp.eq.s32.totalorder %s29, 0
      %p70 = por %p68, %p69
      %s71 = ssub.s32 %s31, %s38
      %p72 = scmp.eq.s32.totalorder %s71, 0
      %s74 = sadd.s32 %s73, 1
      %s75 = scalar_select %p72, %s73, %s74
      %p78 = pneg %p72
      %p79 = scmp.eq.s32.totalorder %s23, 3
      %p80 = por %p78, %p79
      %p81 = scmp.ne.s32.totalorder %s73, %s76
      %p82 = scmp.eq.s32.totalorder %s23, 0
      %p83 = por %p81, %p82
      %p84 = scmp.ne.s32.totalorder %s73, %s76
      %p85 = scmp.eq.s32.totalorder %s28, 3
      %p86 = por %p84, %p85
      %p87 = scmp.ne.s32.totalorder %s76, %s77
      %p88 = scmp.eq.s32.totalorder %s28, 0
      %p89 = por %p87, %p88
      %p90 = scmp.ne.s32.totalorder %s76, %s77
      %p91 = scmp.eq.s32.totalorder %s29, 3
      %p92 = por %p90, %p91
      %p94 = scmp.ne.s32.totalorder %s77, %s93
      %p95 = scmp.eq.s32.totalorder %s29, 0
      %p96 = por %p94, %p95
      %s97 = ssub.s32 %s31, %s38
      %p98 = scmp.eq.s32.totalorder %s97, 0
      %s100 = sadd.s32 %s99, 1
      %s101 = scalar_select %p98, %s99, %s100
      %p104 = pneg %p98
      %p105 = scmp.eq.s32.totalorder %s23, 3
      %p106 = por %p104, %p105
      %p107 = scmp.ne.s32.totalorder %s99, %s102
      %p108 = scmp.eq.s32.totalorder %s23, 0
      %p109 = por %p107, %p108
      %p110 = scmp.ne.s32.totalorder %s99, %s102
      %p111 = scmp.eq.s32.totalorder %s28, 3
      %p112 = por %p110, %p111
      %p113 = scmp.ne.s32.totalorder %s102, %s103
      %p114 = scmp.eq.s32.totalorder %s28, 0
      %p115 = por %p113, %p114
      %p116 = scmp.ne.s32.totalorder %s102, %s103
      %p117 = scmp.eq.s32.totalorder %s29, 3
      %p118 = por %p116, %p117
      %p120 = scmp.ne.s32.totalorder %s103, %s119
      %p121 = scmp.eq.s32.totalorder %s29, 0
      %p122 = por %p120, %p121
      %s123 = ssub.s32 %s30, %s42
      %p124 = scmp.eq.s32.totalorder %s123, 0
      %s126 = sadd.s32 %s125, 1
      %s127 = scalar_select %p124, %s125, %s126
      %p130 = pneg %p124
      %p131 = scmp.eq.s32.totalorder %s23, 3
      %p132 = por %p130, %p131
      %p133 = scmp.ne.s32.totalorder %s125, %s128
      %p134 = scmp.eq.s32.totalorder %s23, 0
      %p135 = por %p133, %p134
      %p136 = scmp.ne.s32.totalorder %s125, %s128
      %p137 = scmp.eq.s32.totalorder %s28, 3
      %p138 = por %p136, %p137
      %p139 = scmp.ne.s32.totalorder %s128, %s129
      %p140 = scmp.eq.s32.totalorder %s28, 0
      %p141 = por %p139, %p140
      %p142 = scmp.ne.s32.totalorder %s128, %s129
      %p143 = scmp.eq.s32.totalorder %s29, 3
      %p144 = por %p142, %p143
      %p146 = scmp.ne.s32.totalorder %s129, %s145
      %p147 = scmp.eq.s32.totalorder %s29, 0
      %p148 = por %p146, %p147
      %s150 = sadd.s32 %s149, 1
      %p153 = scmp.eq.s32.totalorder %s23, 3
      %p154 = scmp.ne.s32.totalorder %s149, %s151
      %p155 = scmp.eq.s32.totalorder %s23, 0
      %p156 = por %p154, %p155
      %p157 = scmp.ne.s32.totalorder %s149, %s151
      %p158 = scmp.eq.s32.totalorder %s28, 3
      %p159 = por %p157, %p158
      %p160 = scmp.ne.s32.totalorder %s151, %s152
      %p161 = scmp.eq.s32.totalorder %s28, 0
      %p162 = por %p160, %p161
      %p163 = scmp.ne.s32.totalorder %s151, %s152
      %p164 = scmp.eq.s32.totalorder %s29, 3
      %p165 = por %p163, %p164
      %p167 = scmp.ne.s32.totalorder %s152, %s166
      %p168 = scmp.eq.s32.totalorder %s29, 0
      %p169 = por %p167, %p168
      %s171 = sadd.s32 %s170, 1
      %p174 = scmp.eq.s32.totalorder %s23, 3
      %p175 = scmp.ne.s32.totalorder %s170, %s172
      %p176 = scmp.eq.s32.totalorder %s23, 0
      %p177 = por %p175, %p176
      %p178 = scmp.ne.s32.totalorder %s170, %s172
      %p179 = scmp.eq.s32.totalorder %s28, 3
      %p180 = por %p178, %p179
      %p181 = scmp.ne.s32.totalorder %s172, %s173
      %p182 = scmp.eq.s32.totalorder %s28, 0
      %p183 = por %p181, %p182
      %p184 = scmp.ne.s32.totalorder %s172, %s173
      %p185 = scmp.eq.s32.totalorder %s29, 3
      %p186 = por %p184, %p185
      %p188 = scmp.ne.s32.totalorder %s173, %s187
      %p189 = scmp.eq.s32.totalorder %s29, 0
      %p190 = por %p188, %p189
      %s192 = sadd.s32 %s191, 1
      %p195 = scmp.eq.s32.totalorder %s23, 3
      %p196 = scmp.ne.s32.totalorder %s191, %s193
      %p197 = scmp.eq.s32.totalorder %s23, 0
      %p198 = por %p196, %p197
      %p199 = scmp.ne.s32.totalorder %s191, %s193
      %p200 = scmp.eq.s32.totalorder %s28, 3
      %p201 = por %p199, %p200
      %p202 = scmp.ne.s32.totalorder %s193, %s194
      %p203 = scmp.eq.s32.totalorder %s28, 0
      %p204 = por %p202, %p203
      %p205 = scmp.ne.s32.totalorder %s193, %s194
      %p206 = scmp.eq.s32.totalorder %s29, 3
      %p207 = por %p205, %p206
      %p209 = scmp.ne.s32.totalorder %s194, %s208
      %p210 = scmp.eq.s32.totalorder %s29, 0
      %p211 = por %p209, %p210
      %s213 = sadd.s32 %s212, 1
      %p216 = scmp.eq.s32.totalorder %s23, 3
      %p217 = scmp.ne.s32.totalorder %s212, %s214
      %p218 = scmp.eq.s32.totalorder %s23, 0
      %p219 = por %p217, %p218
      %p220 = scmp.ne.s32.totalorder %s212, %s214
      %p221 = scmp.eq.s32.totalorder %s28, 3
      %p222 = por %p220, %p221
      %p223 = scmp.ne.s32.totalorder %s214, %s215
      %p224 = scmp.eq.s32.totalorder %s28, 0
      %p225 = por %p223, %p224
      %p226 = scmp.ne.s32.totalorder %s214, %s215
      %p227 = scmp.eq.s32.totalorder %s29, 3
      %p228 = por %p226, %p227
      %p230 = scmp.ne.s32.totalorder %s215, %s229
      %p231 = scmp.eq.s32.totalorder %s29, 0
      %p232 = por %p230, %p231
      %s234 = sadd.s32 %s233, 1
      %p237 = scmp.eq.s32.totalorder %s23, 3
      %p238 = scmp.ne.s32.totalorder %s233, %s235
      %p239 = scmp.eq.s32.totalorder %s23, 0
      %p240 = por %p238, %p239
      %p241 = scmp.ne.s32.totalorder %s233, %s235
      %p242 = scmp.eq.s32.totalorder %s28, 3
      %p243 = por %p241, %p242
      %p244 = scmp.ne.s32.totalorder %s235, %s236
      %p245 = scmp.eq.s32.totalorder %s28, 0
      %p246 = por %p244, %p245
      %p247 = scmp.ne.s32.totalorder %s235, %s236
      %p248 = scmp.eq.s32.totalorder %s29, 3
      %p249 = por %p247, %p248
      %p251 = scmp.ne.s32.totalorder %s236, %s250
      %p252 = scmp.eq.s32.totalorder %s29, 0
      %p253 = por %p251, %p252
      %s255 = sadd.s32 %s254, 1
      %p258 = scmp.eq.s32.totalorder %s23, 3
      %p259 = scmp.ne.s32.totalorder %s254, %s256
      %p260 = scmp.eq.s32.totalorder %s23, 0
      %p261 = por %p259, %p260
      %p262 = scmp.ne.s32.totalorder %s254, %s256
      %p263 = scmp.eq.s32.totalorder %s28, 3
      %p264 = por %p262, %p263
      %p265 = scmp.ne.s32.totalorder %s256, %s257
      %p266 = scmp.eq.s32.totalorder %s28, 0
      %p267 = por %p265, %p266
      %p268 = scmp.ne.s32.totalorder %s256, %s257
      %p269 = scmp.eq.s32.totalorder %s29, 3
      %p270 = por %p268, %p269
      %p272 = scmp.ne.s32.totalorder %s257, %s271
      %p273 = scmp.eq.s32.totalorder %s29, 0
      %p274 = por %p272, %p273
      %s276 = sadd.s32 %s275, 1
      %p279 = scmp.eq.s32.totalorder %s23, 3
      %p280 = scmp.ne.s32.totalorder %s275, %s277
      %p281 = scmp.eq.s32.totalorder %s23, 0
      %p282 = por %p280, %p281
      %p283 = scmp.ne.s32.totalorder %s275, %s277
      %p284 = scmp.eq.s32.totalorder %s28, 3
      %p285 = por %p283, %p284
      %p286 = scmp.ne.s32.totalorder %s277, %s278
      %p287 = scmp.eq.s32.totalorder %s28, 0
      %p288 = por %p286, %p287
      %p289 = scmp.ne.s32.totalorder %s277, %s278
      %p290 = scmp.eq.s32.totalorder %s29, 3
      %p291 = por %p289, %p290
      %p293 = scmp.ne.s32.totalorder %s278, %s292
      %p294 = scmp.eq.s32.totalorder %s29, 0
      %p295 = por %p293, %p294
      %s297 = sadd.s32 %s296, 1
      %p300 = scmp.eq.s32.totalorder %s23, 3
      %p301 = scmp.ne.s32.totalorder %s296, %s298
      %p302 = scmp.eq.s32.totalorder %s23, 0
      %p303 = por %p301, %p302
      %p304 = scmp.ne.s32.totalorder %s296, %s298
      %p305 = scmp.eq.s32.totalorder %s28, 3
      %p306 = por %p304, %p305
      %p307 = scmp.ne.s32.totalorder %s298, %s299
      %p308 = scmp.eq.s32.totalorder %s28, 0
      %p309 = por %p307, %p308
      %p310 = scmp.ne.s32.totalorder %s298, %s299
      %p311 = scmp.eq.s32.totalorder %s29, 3
      %p312 = por %p310, %p311
      %p314 = scmp.ne.s32.totalorder %s299, %s313
      %p315 = scmp.eq.s32.totalorder %s29, 0
      %p316 = por %p314, %p315
      %s317 = ssub.s32 %s30, %s42
      %p318 = scmp.eq.s32.totalorder %s317, 0
      %s320 = sadd.s32 %s319, 1
      %s321 = scalar_select %p318, %s319, %s320
      %p324 = pneg %p318
      %p325 = scmp.eq.s32.totalorder %s23, 3
      %p326 = por %p324, %p325
      %p327 = scmp.ne.s32.totalorder %s319, %s322
      %p328 = scmp.eq.s32.totalorder %s23, 0
      %p329 = por %p327, %p328
      %p330 = scmp.ne.s32.totalorder %s319, %s322
      %p331 = scmp.eq.s32.totalorder %s28, 3
      %p332 = por %p330, %p331
      %p333 = scmp.ne.s32.totalorder %s322, %s323
      %p334 = scmp.eq.s32.totalorder %s28, 0
      %p335 = por %p333, %p334
      %p336 = scmp.ne.s32.totalorder %s322, %s323
      %p337 = scmp.eq.s32.totalorder %s29, 3
      %p338 = por %p336, %p337
      %p340 = scmp.ne.s32.totalorder %s323, %s339
      %p341 = scmp.eq.s32.totalorder %s29, 0
      %p342 = por %p340, %p341
      %p343 = scmp.le.s32.totalorder 1, %s23
      %p344 = scmp.lt.s32.totalorder %s23, 5
      %p345 = pnand %p343, %p344
      %p346 = pneg %p345
      // Predicated region
      $region9: #{lasage_s_conv.1} parent=5 // pred_check
        _
      $region10: #{lasage_s_conv.1} parent=5 // pred_check_branch
        %348 = sbr.rel (%p345) target = $region12
      $region11: #{lasage_s_conv.1} parent=5 // pred_region
        %s349 = ssub.s32 %s23, 1
        // Predicated region
        $region13: #{lasage_s_conv.1} parent=11 // pred_check
          %p350 = pneg %p162
        $region14: #{lasage_s_conv.1} parent=11 // pred_check_branch
          %352 = sbr.rel (%p350) target = $region16
        $region15: #{lasage_s_conv.1} parent=11 // pred_region
          _
        $region16: #{lasage_s_conv.1} parent=11 // pred_fallthru
          _
        // Predicated region
        $region17: #{lasage_s_conv.1} parent=11 // pred_check
          %p353 = pneg %p183
        $region18: #{lasage_s_conv.1} parent=11 // pred_check_branch
          %355 = sbr.rel (%p353) target = $region20
        $region19: #{lasage_s_conv.1} parent=11 // pred_region
          %s357 = ssub.s32 48, 48
          %358 = vsyncadd [#allocation6], %s357
          %s360 = sshll.u32 [#allocation5], 4
          %s361 = int_to_ptr.vmem [resolvable:$true] %s360
          %363 = dma.hbm_to_vmem [thread:$0]  %s5, 48, %s361, [#allocation6]
        $region20: #{lasage_s_conv.1} parent=11 // pred_fallthru
          _
        // Predicated region
        $region21: #{lasage_s_conv.1} parent=11 // pred_check
          %p364 = pneg %p204
        $region22: #{lasage_s_conv.1} parent=11 // pred_check_branch
          %366 = sbr.rel (%p364) target = $region24
        $region23: #{lasage_s_conv.1} parent=11 // pred_region
          _
        $region24: #{lasage_s_conv.1} parent=11 // pred_fallthru
          _
        // Predicated region
        $region25: #{lasage_s_conv.1} parent=11 // pred_check
          %p367 = pneg %p225
        $region26: #{lasage_s_conv.1} parent=11 // pred_check_branch
          %369 = sbr.rel (%p367) target = $region28
        $region27: #{lasage_s_conv.1} parent=11 // pred_region
          %s371 = ssub.s32 16, 16
          %372 = vsyncadd [#allocation8], %s371
          %s374 = sshll.u32 [#allocation7], 4
          %s375 = int_to_ptr.vmem [resolvable:$true] %s374
          %377 = dma.hbm_to_vmem [thread:$0]  %s7, 16, %s375, [#allocation8]
        $region28: #{lasage_s_conv.1} parent=11 // pred_fallthru
          _
        // Predicated region
        $region29: #{lasage_s_conv.1} parent=11 // pred_check
          %p378 = pneg %p246
        $region30: #{lasage_s_conv.1} parent=11 // pred_check_branch
          %380 = sbr.rel (%p378) target = $region32
        $region31: #{lasage_s_conv.1} parent=11 // pred_region
          _
        $region32: #{lasage_s_conv.1} parent=11 // pred_fallthru
          _
        // Predicated region
        $region33: #{lasage_s_conv.1} parent=11 // pred_check
          %p381 = pneg %p267
        $region34: #{lasage_s_conv.1} parent=11 // pred_check_branch
          %383 = sbr.rel (%p381) target = $region36
        $region35: #{lasage_s_conv.1} parent=11 // pred_region
          %s385 = ssub.s32 16, 16
          %386 = vsyncadd [#allocation8], %s385
          %s388 = sshll.u32 [#allocation9], 4
          %s389 = int_to_ptr.vmem [resolvable:$true] %s388
          %391 = dma.hbm_to_vmem [thread:$0]  %s9, 16, %s389, [#allocation8]
        $region36: #{lasage_s_conv.1} parent=11 // pred_fallthru
          _
        // Predicated region
        $region37: #{lasage_s_conv.1} parent=11 // pred_check
          %p392 = pneg %p288
        $region38: #{lasage_s_conv.1} parent=11 // pred_check_branch
          %394 = sbr.rel (%p392) target = $region40
        $region39: #{lasage_s_conv.1} parent=11 // pred_region
          %s396 = ssub.s32 16, 16
          %397 = vsyncadd [#allocation11], %s396
          %s399 = sshll.u32 [#allocation10], 4
          %s400 = int_to_ptr.vmem [resolvable:$true] %s399
          %402 = dma.hbm_to_vmem [thread:$0]  %s10, 16, %s400, [#allocation11]
        $region40: #{lasage_s_conv.1} parent=11 // pred_fallthru
          _
        // Predicated region
        $region41: #{lasage_s_conv.1} parent=11 // pred_check
          %p403 = pneg %p309
        $region42: #{lasage_s_conv.1} parent=11 // pred_check_branch
          %405 = sbr.rel (%p403) target = $region44
        $region43: #{lasage_s_conv.1} parent=11 // pred_region
          _
        $region44: #{lasage_s_conv.1} parent=11 // pred_fallthru
          _
      $region12: #{lasage_s_conv.1} parent=5 // pred_fallthru
        _
      %p406 = scmp.lt.s32.totalorder %s23, 4
      // Predicated region
      $region45: #{lasage_s_conv.1} parent=5 // pred_check
        %p407 = pneg %p406
      $region46: #{lasage_s_conv.1} parent=5 // pred_check_branch
        %409 = sbr.rel (%p407) target = $region48
      $region47: #{lasage_s_conv.1} parent=5 // pred_region
        // Predicated region
        $region49: #{lasage_s_conv.1} parent=47 // pred_check
          %p410 = pneg %p57
        $region50: #{lasage_s_conv.1} parent=47 // pred_check_branch
          %412 = sbr.rel (%p410) target = $region52
        $region51: #{lasage_s_conv.1} parent=47 // pred_region
          %s413 = sand.u32 %s47, 1
          %s414 = sand.u32 %s47, 1
          %s415 = smul.addr %s414, 64
          %s416 = scalar_lea.vmem [#allocation4], %s415
          %s417 = smul.u32 16, %s30
          %s418 = smul.addr %s417, 2
          %s419 = sadd.s32 %s31, %s418
          %s420 = smul.addr %s419, 4
          %s421 = scalar_lea.vmem %s0, %s420
          // Predicated region
          $region53: #{lasage_s_conv.1} parent=51 // pred_check
            _
          $region54: #{lasage_s_conv.1} parent=51 // pred_check_branch
            %423 = sbr.rel (0) target = $region56
          $region55: #{lasage_s_conv.1} parent=51 // pred_region
            // Predicated region
            $region57: #{lasage_s_conv.1} parent=55 // pred_check
              _
            $region58: #{lasage_s_conv.1} parent=55 // pred_check_branch
              %425 = sbr.rel target = $region60
            $region59: #{lasage_s_conv.1} parent=55 // pred_region
              // Predicated region
              $region72: #{lasage_s_conv.1} parent=59 // pred_check
                _
              $region73: #{lasage_s_conv.1} parent=59 // pred_check_branch
                %470 = sbr.rel (0) target = $region75
              $region74: #{lasage_s_conv.1} parent=59 // pred_region
                loop: start=0, step=1, limit=1
                $region76: #{lasage_s_conv.1} parent=74 // loop_pre_header
                  _
                $region77: #{lasage_s_conv.1} parent=74 // loop_header
                  %s472 = sphi 0, %s476
                  %p473 = scmp.ge.s32.totalorder %s472, 1
                  %s477 = sphi %s421, %s421
                  %s478 = sphi %s416, %s416
                $region78: #{lasage_s_conv.1} parent=74 // loop_header_branch
                  %475 = sbr.rel (%p473) target = $region82
                $region79: #{lasage_s_conv.1} parent=74 // loop_body
                  _
                $region80: #{lasage_s_conv.1} parent=74 // loop_footer
                  %s476 = sadd.s32 1, %s472
                $region81: #{lasage_s_conv.1} parent=74 // loop_footer_branch
                  %471 = sbr.rel target = $region77
                $region82: #{lasage_s_conv.1} parent=74 // loop_exit
                  _
                loop: start=0, step=1, limit=1
                $region83: #{lasage_s_conv.1} parent=74 // loop_pre_header
                  _
                $region84: #{lasage_s_conv.1} parent=74 // loop_header
                  %s481 = sphi 0, %s485
                  %p482 = scmp.ge.s32.totalorder %s481, 1
                  %s486 = sphi %s421, %s421
                  %s487 = sphi %s416, %s416
                $region85: #{lasage_s_conv.1} parent=74 // loop_header_branch
                  %484 = sbr.rel (%p482) target = $region89
                $region86: #{lasage_s_conv.1} parent=74 // loop_body
                  %v488 = vld [vmem:[%s486] sm:$0xf]
                  %489 = vst [vmem:[%s487] sm:$0xf] %v488
                  %v490 = vld [vmem:[%s486 + $0x8] sm:$0xf]
                  %491 = vst [vmem:[%s487 + $0x4] sm:$0xf] %v490
                  %v492 = vld [vmem:[%s486 + $0x10] sm:$0xf]
                  %493 = vst [vmem:[%s487 + $0x8] sm:$0xf] %v492
                  %v494 = vld [vmem:[%s486 + $0x18] sm:$0xf]
                  %495 = vst [vmem:[%s487 + $0xc] sm:$0xf] %v494
                  %v496 = vld [vmem:[%s486 + $0x20] sm:$0xf]
                  %497 = vst [vmem:[%s487 + $0x10] sm:$0xf] %v496
                  %v498 = vld [vmem:[%s486 + $0x28] sm:$0xf]
                  %499 = vst [vmem:[%s487 + $0x14] sm:$0xf] %v498
                  %v500 = vld [vmem:[%s486 + $0x30] sm:$0xf]
                  %501 = vst [vmem:[%s487 + $0x18] sm:$0xf] %v500
                  %v502 = vld [vmem:[%s486 + $0x38] sm:$0xf]
                  %503 = vst [vmem:[%s487 + $0x1c] sm:$0xf] %v502
                  %v504 = vld [vmem:[%s486 + $0x40] sm:$0xf]
                  %505 = vst [vmem:[%s487 + $0x20] sm:$0xf] %v504
                  %v506 = vld [vmem:[%s486 + $0x48] sm:$0xf]
                  %507 = vst [vmem:[%s487 + $0x24] sm:$0xf] %v506
                  %v508 = vld [vmem:[%s486 + $0x50] sm:$0xf]
                  %509 = vst [vmem:[%s487 + $0x28] sm:$0xf] %v508
                  %v510 = vld [vmem:[%s486 + $0x58] sm:$0xf]
                  %511 = vst [vmem:[%s487 + $0x2c] sm:$0xf] %v510
                  %v512 = vld [vmem:[%s486 + $0x60] sm:$0xf]
                  %513 = vst [vmem:[%s487 + $0x30] sm:$0xf] %v512
                  %v514 = vld [vmem:[%s486 + $0x68] sm:$0xf]
                  %515 = vst [vmem:[%s487 + $0x34] sm:$0xf] %v514
                  %v516 = vld [vmem:[%s486 + $0x70] sm:$0xf]
                  %517 = vst [vmem:[%s487 + $0x38] sm:$0xf] %v516
                  %v518 = vld [vmem:[%s486 + $0x78] sm:$0xf]
                  %519 = vst [vmem:[%s487 + $0x3c] sm:$0xf] %v518
                $region87: #{lasage_s_conv.1} parent=74 // loop_footer
                  %s485 = sadd.s32 1, %s481
                $region88: #{lasage_s_conv.1} parent=74 // loop_footer_branch
                  %480 = sbr.rel target = $region84
                $region89: #{lasage_s_conv.1} parent=74 // loop_exit
                  _
              $region75: #{lasage_s_conv.1} parent=59 // pred_fallthru
                _
            $region60: #{lasage_s_conv.1} parent=55 // pred_fallthru
              _
            // Predicated region
            $region61: #{lasage_s_conv.1} parent=55 // pred_check
              _
            $region62: #{lasage_s_conv.1} parent=55 // pred_check_branch
              %427 = sbr.rel (0) target = $region64
            $region63: #{lasage_s_conv.1} parent=55 // pred_region
              loop: start=0, step=1, limit=1
              $region65: #{lasage_s_conv.1} parent=63 // loop_pre_header
                _
              $region66: #{lasage_s_conv.1} parent=63 // loop_header
                %s430 = sphi 0, %s434
                %p431 = scmp.ge.s32.totalorder %s430, 1
                %s435 = sphi %s421, %s421
                %s436 = sphi %s416, %s416
              $region67: #{lasage_s_conv.1} parent=63 // loop_header_branch
                %433 = sbr.rel (%p431) target = $region71
              $region68: #{lasage_s_conv.1} parent=63 // loop_body
                %v437 = vld [vmem:[%s435] sm:$0xf]
                %438 = vst [vmem:[%s436] sm:$0xf] %v437
                %v439 = vld [vmem:[%s435 + $0x8] sm:$0xf]
                %440 = vst [vmem:[%s436 + $0x4] sm:$0xf] %v439
                %v441 = vld [vmem:[%s435 + $0x10] sm:$0xf]
                %442 = vst [vmem:[%s436 + $0x8] sm:$0xf] %v441
                %v443 = vld [vmem:[%s435 + $0x18] sm:$0xf]
                %444 = vst [vmem:[%s436 + $0xc] sm:$0xf] %v443
                %v445 = vld [vmem:[%s435 + $0x20] sm:$0xf]
                %446 = vst [vmem:[%s436 + $0x10] sm:$0xf] %v445
                %v447 = vld [vmem:[%s435 + $0x28] sm:$0xf]
                %448 = vst [vmem:[%s436 + $0x14] sm:$0xf] %v447
                %v449 = vld [vmem:[%s435 + $0x30] sm:$0xf]
                %450 = vst [vmem:[%s436 + $0x18] sm:$0xf] %v449
                %v451 = vld [vmem:[%s435 + $0x38] sm:$0xf]
                %452 = vst [vmem:[%s436 + $0x1c] sm:$0xf] %v451
                %v453 = vld [vmem:[%s435 + $0x40] sm:$0xf]
                %454 = vst [vmem:[%s436 + $0x20] sm:$0xf] %v453
                %v455 = vld [vmem:[%s435 + $0x48] sm:$0xf]
                %456 = vst [vmem:[%s436 + $0x24] sm:$0xf] %v455
                %v457 = vld [vmem:[%s435 + $0x50] sm:$0xf]
                %458 = vst [vmem:[%s436 + $0x28] sm:$0xf] %v457
                %v459 = vld [vmem:[%s435 + $0x58] sm:$0xf]
                %460 = vst [vmem:[%s436 + $0x2c] sm:$0xf] %v459
                %v461 = vld [vmem:[%s435 + $0x60] sm:$0xf]
                %462 = vst [vmem:[%s436 + $0x30] sm:$0xf] %v461
                %v463 = vld [vmem:[%s435 + $0x68] sm:$0xf]
                %464 = vst [vmem:[%s436 + $0x34] sm:$0xf] %v463
                %v465 = vld [vmem:[%s435 + $0x70] sm:$0xf]
                %466 = vst [vmem:[%s436 + $0x38] sm:$0xf] %v465
                %v467 = vld [vmem:[%s435 + $0x78] sm:$0xf]
                %468 = vst [vmem:[%s436 + $0x3c] sm:$0xf] %v467
              $region69: #{lasage_s_conv.1} parent=63 // loop_footer
                %s434 = sadd.s32 1, %s430
              $region70: #{lasage_s_conv.1} parent=63 // loop_footer_branch
                %429 = sbr.rel target = $region66
              $region71: #{lasage_s_conv.1} parent=63 // loop_exit
                _
            $region64: #{lasage_s_conv.1} parent=55 // pred_fallthru
              _
          $region56: #{lasage_s_conv.1} parent=51 // pred_fallthru
            _
          %520 = vnop
        $region52: #{lasage_s_conv.1} parent=47 // pred_fallthru
          _
        // Predicated region
        $region90: #{lasage_s_conv.1} parent=47 // pred_check
          %p521 = pneg %p83
        $region91: #{lasage_s_conv.1} parent=47 // pred_check_branch
          %523 = sbr.rel (%p521) target = $region93
        $region92: #{lasage_s_conv.1} parent=47 // pred_region
          %s524 = smul.u32 16, %s31
          %p525 = scmp.lt.s32.totalorder %s524, 31
          %s526 = scalar_select %p525, %s524, 31
          %s527 = smul.addr %s526, 8
          %s528 = scalar_lea.vmem %s1, %s527
          %s529 = smul.u32 16, %s31
        $region93: #{lasage_s_conv.1} parent=47 // pred_fallthru
          _
        // Predicated region
        $region94: #{lasage_s_conv.1} parent=47 // pred_check
          %p530 = pneg %p109
        $region95: #{lasage_s_conv.1} parent=47 // pred_check_branch
          %532 = sbr.rel (%p530) target = $region97
        $region96: #{lasage_s_conv.1} parent=47 // pred_region
          %s533 = smul.u32 16, %s31
          %p534 = scmp.lt.s32.totalorder %s533, 31
          %s535 = scalar_select %p534, %s533, 31
          %s536 = smul.addr %s535, 8
          %s537 = scalar_lea.vmem %s2, %s536
          %s538 = smul.u32 16, %s31
        $region97: #{lasage_s_conv.1} parent=47 // pred_fallthru
          _
        // Predicated region
        $region98: #{lasage_s_conv.1} parent=47 // pred_check
          %p539 = pneg %p135
        $region99: #{lasage_s_conv.1} parent=47 // pred_check_branch
          %541 = sbr.rel (%p539) target = $region101
        $region100: #{lasage_s_conv.1} parent=47 // pred_region
          %s542 = smul.u32 16, %s30
          %p543 = scmp.lt.s32.totalorder %s542, 31
          %s544 = scalar_select %p543, %s542, 31
          %s545 = smul.addr %s544, 8
          %s546 = scalar_lea.vmem %s3, %s545
          %s547 = smul.u32 16, %s30
        $region101: #{lasage_s_conv.1} parent=47 // pred_fallthru
          _
      $region48: #{lasage_s_conv.1} parent=5 // pred_fallthru
        _
      %p548 = scmp.le.s32.totalorder 1, %s23
      %p549 = scmp.lt.s32.totalorder %s23, 5
      %p550 = pnand %p548, %p549
      %p551 = pneg %p550
      // Predicated region
      $region102: #{lasage_s_conv.1} parent=5 // pred_check
        _
      $region103: #{lasage_s_conv.1} parent=5 // pred_check_branch
        %553 = sbr.rel (%p550) target = $region105
      $region104: #{lasage_s_conv.1} parent=5 // pred_region
        %s554 = ssub.s32 %s23, 1
        %s555 = sand.u32 %s50, 1
        %s556 = sand.u32 %s50, 1
        %s557 = smul.addr %s556, 64
        %s558 = scalar_lea.vmem [#allocation4], %s557
        // Predicated region
        $region106: #{lasage_s_conv.1} parent=104 // pred_check
          %p559 = pneg %p63
        $region107: #{lasage_s_conv.1} parent=104 // pred_check_branch
          %561 = sbr.rel (%p559) target = $region109
        $region108: #{lasage_s_conv.1} parent=104 // pred_region
          _
        $region109: #{lasage_s_conv.1} parent=104 // pred_fallthru
          _
        // Predicated region
        $region110: #{lasage_s_conv.1} parent=104 // pred_check
          %p562 = pneg %p183
        $region111: #{lasage_s_conv.1} parent=104 // pred_check_branch
          %564 = sbr.rel (%p562) target = $region113
        $region112: #{lasage_s_conv.1} parent=104 // pred_region
          %565 = dma.done [#allocation6], 48
        $region113: #{lasage_s_conv.1} parent=104 // pred_fallthru
          _
        // Predicated region
        $region114: #{lasage_s_conv.1} parent=104 // pred_check
          %p566 = pneg %p225
        $region115: #{lasage_s_conv.1} parent=104 // pred_check_branch
          %568 = sbr.rel (%p566) target = $region117
        $region116: #{lasage_s_conv.1} parent=104 // pred_region
          %569 = dma.done [#allocation8], 16
        $region117: #{lasage_s_conv.1} parent=104 // pred_fallthru
          _
        // Predicated region
        $region118: #{lasage_s_conv.1} parent=104 // pred_check
          %p570 = pneg %p267
        $region119: #{lasage_s_conv.1} parent=104 // pred_check_branch
          %572 = sbr.rel (%p570) target = $region121
        $region120: #{lasage_s_conv.1} parent=104 // pred_region
          %573 = dma.done [#allocation8], 16
        $region121: #{lasage_s_conv.1} parent=104 // pred_fallthru
          _
        // Predicated region
        $region122: #{lasage_s_conv.1} parent=104 // pred_check
          %p574 = pneg %p288
        $region123: #{lasage_s_conv.1} parent=104 // pred_check_branch
          %576 = sbr.rel (%p574) target = $region125
        $region124: #{lasage_s_conv.1} parent=104 // pred_region
          %577 = dma.done [#allocation11], 16
        $region125: #{lasage_s_conv.1} parent=104 // pred_fallthru
          _
        %s578 = sand.u32 %s50, 1
        %s579 = sand.u32 %s50, 1
        %s580 = smul.addr %s579, 64
        %s581 = scalar_lea.vmem [#allocation4], %s580
        %p582 = pneg %p63
        %p583 = pneg %p60
        %s584 = smul.u32 16, %s33
        %p585 = scmp.lt.s32.totalorder %s584, 31
        %s586 = scalar_select %p585, %s584, 31
        %s587 = smul.addr %s586, 8
        %s588 = scalar_lea.vmem %s1, %s587
        %p589 = pneg %p89
        %p590 = pneg %p86
        %s591 = smul.u32 16, %s33
        %p592 = scmp.lt.s32.totalorder %s591, 31
        %s593 = scalar_select %p592, %s591, 31
        %s594 = smul.addr %s593, 8
        %s595 = scalar_lea.vmem %s2, %s594
        %p596 = pneg %p115
        %p597 = pneg %p112
        %s598 = smul.u32 16, %s32
        %p599 = scmp.lt.s32.totalorder %s598, 31
        %s600 = scalar_select %p599, %s598, 31
        %s601 = smul.addr %s600, 8
        %s602 = scalar_lea.vmem %s3, %s601
        %p603 = pneg %p141
        %p604 = pneg %p138
        %p605 = pneg %p162
        %p606 = pneg %p159
        %p607 = pneg %p183
        %p608 = pneg %p180
        %p609 = pneg %p204
        %p610 = pneg %p201
        %p611 = pneg %p225
        %p612 = pneg %p222
        %p613 = pneg %p246
        %p614 = pneg %p243
        %p615 = pneg %p267
        %p616 = pneg %p264
        %p617 = pneg %p288
        %p618 = pneg %p285
        %p619 = pneg %p309
        %p620 = pneg %p306
        %p621 = pneg %p335
        %p622 = pneg %p332
        %s623 = smul.u32 16, %s32
        %p624 = scmp.lt.s32.totalorder %s623, 31
        %s625 = scalar_select %p624, %s623, 31
        %s626 = smul.addr %s625, 8
        %s627 = scalar_lea.vmem %s12, %s626
        %s628 = smul.u32 16, %s32
        %s629 = smul.u32 16, %s33
        %p630 = scmp.lt.s32.totalorder %s629, 31
        %s631 = scalar_select %p630, %s629, 31
        %s632 = smul.addr %s631, 8
        %s633 = scalar_lea.vmem %s1, %s632
        %s634 = smul.u32 16, %s33
        %s635 = smul.u32 16, %s33
        %p636 = scmp.lt.s32.totalorder %s635, 31
        %s637 = scalar_select %p636, %s635, 31
        %s638 = smul.addr %s637, 8
        %s639 = scalar_lea.vmem %s2, %s638
        %s640 = smul.u32 16, %s33
        %s641 = smul.u32 16, %s32
        %p642 = scmp.lt.s32.totalorder %s641, 31
        %s643 = scalar_select %p642, %s641, 31
        %s644 = smul.addr %s643, 8
        %s645 = scalar_lea.vmem %s3, %s644
        %s646 = smul.u32 16, %s32
        %s647 = smul.u32 16, %s32
        %p648 = scmp.lt.s32.totalorder %s647, 31
        %s649 = scalar_select %p648, %s647, 31
        %s650 = smul.addr %s649, 8
        %s651 = scalar_lea.vmem %s12, %s650
        %s652 = smul.u32 16, %s32
        %p654 = scmp.eq.s32.totalorder %s33, 0
        // Predicated region
        $region126: #{lasage_s_conv.1} parent=104 // pred_check
          %p655 = pneg %p654
        $region127: #{lasage_s_conv.1} parent=104 // pred_check_branch
          %657 = sbr.rel (%p655) target = $region129
        $region128: #{lasage_s_conv.1} parent=104 // pred_region
          %658 = vst [vmem:[#allocation2] sm:$0xff] 0.0
          %659 = vst [vmem:[#allocation2 + $0x8] sm:$0xff] 0.0
          %660 = vst [vmem:[#allocation2 + $0x10] sm:$0xff] 0.0
          %661 = vst [vmem:[#allocation2 + $0x18] sm:$0xff] 0.0
          %662 = vst [vmem:[#allocation2 + $0x20] sm:$0xff] 0.0
          %663 = vst [vmem:[#allocation2 + $0x28] sm:$0xff] 0.0
          %664 = vst [vmem:[#allocation2 + $0x30] sm:$0xff] 0.0
          %665 = vst [vmem:[#allocation2 + $0x38] sm:$0xff] 0.0
          %666 = vst [vmem:[#allocation2 + $0x40] sm:$0xff] 0.0
          %667 = vst [vmem:[#allocation2 + $0x48] sm:$0xff] 0.0
          %668 = vst [vmem:[#allocation2 + $0x50] sm:$0xff] 0.0
          %669 = vst [vmem:[#allocation2 + $0x58] sm:$0xff] 0.0
          %670 = vst [vmem:[#allocation2 + $0x60] sm:$0xff] 0.0
          %671 = vst [vmem:[#allocation2 + $0x68] sm:$0xff] 0.0
          %672 = vst [vmem:[#allocation2 + $0x70] sm:$0xff] 0.0
          %673 = vst [vmem:[#allocation2 + $0x78] sm:$0xff] 0.0
        $region129: #{lasage_s_conv.1} parent=104 // pred_fallthru
          _
        %v674 = vld [vmem:[%s633] sm:$0xff]
        %v675 = vld [vmem:[%s633 + $0x8] sm:$0xff]
        %v676 = vld [vmem:[%s633 + $0x10] sm:$0xff]
        %v677 = vld [vmem:[%s633 + $0x18] sm:$0xff]
        %v678 = vld [vmem:[%s633 + $0x20] sm:$0xff]
        %v679 = vld [vmem:[%s633 + $0x28] sm:$0xff]
        %v680 = vld [vmem:[%s633 + $0x30] sm:$0xff]
        %v681 = vld [vmem:[%s633 + $0x38] sm:$0xff]
        %v682 = vld [vmem:[%s633 + $0x40] sm:$0xff]
        %v683 = vld [vmem:[%s633 + $0x48] sm:$0xff]
        %v684 = vld [vmem:[%s633 + $0x50] sm:$0xff]
        %v685 = vld [vmem:[%s633 + $0x58] sm:$0xff]
        %v686 = vld [vmem:[%s633 + $0x60] sm:$0xff]
        %v687 = vld [vmem:[%s633 + $0x68] sm:$0xff]
        %v688 = vld [vmem:[%s633 + $0x70] sm:$0xff]
        %v689 = vld [vmem:[%s633 + $0x78] sm:$0xff]
        %v690 = vld [vmem:[%s639] sm:$0xff]
        %v691 = vld [vmem:[%s639 + $0x8] sm:$0xff]
        %v692 = vld [vmem:[%s639 + $0x10] sm:$0xff]
        %v693 = vld [vmem:[%s639 + $0x18] sm:$0xff]
        %v694 = vld [vmem:[%s639 + $0x20] sm:$0xff]
        %v695 = vld [vmem:[%s639 + $0x28] sm:$0xff]
        %v696 = vld [vmem:[%s639 + $0x30] sm:$0xff]
        %v697 = vld [vmem:[%s639 + $0x38] sm:$0xff]
        %v698 = vld [vmem:[%s639 + $0x40] sm:$0xff]
        %v699 = vld [vmem:[%s639 + $0x48] sm:$0xff]
        %v700 = vld [vmem:[%s639 + $0x50] sm:$0xff]
        %v701 = vld [vmem:[%s639 + $0x58] sm:$0xff]
        %v702 = vld [vmem:[%s639 + $0x60] sm:$0xff]
        %v703 = vld [vmem:[%s639 + $0x68] sm:$0xff]
        %v704 = vld [vmem:[%s639 + $0x70] sm:$0xff]
        %v705 = vld [vmem:[%s639 + $0x78] sm:$0xff]
        %vm706 = vcmp.eq.s32.totalorder %v690, 1
        %vm707 = vcmp.eq.s32.totalorder %v691, 1
        %vm708 = vcmp.eq.s32.totalorder %v692, 1
        %vm709 = vcmp.eq.s32.totalorder %v693, 1
        %vm710 = vcmp.eq.s32.totalorder %v694, 1
        %vm711 = vcmp.eq.s32.totalorder %v695, 1
        %vm712 = vcmp.eq.s32.totalorder %v696, 1
        %vm713 = vcmp.eq.s32.totalorder %v697, 1
        %vm714 = vcmp.eq.s32.totalorder %v698, 1
        %vm715 = vcmp.eq.s32.totalorder %v699, 1
        %vm716 = vcmp.eq.s32.totalorder %v700, 1
        %vm717 = vcmp.eq.s32.totalorder %v701, 1
        %vm718 = vcmp.eq.s32.totalorder %v702, 1
        %vm719 = vcmp.eq.s32.totalorder %v703, 1
        %vm720 = vcmp.eq.s32.totalorder %v704, 1
        %vm721 = vcmp.eq.s32.totalorder %v705, 1
        %v722 = vsel %vm706, 1, 0
        %v723 = vsel %vm707, 1, 0
        %v724 = vsel %vm708, 1, 0
        %v725 = vsel %vm709, 1, 0
        %v726 = vsel %vm710, 1, 0
        %v727 = vsel %vm711, 1, 0
        %v728 = vsel %vm712, 1, 0
        %v729 = vsel %vm713, 1, 0
        %v730 = vsel %vm714, 1, 0
        %v731 = vsel %vm715, 1, 0
        %v732 = vsel %vm716, 1, 0
        %v733 = vsel %vm717, 1, 0
        %v734 = vsel %vm718, 1, 0
        %v735 = vsel %vm719, 1, 0
        %v736 = vsel %vm720, 1, 0
        %v737 = vsel %vm721, 1, 0
        %738 = vset.pattern.permute.xlu0 0
        %739 = vperm.xlu0 %738, %v722
        %v740 = vpop.permute.xlu0 %739
        %741 = vset.pattern.permute.xlu0 0
        %742 = vperm.xlu0 %741, %v723
        %v743 = vpop.permute.xlu0 %742
        %744 = vset.pattern.permute.xlu0 0
        %745 = vperm.xlu0 %744, %v724
        %v746 = vpop.permute.xlu0 %745
        %747 = vset.pattern.permute.xlu0 0
        %748 = vperm.xlu0 %747, %v725
        %v749 = vpop.permute.xlu0 %748
        %750 = vset.pattern.permute.xlu0 0
        %751 = vperm.xlu0 %750, %v726
        %v752 = vpop.permute.xlu0 %751
        %753 = vset.pattern.permute.xlu0 0
        %754 = vperm.xlu0 %753, %v727
        %v755 = vpop.permute.xlu0 %754
        %756 = vset.pattern.permute.xlu0 0
        %757 = vperm.xlu0 %756, %v728
        %v758 = vpop.permute.xlu0 %757
        %759 = vset.pattern.permute.xlu0 0
        %760 = vperm.xlu0 %759, %v729
        %v761 = vpop.permute.xlu0 %760
        %762 = vset.pattern.permute.xlu0 0
        %763 = vperm.xlu0 %762, %v730
        %v764 = vpop.permute.xlu0 %763
        %765 = vset.pattern.permute.xlu0 0
        %766 = vperm.xlu0 %765, %v731
        %v767 = vpop.permute.xlu0 %766
        %768 = vset.pattern.permute.xlu0 0
        %769 = vperm.xlu0 %768, %v732
        %v770 = vpop.permute.xlu0 %769
        %771 = vset.pattern.permute.xlu0 0
        %772 = vperm.xlu0 %771, %v733
        %v773 = vpop.permute.xlu0 %772
        %774 = vset.pattern.permute.xlu0 0
        %775 = vperm.xlu0 %774, %v734
        %v776 = vpop.permute.xlu0 %775
        %777 = vset.pattern.permute.xlu0 0
        %778 = vperm.xlu0 %777, %v735
        %v779 = vpop.permute.xlu0 %778
        %780 = vset.pattern.permute.xlu0 0
        %781 = vperm.xlu0 %780, %v736
        %v782 = vpop.permute.xlu0 %781
        %783 = vset.pattern.permute.xlu0 0
        %784 = vperm.xlu0 %783, %v737
        %v785 = vpop.permute.xlu0 %784
        %vm786 = vcmp.eq.s32.totalorder %v740, 1
        %vm787 = vcmp.eq.s32.totalorder %v743, 1
        %vm788 = vcmp.eq.s32.totalorder %v746, 1
        %vm789 = vcmp.eq.s32.totalorder %v749, 1
        %vm790 = vcmp.eq.s32.totalorder %v752, 1
        %vm791 = vcmp.eq.s32.totalorder %v755, 1
        %vm792 = vcmp.eq.s32.totalorder %v758, 1
        %vm793 = vcmp.eq.s32.totalorder %v761, 1
        %vm794 = vcmp.eq.s32.totalorder %v764, 1
        %vm795 = vcmp.eq.s32.totalorder %v767, 1
        %vm796 = vcmp.eq.s32.totalorder %v770, 1
        %vm797 = vcmp.eq.s32.totalorder %v773, 1
        %vm798 = vcmp.eq.s32.totalorder %v776, 1
        %vm799 = vcmp.eq.s32.totalorder %v779, 1
        %vm800 = vcmp.eq.s32.totalorder %v782, 1
        %vm801 = vcmp.eq.s32.totalorder %v785, 1
        %v802 = vsel %vm786, %v674, 0.0
        %v803 = vsel %vm787, %v675, 0.0
        %v804 = vsel %vm788, %v676, 0.0
        %v805 = vsel %vm789, %v677, 0.0
        %v806 = vsel %vm790, %v678, 0.0
        %v807 = vsel %vm791, %v679, 0.0
        %v808 = vsel %vm792, %v680, 0.0
        %v809 = vsel %vm793, %v681, 0.0
        %v810 = vsel %vm794, %v682, 0.0
        %v811 = vsel %vm795, %v683, 0.0
        %v812 = vsel %vm796, %v684, 0.0
        %v813 = vsel %vm797, %v685, 0.0
        %v814 = vsel %vm798, %v686, 0.0
        %v815 = vsel %vm799, %v687, 0.0
        %v816 = vsel %vm800, %v688, 0.0
        %v817 = vsel %vm801, %v689, 0.0
        %vm818 = vcmp.eq.s32.totalorder %v690, 0
        %vm819 = vcmp.eq.s32.totalorder %v691, 0
        %vm820 = vcmp.eq.s32.totalorder %v692, 0
        %vm821 = vcmp.eq.s32.totalorder %v693, 0
        %vm822 = vcmp.eq.s32.totalorder %v694, 0
        %vm823 = vcmp.eq.s32.totalorder %v695, 0
        %vm824 = vcmp.eq.s32.totalorder %v696, 0
        %vm825 = vcmp.eq.s32.totalorder %v697, 0
        %vm826 = vcmp.eq.s32.totalorder %v698, 0
        %vm827 = vcmp.eq.s32.totalorder %v699, 0
        %vm828 = vcmp.eq.s32.totalorder %v700, 0
        %vm829 = vcmp.eq.s32.totalorder %v701, 0
        %vm830 = vcmp.eq.s32.totalorder %v702, 0
        %vm831 = vcmp.eq.s32.totalorder %v703, 0
        %vm832 = vcmp.eq.s32.totalorder %v704, 0
        %vm833 = vcmp.eq.s32.totalorder %v705, 0
        %v834 = vsel %vm818, 1, 0
        %v835 = vsel %vm819, 1, 0
        %v836 = vsel %vm820, 1, 0
        %v837 = vsel %vm821, 1, 0
        %v838 = vsel %vm822, 1, 0
        %v839 = vsel %vm823, 1, 0
        %v840 = vsel %vm824, 1, 0
        %v841 = vsel %vm825, 1, 0
        %v842 = vsel %vm826, 1, 0
        %v843 = vsel %vm827, 1, 0
        %v844 = vsel %vm828, 1, 0
        %v845 = vsel %vm829, 1, 0
        %v846 = vsel %vm830, 1, 0
        %v847 = vsel %vm831, 1, 0
        %v848 = vsel %vm832, 1, 0
        %v849 = vsel %vm833, 1, 0
        %850 = vset.pattern.permute.xlu0 0
        %851 = vperm.xlu0 %850, %v834
        %v852 = vpop.permute.xlu0 %851
        %853 = vset.pattern.permute.xlu0 0
        %854 = vperm.xlu0 %853, %v835
        %v855 = vpop.permute.xlu0 %854
        %856 = vset.pattern.permute.xlu0 0
        %857 = vperm.xlu0 %856, %v836
        %v858 = vpop.permute.xlu0 %857
        %859 = vset.pattern.permute.xlu0 0
        %860 = vperm.xlu0 %859, %v837
        %v861 = vpop.permute.xlu0 %860
        %862 = vset.pattern.permute.xlu0 0
        %863 = vperm.xlu0 %862, %v838
        %v864 = vpop.permute.xlu0 %863
        %865 = vset.pattern.permute.xlu0 0
        %866 = vperm.xlu0 %865, %v839
        %v867 = vpop.permute.xlu0 %866
        %868 = vset.pattern.permute.xlu0 0
        %869 = vperm.xlu0 %868, %v840
        %v870 = vpop.permute.xlu0 %869
        %871 = vset.pattern.permute.xlu0 0
        %872 = vperm.xlu0 %871, %v841
        %v873 = vpop.permute.xlu0 %872
        %874 = vset.pattern.permute.xlu0 0
        %875 = vperm.xlu0 %874, %v842
        %v876 = vpop.permute.xlu0 %875
        %877 = vset.pattern.permute.xlu0 0
        %878 = vperm.xlu0 %877, %v843
        %v879 = vpop.permute.xlu0 %878
        %880 = vset.pattern.permute.xlu0 0
        %881 = vperm.xlu0 %880, %v844
        %v882 = vpop.permute.xlu0 %881
        %883 = vset.pattern.permute.xlu0 0
        %884 = vperm.xlu0 %883, %v845
        %v885 = vpop.permute.xlu0 %884
        %886 = vset.pattern.permute.xlu0 0
        %887 = vperm.xlu0 %886, %v846
        %v888 = vpop.permute.xlu0 %887
        %889 = vset.pattern.permute.xlu0 0
        %890 = vperm.xlu0 %889, %v847
        %v891 = vpop.permute.xlu0 %890
        %892 = vset.pattern.permute.xlu0 0
        %893 = vperm.xlu0 %892, %v848
        %v894 = vpop.permute.xlu0 %893
        %895 = vset.pattern.permute.xlu0 0
        %896 = vperm.xlu0 %895, %v849
        %v897 = vpop.permute.xlu0 %896
        %vm898 = vcmp.eq.s32.totalorder %v852, 1
        %vm899 = vcmp.eq.s32.totalorder %v855, 1
        %vm900 = vcmp.eq.s32.totalorder %v858, 1
        %vm901 = vcmp.eq.s32.totalorder %v861, 1
        %vm902 = vcmp.eq.s32.totalorder %v864, 1
        %vm903 = vcmp.eq.s32.totalorder %v867, 1
        %vm904 = vcmp.eq.s32.totalorder %v870, 1
        %vm905 = vcmp.eq.s32.totalorder %v873, 1
        %vm906 = vcmp.eq.s32.totalorder %v876, 1
        %vm907 = vcmp.eq.s32.totalorder %v879, 1
        %vm908 = vcmp.eq.s32.totalorder %v882, 1
        %vm909 = vcmp.eq.s32.totalorder %v885, 1
        %vm910 = vcmp.eq.s32.totalorder %v888, 1
        %vm911 = vcmp.eq.s32.totalorder %v891, 1
        %vm912 = vcmp.eq.s32.totalorder %v894, 1
        %vm913 = vcmp.eq.s32.totalorder %v897, 1
        %v914 = vsel %vm898, %v674, 0.0
        %v915 = vsel %vm899, %v675, 0.0
        %v916 = vsel %vm900, %v676, 0.0
        %v917 = vsel %vm901, %v677, 0.0
        %v918 = vsel %vm902, %v678, 0.0
        %v919 = vsel %vm903, %v679, 0.0
        %v920 = vsel %vm904, %v680, 0.0
        %v921 = vsel %vm905, %v681, 0.0
        %v922 = vsel %vm906, %v682, 0.0
        %v923 = vsel %vm907, %v683, 0.0
        %v924 = vsel %vm908, %v684, 0.0
        %v925 = vsel %vm909, %v685, 0.0
        %v926 = vsel %vm910, %v686, 0.0
        %v927 = vsel %vm911, %v687, 0.0
        %v928 = vsel %vm912, %v688, 0.0
        %v929 = vsel %vm913, %v689, 0.0
        %vm930 = vcmp.eq.s32.totalorder %v690, 2
        %vm931 = vcmp.eq.s32.totalorder %v691, 2
        %vm932 = vcmp.eq.s32.totalorder %v692, 2
        %vm933 = vcmp.eq.s32.totalorder %v693, 2
        %vm934 = vcmp.eq.s32.totalorder %v694, 2
        %vm935 = vcmp.eq.s32.totalorder %v695, 2
        %vm936 = vcmp.eq.s32.totalorder %v696, 2
        %vm937 = vcmp.eq.s32.totalorder %v697, 2
        %vm938 = vcmp.eq.s32.totalorder %v698, 2
        %vm939 = vcmp.eq.s32.totalorder %v699, 2
        %vm940 = vcmp.eq.s32.totalorder %v700, 2
        %vm941 = vcmp.eq.s32.totalorder %v701, 2
        %vm942 = vcmp.eq.s32.totalorder %v702, 2
        %vm943 = vcmp.eq.s32.totalorder %v703, 2
        %vm944 = vcmp.eq.s32.totalorder %v704, 2
        %vm945 = vcmp.eq.s32.totalorder %v705, 2
        %v946 = vsel %vm930, 1, 0
        %v947 = vsel %vm931, 1, 0
        %v948 = vsel %vm932, 1, 0
        %v949 = vsel %vm933, 1, 0
        %v950 = vsel %vm934, 1, 0
        %v951 = vsel %vm935, 1, 0
        %v952 = vsel %vm936, 1, 0
        %v953 = vsel %vm937, 1, 0
        %v954 = vsel %vm938, 1, 0
        %v955 = vsel %vm939, 1, 0
        %v956 = vsel %vm940, 1, 0
        %v957 = vsel %vm941, 1, 0
        %v958 = vsel %vm942, 1, 0
        %v959 = vsel %vm943, 1, 0
        %v960 = vsel %vm944, 1, 0
        %v961 = vsel %vm945, 1, 0
        %962 = vset.pattern.permute.xlu0 0
        %963 = vperm.xlu0 %962, %v946
        %v964 = vpop.permute.xlu0 %963
        %965 = vset.pattern.permute.xlu0 0
        %966 = vperm.xlu0 %965, %v947
        %v967 = vpop.permute.xlu0 %966
        %968 = vset.pattern.permute.xlu0 0
        %969 = vperm.xlu0 %968, %v948
        %v970 = vpop.permute.xlu0 %969
        %971 = vset.pattern.permute.xlu0 0
        %972 = vperm.xlu0 %971, %v949
        %v973 = vpop.permute.xlu0 %972
        %974 = vset.pattern.permute.xlu0 0
        %975 = vperm.xlu0 %974, %v950
        %v976 = vpop.permute.xlu0 %975
        %977 = vset.pattern.permute.xlu0 0
        %978 = vperm.xlu0 %977, %v951
        %v979 = vpop.permute.xlu0 %978
        %980 = vset.pattern.permute.xlu0 0
        %981 = vperm.xlu0 %980, %v952
        %v982 = vpop.permute.xlu0 %981
        %983 = vset.pattern.permute.xlu0 0
        %984 = vperm.xlu0 %983, %v953
        %v985 = vpop.permute.xlu0 %984
        %986 = vset.pattern.permute.xlu0 0
        %987 = vperm.xlu0 %986, %v954
        %v988 = vpop.permute.xlu0 %987
        %989 = vset.pattern.permute.xlu0 0
        %990 = vperm.xlu0 %989, %v955
        %v991 = vpop.permute.xlu0 %990
        %992 = vset.pattern.permute.xlu0 0
        %993 = vperm.xlu0 %992, %v956
        %v994 = vpop.permute.xlu0 %993
        %995 = vset.pattern.permute.xlu0 0
        %996 = vperm.xlu0 %995, %v957
        %v997 = vpop.permute.xlu0 %996
        %998 = vset.pattern.permute.xlu0 0
        %999 = vperm.xlu0 %998, %v958
        %v1000 = vpop.permute.xlu0 %999
        %1001 = vset.pattern.permute.xlu0 0
        %1002 = vperm.xlu0 %1001, %v959
        %v1003 = vpop.permute.xlu0 %1002
        %1004 = vset.pattern.permute.xlu0 0
        %1005 = vperm.xlu0 %1004, %v960
        %v1006 = vpop.permute.xlu0 %1005
        %1007 = vset.pattern.permute.xlu0 0
        %1008 = vperm.xlu0 %1007, %v961
        %v1009 = vpop.permute.xlu0 %1008
        %vm1010 = vcmp.eq.s32.totalorder %v964, 1
        %vm1011 = vcmp.eq.s32.totalorder %v967, 1
        %vm1012 = vcmp.eq.s32.totalorder %v970, 1
        %vm1013 = vcmp.eq.s32.totalorder %v973, 1
        %vm1014 = vcmp.eq.s32.totalorder %v976, 1
        %vm1015 = vcmp.eq.s32.totalorder %v979, 1
        %vm1016 = vcmp.eq.s32.totalorder %v982, 1
        %vm1017 = vcmp.eq.s32.totalorder %v985, 1
        %vm1018 = vcmp.eq.s32.totalorder %v988, 1
        %vm1019 = vcmp.eq.s32.totalorder %v991, 1
        %vm1020 = vcmp.eq.s32.totalorder %v994, 1
        %vm1021 = vcmp.eq.s32.totalorder %v997, 1
        %vm1022 = vcmp.eq.s32.totalorder %v1000, 1
        %vm1023 = vcmp.eq.s32.totalorder %v1003, 1
        %vm1024 = vcmp.eq.s32.totalorder %v1006, 1
        %vm1025 = vcmp.eq.s32.totalorder %v1009, 1
        %v1026 = vsel %vm1010, %v674, 0.0
        %v1027 = vsel %vm1011, %v675, 0.0
        %v1028 = vsel %vm1012, %v676, 0.0
        %v1029 = vsel %vm1013, %v677, 0.0
        %v1030 = vsel %vm1014, %v678, 0.0
        %v1031 = vsel %vm1015, %v679, 0.0
        %v1032 = vsel %vm1016, %v680, 0.0
        %v1033 = vsel %vm1017, %v681, 0.0
        %v1034 = vsel %vm1018, %v682, 0.0
        %v1035 = vsel %vm1019, %v683, 0.0
        %v1036 = vsel %vm1020, %v684, 0.0
        %v1037 = vsel %vm1021, %v685, 0.0
        %v1038 = vsel %vm1022, %v686, 0.0
        %v1039 = vsel %vm1023, %v687, 0.0
        %v1040 = vsel %vm1024, %v688, 0.0
        %v1041 = vsel %vm1025, %v689, 0.0
        %1058 = vrot.lane.b32.xlu0 %v914, 32
        %v1059 = vpop.permute.xlu0 %1058
        %1060 = vrot.lane.b32.xlu0 %v915, 32
        %v1061 = vpop.permute.xlu0 %1060
        %1062 = vrot.lane.b32.xlu0 %v916, 32
        %v1063 = vpop.permute.xlu0 %1062
        %1064 = vrot.lane.b32.xlu0 %v917, 32
        %v1065 = vpop.permute.xlu0 %1064
        %1066 = vrot.lane.b32.xlu0 %v918, 32
        %v1067 = vpop.permute.xlu0 %1066
        %1068 = vrot.lane.b32.xlu0 %v919, 32
        %v1069 = vpop.permute.xlu0 %1068
        %1070 = vrot.lane.b32.xlu0 %v920, 32
        %v1071 = vpop.permute.xlu0 %1070
        %1072 = vrot.lane.b32.xlu0 %v921, 32
        %v1073 = vpop.permute.xlu0 %1072
        %1074 = vrot.lane.b32.xlu0 %v922, 32
        %v1075 = vpop.permute.xlu0 %1074
        %1076 = vrot.lane.b32.xlu0 %v923, 32
        %v1077 = vpop.permute.xlu0 %1076
        %1078 = vrot.lane.b32.xlu0 %v924, 32
        %v1079 = vpop.permute.xlu0 %1078
        %1080 = vrot.lane.b32.xlu0 %v925, 32
        %v1081 = vpop.permute.xlu0 %1080
        %1082 = vrot.lane.b32.xlu0 %v926, 32
        %v1083 = vpop.permute.xlu0 %1082
        %1084 = vrot.lane.b32.xlu0 %v927, 32
        %v1085 = vpop.permute.xlu0 %1084
        %1086 = vrot.lane.b32.xlu0 %v928, 32
        %v1087 = vpop.permute.xlu0 %1086
        %1088 = vrot.lane.b32.xlu0 %v929, 32
        %v1089 = vpop.permute.xlu0 %1088
        %1122 = vrot.lane.b32.xlu0 %v1026, 64
        %v1123 = vpop.permute.xlu0 %1122
        %1124 = vrot.lane.b32.xlu0 %v1027, 64
        %v1125 = vpop.permute.xlu0 %1124
        %1126 = vrot.lane.b32.xlu0 %v1028, 64
        %v1127 = vpop.permute.xlu0 %1126
        %1128 = vrot.lane.b32.xlu0 %v1029, 64
        %v1129 = vpop.permute.xlu0 %1128
        %1130 = vrot.lane.b32.xlu0 %v1030, 64
        %v1131 = vpop.permute.xlu0 %1130
        %1132 = vrot.lane.b32.xlu0 %v1031, 64
        %v1133 = vpop.permute.xlu0 %1132
        %1134 = vrot.lane.b32.xlu0 %v1032, 64
        %v1135 = vpop.permute.xlu0 %1134
        %1136 = vrot.lane.b32.xlu0 %v1033, 64
        %v1137 = vpop.permute.xlu0 %1136
        %1138 = vrot.lane.b32.xlu0 %v1034, 64
        %v1139 = vpop.permute.xlu0 %1138
        %1140 = vrot.lane.b32.xlu0 %v1035, 64
        %v1141 = vpop.permute.xlu0 %1140
        %1142 = vrot.lane.b32.xlu0 %v1036, 64
        %v1143 = vpop.permute.xlu0 %1142
        %1144 = vrot.lane.b32.xlu0 %v1037, 64
        %v1145 = vpop.permute.xlu0 %1144
        %1146 = vrot.lane.b32.xlu0 %v1038, 64
        %v1147 = vpop.permute.xlu0 %1146
        %1148 = vrot.lane.b32.xlu0 %v1039, 64
        %v1149 = vpop.permute.xlu0 %1148
        %1150 = vrot.lane.b32.xlu0 %v1040, 64
        %v1151 = vpop.permute.xlu0 %1150
        %1152 = vrot.lane.b32.xlu0 %v1041, 64
        %v1153 = vpop.permute.xlu0 %1152
        %1170 = vrot.lane.b32.xlu0 %v1026, 96
        %v1171 = vpop.permute.xlu0 %1170
        %1172 = vrot.lane.b32.xlu0 %v1027, 96
        %v1173 = vpop.permute.xlu0 %1172
        %1174 = vrot.lane.b32.xlu0 %v1028, 96
        %v1175 = vpop.permute.xlu0 %1174
        %1176 = vrot.lane.b32.xlu0 %v1029, 96
        %v1177 = vpop.permute.xlu0 %1176
        %1178 = vrot.lane.b32.xlu0 %v1030, 96
        %v1179 = vpop.permute.xlu0 %1178
        %1180 = vrot.lane.b32.xlu0 %v1031, 96
        %v1181 = vpop.permute.xlu0 %1180
        %1182 = vrot.lane.b32.xlu0 %v1032, 96
        %v1183 = vpop.permute.xlu0 %1182
        %1184 = vrot.lane.b32.xlu0 %v1033, 96
        %v1185 = vpop.permute.xlu0 %1184
        %1186 = vrot.lane.b32.xlu0 %v1034, 96
        %v1187 = vpop.permute.xlu0 %1186
        %1188 = vrot.lane.b32.xlu0 %v1035, 96
        %v1189 = vpop.permute.xlu0 %1188
        %1190 = vrot.lane.b32.xlu0 %v1036, 96
        %v1191 = vpop.permute.xlu0 %1190
        %1192 = vrot.lane.b32.xlu0 %v1037, 96
        %v1193 = vpop.permute.xlu0 %1192
        %1194 = vrot.lane.b32.xlu0 %v1038, 96
        %v1195 = vpop.permute.xlu0 %1194
        %1196 = vrot.lane.b32.xlu0 %v1039, 96
        %v1197 = vpop.permute.xlu0 %1196
        %1198 = vrot.lane.b32.xlu0 %v1040, 96
        %v1199 = vpop.permute.xlu0 %1198
        %1200 = vrot.lane.b32.xlu0 %v1041, 96
        %v1201 = vpop.permute.xlu0 %1200
        %vm1218 = vcmask 261120
        %v1219 = vsel %vm1218, %v802, %v1059
        %v1220 = vsel %vm1218, %v803, %v1061
        %v1221 = vsel %vm1218, %v804, %v1063
        %v1222 = vsel %vm1218, %v805, %v1065
        %v1223 = vsel %vm1218, %v806, %v1067
        %v1224 = vsel %vm1218, %v807, %v1069
        %v1225 = vsel %vm1218, %v808, %v1071
        %v1226 = vsel %vm1218, %v809, %v1073
        %v1227 = vsel %vm1218, %v810, %v1075
        %v1228 = vsel %vm1218, %v811, %v1077
        %v1229 = vsel %vm1218, %v812, %v1079
        %v1230 = vsel %vm1218, %v813, %v1081
        %v1231 = vsel %vm1218, %v814, %v1083
        %v1232 = vsel %vm1218, %v815, %v1085
        %v1233 = vsel %vm1218, %v816, %v1087
        %v1234 = vsel %vm1218, %v817, %v1089
        %vm1235 = vcmask 523264
        %v1236 = vsel %vm1235, %v1219, %v1123
        %v1237 = vsel %vm1235, %v1220, %v1125
        %v1238 = vsel %vm1235, %v1221, %v1127
        %v1239 = vsel %vm1235, %v1222, %v1129
        %v1240 = vsel %vm1235, %v1223, %v1131
        %v1241 = vsel %vm1235, %v1224, %v1133
        %v1242 = vsel %vm1235, %v1225, %v1135
        %v1243 = vsel %vm1235, %v1226, %v1137
        %v1244 = vsel %vm1235, %v1227, %v1139
        %v1245 = vsel %vm1235, %v1228, %v1141
        %v1246 = vsel %vm1235, %v1229, %v1143
        %v1247 = vsel %vm1235, %v1230, %v1145
        %v1248 = vsel %vm1235, %v1231, %v1147
        %v1249 = vsel %vm1235, %v1232, %v1149
        %v1250 = vsel %vm1235, %v1233, %v1151
        %v1251 = vsel %vm1235, %v1234, %v1153
        %vm1252 = vcmask 785408
        %v1253 = vsel %vm1252, %v1236, %v1171
        %v1254 = vsel %vm1252, %v1237, %v1173
        %v1255 = vsel %vm1252, %v1238, %v1175
        %v1256 = vsel %vm1252, %v1239, %v1177
        %v1257 = vsel %vm1252, %v1240, %v1179
        %v1258 = vsel %vm1252, %v1241, %v1181
        %v1259 = vsel %vm1252, %v1242, %v1183
        %v1260 = vsel %vm1252, %v1243, %v1185
        %v1261 = vsel %vm1252, %v1244, %v1187
        %v1262 = vsel %vm1252, %v1245, %v1189
        %v1263 = vsel %vm1252, %v1246, %v1191
        %v1264 = vsel %vm1252, %v1247, %v1193
        %v1265 = vsel %vm1252, %v1248, %v1195
        %v1266 = vsel %vm1252, %v1249, %v1197
        %v1267 = vsel %vm1252, %v1250, %v1199
        %v1268 = vsel %vm1252, %v1251, %v1201
        %v1269 = vpack.c.bf16 %v1254, %v1253
        %v1270 = vpack.c.bf16 %v1256, %v1255
        %v1271 = vpack.c.bf16 %v1258, %v1257
        %v1272 = vpack.c.bf16 %v1260, %v1259
        %v1273 = vpack.c.bf16 %v1262, %v1261
        %v1274 = vpack.c.bf16 %v1264, %v1263
        %v1275 = vpack.c.bf16 %v1266, %v1265
        %v1276 = vpack.c.bf16 %v1268, %v1267
        %v1277 = vld [vmem:[#allocation2] sm:$0xff]
        %v1278 = vld [vmem:[#allocation2 + $0x8] sm:$0xff]
        %v1279 = vld [vmem:[#allocation2 + $0x10] sm:$0xff]
        %v1280 = vld [vmem:[#allocation2 + $0x18] sm:$0xff]
        %v1281 = vld [vmem:[#allocation2 + $0x20] sm:$0xff]
        %v1282 = vld [vmem:[#allocation2 + $0x28] sm:$0xff]
        %v1283 = vld [vmem:[#allocation2 + $0x30] sm:$0xff]
        %v1284 = vld [vmem:[#allocation2 + $0x38] sm:$0xff]
        %v1285 = vld [vmem:[#allocation2 + $0x40] sm:$0xff]
        %v1286 = vld [vmem:[#allocation2 + $0x48] sm:$0xff]
        %v1287 = vld [vmem:[#allocation2 + $0x50] sm:$0xff]
        %v1288 = vld [vmem:[#allocation2 + $0x58] sm:$0xff]
        %v1289 = vld [vmem:[#allocation2 + $0x60] sm:$0xff]
        %v1290 = vld [vmem:[#allocation2 + $0x68] sm:$0xff]
        %v1291 = vld [vmem:[#allocation2 + $0x70] sm:$0xff]
        %v1292 = vld [vmem:[#allocation2 + $0x78] sm:$0xff]
        %v1293 = vld [vmem:[%s558] sm:$0xf]
        %v1294 = vld [vmem:[%s558 + $0x4] sm:$0xf]
        %v1295 = vld [vmem:[%s558 + $0x8] sm:$0xf]
        %v1296 = vld [vmem:[%s558 + $0xc] sm:$0xf]
        %v1297 = vld [vmem:[%s558 + $0x10] sm:$0xf]
        %v1298 = vld [vmem:[%s558 + $0x14] sm:$0xf]
        %v1299 = vld [vmem:[%s558 + $0x18] sm:$0xf]
        %v1300 = vld [vmem:[%s558 + $0x1c] sm:$0xf]
        %v1301 = vld [vmem:[%s558 + $0x20] sm:$0xf]
        %v1302 = vld [vmem:[%s558 + $0x24] sm:$0xf]
        %v1303 = vld [vmem:[%s558 + $0x28] sm:$0xf]
        %v1304 = vld [vmem:[%s558 + $0x2c] sm:$0xf]
        %v1305 = vld [vmem:[%s558 + $0x30] sm:$0xf]
        %v1306 = vld [vmem:[%s558 + $0x34] sm:$0xf]
        %v1307 = vld [vmem:[%s558 + $0x38] sm:$0xf]
        %v1308 = vld [vmem:[%s558 + $0x3c] sm:$0xf]
        %v1325 = vunpack.c.l.b16 %v1293
        %v1326 = vunpack.c.l.b16 %v1294
        %v1327 = vunpack.c.l.b16 %v1295
        %v1328 = vunpack.c.l.b16 %v1296
        %v1329 = vunpack.c.l.b16 %v1297
        %v1330 = vunpack.c.l.b16 %v1298
        %v1331 = vunpack.c.l.b16 %v1299
        %v1332 = vunpack.c.l.b16 %v1300
        %v1333 = vunpack.c.l.b16 %v1301
        %v1334 = vunpack.c.l.b16 %v1302
        %v1335 = vunpack.c.l.b16 %v1303
        %v1336 = vunpack.c.l.b16 %v1304
        %v1337 = vunpack.c.l.b16 %v1305
        %v1338 = vunpack.c.l.b16 %v1306
        %v1339 = vunpack.c.l.b16 %v1307
        %v1340 = vunpack.c.l.b16 %v1308
        %v1341 = vpack.c.b16 %v1326, %v1325
        %v1342 = vpack.c.b16 %v1328, %v1327
        %v1343 = vpack.c.b16 %v1330, %v1329
        %v1344 = vpack.c.b16 %v1332, %v1331
        %v1345 = vpack.c.b16 %v1334, %v1333
        %v1346 = vpack.c.b16 %v1336, %v1335
        %v1347 = vpack.c.b16 %v1338, %v1337
        %v1348 = vpack.c.b16 %v1340, %v1339
        %1357 = vmatprep.subr.bf16.mxu0 0
        %1358 = vmatpush1.bf16.msra.mxu0 %v1269
        %1359 = vmatprep.subr.bf16.mxu0 0
        %1360 = vmatpush1.bf16.msra.mxu0 %v1270
        %1361 = vmatprep.subr.bf16.mxu0 0
        %1362 = vmatpush1.bf16.msra.mxu0 %v1271
        %1363 = vmatprep.subr.bf16.mxu0 0
        %1364 = vmatpush1.bf16.msra.mxu0 %v1272
        %1365 = vmatprep.subr.bf16.mxu0 0
        %1366 = vmatpush1.bf16.msra.mxu0 %v1273
        %1367 = vmatprep.subr.bf16.mxu0 0
        %1368 = vmatpush1.bf16.msra.mxu0 %v1274
        %1369 = vmatprep.subr.bf16.mxu0 0
        %1370 = vmatpush1.bf16.msra.mxu0 %v1275
        %1371 = vmatprep.subr.bf16.mxu0 0
        %1372 = vmatpush1.bf16.msra.mxu0 %v1276
        %1373 = vmatprep.subr.bf16.mxu0 0
        %1374 = vmatpush1.bf16.msra.mxu0 0
        %1375 = vmatprep.subr.bf16.mxu0 0
        %1376 = vmatpush1.bf16.msra.mxu0 0
        %1377 = vmatprep.subr.bf16.mxu0 0
        %1378 = vmatpush1.bf16.msra.mxu0 0
        %1379 = vmatprep.subr.bf16.mxu0 0
        %1380 = vmatpush1.bf16.msra.mxu0 0
        %1381 = vmatprep.subr.bf16.mxu0 0
        %1382 = vmatpush1.bf16.msra.mxu0 0
        %1383 = vmatprep.subr.bf16.mxu0 0
        %1384 = vmatpush1.bf16.msra.mxu0 0
        %1385 = vmatprep.subr.bf16.mxu0 0
        %1386 = vmatpush1.bf16.msra.mxu0 0
        %1387 = vmatprep.subr.bf16.mxu0 0
        %1388 = vmatpush1.bf16.msra.mxu0 0
        %1389 = vmatprep.mubr.bf16.mxu0 0
        %1390 = vmatmul.mubr.bf16.gmra.mrb[0].mxu0 %v1341
        %v1391 = vpop.f32.mrb[0].mxu0
        %v1392 = vadd.f32 0.0, %v1391
        %v1393 = vpop.f32.mrb[0].mxu0
        %v1394 = vpop.f32.mrb[0].mxu0
        %v1395 = vadd.f32 0.0, %v1394
        %v1396 = vpop.f32.mrb[0].mxu0
        %1397 = vmatprep.mubr.bf16.mxu0 0
        %1398 = vmatmul.mubr.bf16.gmra.mrb[0].mxu0 %v1342
        %v1399 = vpop.f32.mrb[0].mxu0
        %v1400 = vadd.f32 0.0, %v1399
        %v1401 = vpop.f32.mrb[0].mxu0
        %v1402 = vpop.f32.mrb[0].mxu0
        %v1403 = vadd.f32 0.0, %v1402
        %v1404 = vpop.f32.mrb[0].mxu0
        %1405 = vmatprep.mubr.bf16.mxu0 0
        %1406 = vmatmul.mubr.bf16.gmra.mrb[0].mxu0 %v1343
        %v1407 = vpop.f32.mrb[0].mxu0
        %v1408 = vadd.f32 0.0, %v1407
        %v1409 = vpop.f32.mrb[0].mxu0
        %v1410 = vpop.f32.mrb[0].mxu0
        %v1411 = vadd.f32 0.0, %v1410
        %v1412 = vpop.f32.mrb[0].mxu0
        %1413 = vmatprep.mubr.bf16.mxu0 0
        %1414 = vmatmul.mubr.bf16.gmra.mrb[0].mxu0 %v1344
        %v1415 = vpop.f32.mrb[0].mxu0
        %v1416 = vadd.f32 0.0, %v1415
        %v1417 = vpop.f32.mrb[0].mxu0
        %v1418 = vpop.f32.mrb[0].mxu0
        %v1419 = vadd.f32 0.0, %v1418
        %v1420 = vpop.f32.mrb[0].mxu0
        %1421 = vmatprep.mubr.bf16.mxu0 0
        %1422 = vmatmul.mubr.bf16.gmra.mrb[0].mxu0 %v1345
        %v1423 = vpop.f32.mrb[0].mxu0
        %v1424 = vadd.f32 0.0, %v1423
        %v1425 = vpop.f32.mrb[0].mxu0
        %v1426 = vpop.f32.mrb[0].mxu0
        %v1427 = vadd.f32 0.0, %v1426
        %v1428 = vpop.f32.mrb[0].mxu0
        %1429 = vmatprep.mubr.bf16.mxu0 0
        %1430 = vmatmul.mubr.bf16.gmra.mrb[0].mxu0 %v1346
        %v1431 = vpop.f32.mrb[0].mxu0
        %v1432 = vadd.f32 0.0, %v1431
        %v1433 = vpop.f32.mrb[0].mxu0
        %v1434 = vpop.f32.mrb[0].mxu0
        %v1435 = vadd.f32 0.0, %v1434
        %v1436 = vpop.f32.mrb[0].mxu0
        %1437 = vmatprep.mubr.bf16.mxu0 0
        %1438 = vmatmul.mubr.bf16.gmra.mrb[0].mxu0 %v1347
        %v1439 = vpop.f32.mrb[0].mxu0
        %v1440 = vadd.f32 0.0, %v1439
        %v1441 = vpop.f32.mrb[0].mxu0
        %v1442 = vpop.f32.mrb[0].mxu0
        %v1443 = vadd.f32 0.0, %v1442
        %v1444 = vpop.f32.mrb[0].mxu0
        %1445 = vmatprep.mubr.bf16.mxu0 0
        %1446 = vmatmul.mubr.bf16.gmra.mrb[0].mxu0 %v1348
        %v1447 = vpop.f32.mrb[0].mxu0
        %v1448 = vadd.f32 0.0, %v1447
        %v1449 = vpop.f32.mrb[0].mxu0
        %v1450 = vpop.f32.mrb[0].mxu0
        %v1451 = vadd.f32 0.0, %v1450
        %v1452 = vpop.f32.mrb[0].mxu0
        %1453 = vdwg.mxu0
        %v1454 = vadd.f32 %v1277, %v1392
        %v1455 = vadd.f32 %v1278, %v1395
        %v1456 = vadd.f32 %v1279, %v1400
        %v1457 = vadd.f32 %v1280, %v1403
        %v1458 = vadd.f32 %v1281, %v1408
        %v1459 = vadd.f32 %v1282, %v1411
        %v1460 = vadd.f32 %v1283, %v1416
        %v1461 = vadd.f32 %v1284, %v1419
        %v1462 = vadd.f32 %v1285, %v1424
        %v1463 = vadd.f32 %v1286, %v1427
        %v1464 = vadd.f32 %v1287, %v1432
        %v1465 = vadd.f32 %v1288, %v1435
        %v1466 = vadd.f32 %v1289, %v1440
        %v1467 = vadd.f32 %v1290, %v1443
        %v1468 = vadd.f32 %v1291, %v1448
        %v1469 = vadd.f32 %v1292, %v1451
        %1470 = vst [vmem:[#allocation2] sm:$0xff] %v1454
        %1471 = vst [vmem:[#allocation2 + $0x8] sm:$0xff] %v1455
        %1472 = vst [vmem:[#allocation2 + $0x10] sm:$0xff] %v1456
        %1473 = vst [vmem:[#allocation2 + $0x18] sm:$0xff] %v1457
        %1474 = vst [vmem:[#allocation2 + $0x20] sm:$0xff] %v1458
        %1475 = vst [vmem:[#allocation2 + $0x28] sm:$0xff] %v1459
        %1476 = vst [vmem:[#allocation2 + $0x30] sm:$0xff] %v1460
        %1477 = vst [vmem:[#allocation2 + $0x38] sm:$0xff] %v1461
        %1478 = vst [vmem:[#allocation2 + $0x40] sm:$0xff] %v1462
        %1479 = vst [vmem:[#allocation2 + $0x48] sm:$0xff] %v1463
        %1480 = vst [vmem:[#allocation2 + $0x50] sm:$0xff] %v1464
        %1481 = vst [vmem:[#allocation2 + $0x58] sm:$0xff] %v1465
        %1482 = vst [vmem:[#allocation2 + $0x60] sm:$0xff] %v1466
        %1483 = vst [vmem:[#allocation2 + $0x68] sm:$0xff] %v1467
        %1484 = vst [vmem:[#allocation2 + $0x70] sm:$0xff] %v1468
        %1485 = vst [vmem:[#allocation2 + $0x78] sm:$0xff] %v1469
        %p1486 = scmp.eq.s32.totalorder %s33, 1
        // Predicated region
        $region130: #{lasage_s_conv.1} parent=104 // pred_check
          %p1487 = pneg %p1486
        $region131: #{lasage_s_conv.1} parent=104 // pred_check_branch
          %1489 = sbr.rel (%p1487) target = $region133
        $region132: #{lasage_s_conv.1} parent=104 // pred_region
          %v1490 = vld [vmem:[%s645] sm:$0xff]
          %v1491 = vld [vmem:[%s645 + $0x8] sm:$0xff]
          %v1492 = vld [vmem:[%s645 + $0x10] sm:$0xff]
          %v1493 = vld [vmem:[%s645 + $0x18] sm:$0xff]
          %v1494 = vld [vmem:[%s645 + $0x20] sm:$0xff]
          %v1495 = vld [vmem:[%s645 + $0x28] sm:$0xff]
          %v1496 = vld [vmem:[%s645 + $0x30] sm:$0xff]
          %v1497 = vld [vmem:[%s645 + $0x38] sm:$0xff]
          %v1498 = vld [vmem:[%s645 + $0x40] sm:$0xff]
          %v1499 = vld [vmem:[%s645 + $0x48] sm:$0xff]
          %v1500 = vld [vmem:[%s645 + $0x50] sm:$0xff]
          %v1501 = vld [vmem:[%s645 + $0x58] sm:$0xff]
          %v1502 = vld [vmem:[%s645 + $0x60] sm:$0xff]
          %v1503 = vld [vmem:[%s645 + $0x68] sm:$0xff]
          %v1504 = vld [vmem:[%s645 + $0x70] sm:$0xff]
          %v1505 = vld [vmem:[%s645 + $0x78] sm:$0xff]
          %v1506 = vld [vmem:[%s4] sm:$0xff]
          %v1507 = vld [vmem:[%s4 + $0x8] sm:$0xff]
          %v1508 = vld [vmem:[%s4 + $0x10] sm:$0xff]
          %v1509 = vld [vmem:[%s4 + $0x18] sm:$0xff]
          %v1510 = vld [vmem:[%s4 + $0x20] sm:$0xff]
          %v1511 = vld [vmem:[%s4 + $0x28] sm:$0xff]
          %v1512 = vld [vmem:[%s4 + $0x30] sm:$0xff]
          %v1513 = vld [vmem:[%s4 + $0x38] sm:$0xff]
          %v1514 = vld [vmem:[%s4 + $0x40] sm:$0xff]
          %v1515 = vld [vmem:[%s4 + $0x48] sm:$0xff]
          %v1516 = vld [vmem:[%s4 + $0x50] sm:$0xff]
          %v1517 = vld [vmem:[%s4 + $0x58] sm:$0xff]
          %v1518 = vld [vmem:[#allocation5] sm:$0x7]
          %v1520 = vlaneseq
          %v1521 = vshrl.u32 %v1520, 7
          %v1522 = vsub.s32 0, %v1521
          %v1523 = vrot.slane %v1518, %v1522
          %v1524 = vlaneseq
          %v1525 = vshrl.u32 %v1524, 7
          %v1526 = vsub.s32 1, %v1525
          %v1527 = vrot.slane %v1518, %v1526
          %v1528 = vlaneseq
          %v1529 = vshrl.u32 %v1528, 7
          %v1530 = vsub.s32 2, %v1529
          %v1531 = vrot.slane %v1518, %v1530
          %v1536 = vsel %vm1218, %v1490, 0
          %v1539 = vsel %vm1218, %v1491, 0
          %v1542 = vsel %vm1218, %v1492, 0
          %v1545 = vsel %vm1218, %v1493, 0
          %v1548 = vsel %vm1218, %v1494, 0
          %v1551 = vsel %vm1218, %v1495, 0
          %v1554 = vsel %vm1218, %v1496, 0
          %v1557 = vsel %vm1218, %v1497, 0
          %v1560 = vsel %vm1218, %v1498, 0
          %v1563 = vsel %vm1218, %v1499, 0
          %v1566 = vsel %vm1218, %v1500, 0
          %v1569 = vsel %vm1218, %v1501, 0
          %v1572 = vsel %vm1218, %v1502, 0
          %v1575 = vsel %vm1218, %v1503, 0
          %v1578 = vsel %vm1218, %v1504, 0
          %v1581 = vsel %vm1218, %v1505, 0
          %1583 = vmatprep.subr.mxu0 %v1507
          %1584 = vmatpush1.msra.mxu0 %v1506
          %1585 = vmatprep.subr.mxu0 %v1510
          %1586 = vmatpush1.msra.mxu0 %v1509
          %1587 = vmatprep.subr.mxu0 %v1513
          %1588 = vmatpush1.msra.mxu0 %v1512
          %1589 = vmatprep.subr.mxu0 %v1516
          %1590 = vmatpush1.msra.mxu0 %v1515
          %1591 = vmatprep.subr.mxu0 0.0
          %1592 = vmatpush1.msra.mxu0 0.0
          %1593 = vmatprep.subr.mxu0 0.0
          %1594 = vmatpush1.msra.mxu0 0.0
          %1595 = vmatprep.subr.mxu0 0.0
          %1596 = vmatpush1.msra.mxu0 0.0
          %1597 = vmatprep.subr.mxu0 0.0
          %1598 = vmatpush1.msra.mxu0 0.0
          %1599 = vmatprep.subr.mxu0 0.0
          %1600 = vmatpush1.msra.mxu0 0.0
          %1601 = vmatprep.subr.mxu0 0.0
          %1602 = vmatpush1.msra.mxu0 0.0
          %1603 = vmatprep.subr.mxu0 0.0
          %1604 = vmatpush1.msra.mxu0 0.0
          %1605 = vmatprep.subr.mxu0 0.0
          %1606 = vmatpush1.msra.mxu0 0.0
          %1607 = vmatprep.subr.mxu0 0.0
          %1608 = vmatpush1.msra.mxu0 0.0
          %1609 = vmatprep.subr.mxu0 0.0
          %1610 = vmatpush1.msra.mxu0 0.0
          %1611 = vmatprep.subr.mxu0 0.0
          %1612 = vmatpush1.msra.mxu0 0.0
          %1613 = vmatprep.subr.mxu0 0.0
          %1614 = vmatpush1.msra.mxu0 0.0
          %1615 = vmatprep.subr.mxu0 0.0
          %1616 = vmatpush1.msra.mxu0 0.0
          %1617 = vmatprep.subr.mxu0 0.0
          %1618 = vmatpush1.msra.mxu0 0.0
          %1619 = vmatprep.subr.mxu0 0.0
          %1620 = vmatpush1.msra.mxu0 0.0
          %1621 = vmatprep.subr.mxu0 0.0
          %1622 = vmatpush1.msra.mxu0 0.0
          %1623 = vmatprep.subr.mxu0 0.0
          %1624 = vmatpush1.msra.mxu0 0.0
          %1625 = vmatprep.subr.mxu0 0.0
          %1626 = vmatpush1.msra.mxu0 0.0
          %1627 = vmatprep.subr.mxu0 0.0
          %1628 = vmatpush1.msra.mxu0 0.0
          %1629 = vmatprep.subr.mxu0 0.0
          %1630 = vmatpush1.msra.mxu0 0.0
          %1631 = vmatprep.subr.mxu0 0.0
          %1632 = vmatpush1.msra.mxu0 0.0
          %1633 = vmatprep.subr.mxu0 0.0
          %1634 = vmatpush1.msra.mxu0 0.0
          %1635 = vmatprep.subr.mxu0 0.0
          %1636 = vmatpush1.msra.mxu0 0.0
          %1637 = vmatprep.subr.mxu0 0.0
          %1638 = vmatpush1.msra.mxu0 0.0
          %1639 = vmatprep.subr.mxu0 0.0
          %1640 = vmatpush1.msra.mxu0 0.0
          %1641 = vmatprep.subr.mxu0 0.0
          %1642 = vmatpush1.msra.mxu0 0.0
          %1643 = vmatprep.subr.mxu0 0.0
          %1644 = vmatpush1.msra.mxu0 0.0
          %1645 = vmatprep.subr.mxu0 0.0
          %1646 = vmatpush1.msra.mxu0 0.0
          %1647 = vmatprep.mubr.f32.mxu0 0.0
          %1648 = vmatmul.mubr.f32.gmra.mrb[0].mxu0 %v1536
          %v1649 = vpop.f32.mrb[0].mxu0
          %v1650 = vadd.f32 %v1523, %v1649
          %v1651 = vpop.f32.mrb[0].mxu0
          %v1652 = vadd.f32 %v1527, %v1651
          %1653 = vmatprep.mubr.f32.mxu0 0.0
          %1654 = vmatmul.mubr.f32.gmra.mrb[0].mxu0 %v1539
          %v1655 = vpop.f32.mrb[0].mxu0
          %v1656 = vadd.f32 %v1523, %v1655
          %v1657 = vpop.f32.mrb[0].mxu0
          %v1658 = vadd.f32 %v1527, %v1657
          %1659 = vmatprep.mubr.f32.mxu0 0.0
          %1660 = vmatmul.mubr.f32.gmra.mrb[0].mxu0 %v1542
          %v1661 = vpop.f32.mrb[0].mxu0
          %v1662 = vadd.f32 %v1523, %v1661
          %v1663 = vpop.f32.mrb[0].mxu0
          %v1664 = vadd.f32 %v1527, %v1663
          %1665 = vmatprep.mubr.f32.mxu0 0.0
          %1666 = vmatmul.mubr.f32.gmra.mrb[0].mxu0 %v1545
          %v1667 = vpop.f32.mrb[0].mxu0
          %v1668 = vadd.f32 %v1523, %v1667
          %v1669 = vpop.f32.mrb[0].mxu0
          %v1670 = vadd.f32 %v1527, %v1669
          %1671 = vmatprep.mubr.f32.mxu0 0.0
          %1672 = vmatmul.mubr.f32.gmra.mrb[0].mxu0 %v1548
          %v1673 = vpop.f32.mrb[0].mxu0
          %v1674 = vadd.f32 %v1523, %v1673
          %v1675 = vpop.f32.mrb[0].mxu0
          %v1676 = vadd.f32 %v1527, %v1675
          %1677 = vmatprep.mubr.f32.mxu0 0.0
          %1678 = vmatmul.mubr.f32.gmra.mrb[0].mxu0 %v1551
          %v1679 = vpop.f32.mrb[0].mxu0
          %v1680 = vadd.f32 %v1523, %v1679
          %v1681 = vpop.f32.mrb[0].mxu0
          %v1682 = vadd.f32 %v1527, %v1681
          %1683 = vmatprep.mubr.f32.mxu0 0.0
          %1684 = vmatmul.mubr.f32.gmra.mrb[0].mxu0 %v1554
          %v1685 = vpop.f32.mrb[0].mxu0
          %v1686 = vadd.f32 %v1523, %v1685
          %v1687 = vpop.f32.mrb[0].mxu0
          %v1688 = vadd.f32 %v1527, %v1687
          %1689 = vmatprep.mubr.f32.mxu0 0.0
          %1690 = vmatmul.mubr.f32.gmra.mrb[0].mxu0 %v1557
          %v1691 = vpop.f32.mrb[0].mxu0
          %v1692 = vadd.f32 %v1523, %v1691
          %v1693 = vpop.f32.mrb[0].mxu0
          %v1694 = vadd.f32 %v1527, %v1693
          %1695 = vmatprep.mubr.f32.mxu0 0.0
          %1696 = vmatmul.mubr.f32.gmra.mrb[0].mxu0 %v1560
          %v1697 = vpop.f32.mrb[0].mxu0
          %v1698 = vadd.f32 %v1523, %v1697
          %v1699 = vpop.f32.mrb[0].mxu0
          %v1700 = vadd.f32 %v1527, %v1699
          %1701 = vmatprep.mubr.f32.mxu0 0.0
          %1702 = vmatmul.mubr.f32.gmra.mrb[0].mxu0 %v1563
          %v1703 = vpop.f32.mrb[0].mxu0
          %v1704 = vadd.f32 %v1523, %v1703
          %v1705 = vpop.f32.mrb[0].mxu0
          %v1706 = vadd.f32 %v1527, %v1705
          %1707 = vmatprep.mubr.f32.mxu0 0.0
          %1708 = vmatmul.mubr.f32.gmra.mrb[0].mxu0 %v1566
          %v1709 = vpop.f32.mrb[0].mxu0
          %v1710 = vadd.f32 %v1523, %v1709
          %v1711 = vpop.f32.mrb[0].mxu0
          %v1712 = vadd.f32 %v1527, %v1711
          %1713 = vmatprep.mubr.f32.mxu0 0.0
          %1714 = vmatmul.mubr.f32.gmra.mrb[0].mxu0 %v1569
          %v1715 = vpop.f32.mrb[0].mxu0
          %v1716 = vadd.f32 %v1523, %v1715
          %v1717 = vpop.f32.mrb[0].mxu0
          %v1718 = vadd.f32 %v1527, %v1717
          %1719 = vmatprep.mubr.f32.mxu0 0.0
          %1720 = vmatmul.mubr.f32.gmra.mrb[0].mxu0 %v1572
          %v1721 = vpop.f32.mrb[0].mxu0
          %v1722 = vadd.f32 %v1523, %v1721
          %v1723 = vpop.f32.mrb[0].mxu0
          %v1724 = vadd.f32 %v1527, %v1723
          %1725 = vmatprep.mubr.f32.mxu0 0.0
          %1726 = vmatmul.mubr.f32.gmra.mrb[0].mxu0 %v1575
          %v1727 = vpop.f32.mrb[0].mxu0
          %v1728 = vadd.f32 %v1523, %v1727
          %v1729 = vpop.f32.mrb[0].mxu0
          %v1730 = vadd.f32 %v1527, %v1729
          %1731 = vmatprep.mubr.f32.mxu0 0.0
          %1732 = vmatmul.mubr.f32.gmra.mrb[0].mxu0 %v1578
          %v1733 = vpop.f32.mrb[0].mxu0
          %v1734 = vadd.f32 %v1523, %v1733
          %v1735 = vpop.f32.mrb[0].mxu0
          %v1736 = vadd.f32 %v1527, %v1735
          %1737 = vmatprep.mubr.f32.mxu0 0.0
          %1738 = vmatmul.mubr.f32.gmra.mrb[0].mxu0 %v1581
          %v1739 = vpop.f32.mrb[0].mxu0
          %v1740 = vadd.f32 %v1523, %v1739
          %v1741 = vpop.f32.mrb[0].mxu0
          %v1742 = vadd.f32 %v1527, %v1741
          %1743 = vdwg.mxu0
          %1744 = vmatprep.subr.mxu0 0.0
          %1745 = vmatpush1.msra.mxu0 %v1508
          %1746 = vmatprep.subr.mxu0 0.0
          %1747 = vmatpush1.msra.mxu0 %v1511
          %1748 = vmatprep.subr.mxu0 0.0
          %1749 = vmatpush1.msra.mxu0 %v1514
          %1750 = vmatprep.subr.mxu0 0.0
          %1751 = vmatpush1.msra.mxu0 %v1517
          %1752 = vmatprep.subr.mxu0 0.0
          %1753 = vmatpush1.msra.mxu0 0.0
          %1754 = vmatprep.subr.mxu0 0.0
          %1755 = vmatpush1.msra.mxu0 0.0
          %1756 = vmatprep.subr.mxu0 0.0
          %1757 = vmatpush1.msra.mxu0 0.0
          %1758 = vmatprep.subr.mxu0 0.0
          %1759 = vmatpush1.msra.mxu0 0.0
          %1760 = vmatprep.subr.mxu0 0.0
          %1761 = vmatpush1.msra.mxu0 0.0
          %1762 = vmatprep.subr.mxu0 0.0
          %1763 = vmatpush1.msra.mxu0 0.0
          %1764 = vmatprep.subr.mxu0 0.0
          %1765 = vmatpush1.msra.mxu0 0.0
          %1766 = vmatprep.subr.mxu0 0.0
          %1767 = vmatpush1.msra.mxu0 0.0
          %1768 = vmatprep.subr.mxu0 0.0
          %1769 = vmatpush1.msra.mxu0 0.0
          %1770 = vmatprep.subr.mxu0 0.0
          %1771 = vmatpush1.msra.mxu0 0.0
          %1772 = vmatprep.subr.mxu0 0.0
          %1773 = vmatpush1.msra.mxu0 0.0
          %1774 = vmatprep.subr.mxu0 0.0
          %1775 = vmatpush1.msra.mxu0 0.0
          %1776 = vmatprep.subr.mxu0 0.0
          %1777 = vmatpush1.msra.mxu0 0.0
          %1778 = vmatprep.subr.mxu0 0.0
          %1779 = vmatpush1.msra.mxu0 0.0
          %1780 = vmatprep.subr.mxu0 0.0
          %1781 = vmatpush1.msra.mxu0 0.0
          %1782 = vmatprep.subr.mxu0 0.0
          %1783 = vmatpush1.msra.mxu0 0.0
          %1784 = vmatprep.subr.mxu0 0.0
          %1785 = vmatpush1.msra.mxu0 0.0
          %1786 = vmatprep.subr.mxu0 0.0
          %1787 = vmatpush1.msra.mxu0 0.0
          %1788 = vmatprep.subr.mxu0 0.0
          %1789 = vmatpush1.msra.mxu0 0.0
          %1790 = vmatprep.subr.mxu0 0.0
          %1791 = vmatpush1.msra.mxu0 0.0
          %1792 = vmatprep.subr.mxu0 0.0
          %1793 = vmatpush1.msra.mxu0 0.0
          %1794 = vmatprep.subr.mxu0 0.0
          %1795 = vmatpush1.msra.mxu0 0.0
          %1796 = vmatprep.subr.mxu0 0.0
          %1797 = vmatpush1.msra.mxu0 0.0
          %1798 = vmatprep.subr.mxu0 0.0
          %1799 = vmatpush1.msra.mxu0 0.0
          %1800 = vmatprep.subr.mxu0 0.0
          %1801 = vmatpush1.msra.mxu0 0.0
          %1802 = vmatprep.subr.mxu0 0.0
          %1803 = vmatpush1.msra.mxu0 0.0
          %1804 = vmatprep.subr.mxu0 0.0
          %1805 = vmatpush1.msra.mxu0 0.0
          %1806 = vmatprep.subr.mxu0 0.0
          %1807 = vmatpush1.msra.mxu0 0.0
          %1808 = vmatprep.mubr.f32.mxu0 0.0
          %1809 = vmatmul.mubr.f32.gmra.mrb[0].mxu0 %v1536
          %v1810 = vpop.f32.mrb[0].mxu0
          %v1811 = vadd.f32 %v1531, %v1810
          %v1812 = vpop.f32.mrb[0].mxu0
          %1813 = vmatprep.mubr.f32.mxu0 0.0
          %1814 = vmatmul.mubr.f32.gmra.mrb[0].mxu0 %v1539
          %v1815 = vpop.f32.mrb[0].mxu0
          %v1816 = vadd.f32 %v1531, %v1815
          %v1817 = vpop.f32.mrb[0].mxu0
          %1818 = vmatprep.mubr.f32.mxu0 0.0
          %1819 = vmatmul.mubr.f32.gmra.mrb[0].mxu0 %v1542
          %v1820 = vpop.f32.mrb[0].mxu0
          %v1821 = vadd.f32 %v1531, %v1820
          %v1822 = vpop.f32.mrb[0].mxu0
          %1823 = vmatprep.mubr.f32.mxu0 0.0
          %1824 = vmatmul.mubr.f32.gmra.mrb[0].mxu0 %v1545
          %v1825 = vpop.f32.mrb[0].mxu0
          %v1826 = vadd.f32 %v1531, %v1825
          %v1827 = vpop.f32.mrb[0].mxu0
          %1828 = vmatprep.mubr.f32.mxu0 0.0
          %1829 = vmatmul.mubr.f32.gmra.mrb[0].mxu0 %v1548
          %v1830 = vpop.f32.mrb[0].mxu0
          %v1831 = vadd.f32 %v1531, %v1830
          %v1832 = vpop.f32.mrb[0].mxu0
          %1833 = vmatprep.mubr.f32.mxu0 0.0
          %1834 = vmatmul.mubr.f32.gmra.mrb[0].mxu0 %v1551
          %v1835 = vpop.f32.mrb[0].mxu0
          %v1836 = vadd.f32 %v1531, %v1835
          %v1837 = vpop.f32.mrb[0].mxu0
          %1838 = vmatprep.mubr.f32.mxu0 0.0
          %1839 = vmatmul.mubr.f32.gmra.mrb[0].mxu0 %v1554
          %v1840 = vpop.f32.mrb[0].mxu0
          %v1841 = vadd.f32 %v1531, %v1840
          %v1842 = vpop.f32.mrb[0].mxu0
          %1843 = vmatprep.mubr.f32.mxu0 0.0
          %1844 = vmatmul.mubr.f32.gmra.mrb[0].mxu0 %v1557
          %v1845 = vpop.f32.mrb[0].mxu0
          %v1846 = vadd.f32 %v1531, %v1845
          %v1847 = vpop.f32.mrb[0].mxu0
          %1848 = vmatprep.mubr.f32.mxu0 0.0
          %1849 = vmatmul.mubr.f32.gmra.mrb[0].mxu0 %v1560
          %v1850 = vpop.f32.mrb[0].mxu0
          %v1851 = vadd.f32 %v1531, %v1850
          %v1852 = vpop.f32.mrb[0].mxu0
          %1853 = vmatprep.mubr.f32.mxu0 0.0
          %1854 = vmatmul.mubr.f32.gmra.mrb[0].mxu0 %v1563
          %v1855 = vpop.f32.mrb[0].mxu0
          %v1856 = vadd.f32 %v1531, %v1855
          %v1857 = vpop.f32.mrb[0].mxu0
          %1858 = vmatprep.mubr.f32.mxu0 0.0
          %1859 = vmatmul.mubr.f32.gmra.mrb[0].mxu0 %v1566
          %v1860 = vpop.f32.mrb[0].mxu0
          %v1861 = vadd.f32 %v1531, %v1860
          %v1862 = vpop.f32.mrb[0].mxu0
          %1863 = vmatprep.mubr.f32.mxu0 0.0
          %1864 = vmatmul.mubr.f32.gmra.mrb[0].mxu0 %v1569
          %v1865 = vpop.f32.mrb[0].mxu0
          %v1866 = vadd.f32 %v1531, %v1865
          %v1867 = vpop.f32.mrb[0].mxu0
          %1868 = vmatprep.mubr.f32.mxu0 0.0
          %1869 = vmatmul.mubr.f32.gmra.mrb[0].mxu0 %v1572
          %v1870 = vpop.f32.mrb[0].mxu0
          %v1871 = vadd.f32 %v1531, %v1870
          %v1872 = vpop.f32.mrb[0].mxu0
          %1873 = vmatprep.mubr.f32.mxu0 0.0
          %1874 = vmatmul.mubr.f32.gmra.mrb[0].mxu0 %v1575
          %v1875 = vpop.f32.mrb[0].mxu0
          %v1876 = vadd.f32 %v1531, %v1875
          %v1877 = vpop.f32.mrb[0].mxu0
          %1878 = vmatprep.mubr.f32.mxu0 0.0
          %1879 = vmatmul.mubr.f32.gmra.mrb[0].mxu0 %v1578
          %v1880 = vpop.f32.mrb[0].mxu0
          %v1881 = vadd.f32 %v1531, %v1880
          %v1882 = vpop.f32.mrb[0].mxu0
          %1883 = vmatprep.mubr.f32.mxu0 0.0
          %1884 = vmatmul.mubr.f32.gmra.mrb[0].mxu0 %v1581
          %v1885 = vpop.f32.mrb[0].mxu0
          %v1886 = vadd.f32 %v1531, %v1885
          %v1887 = vpop.f32.mrb[0].mxu0
          %1888 = vdwg.mxu0
          %v1889 = vmax.f32 %v1811, 0.0
          %v1890 = vmax.f32 %v1816, 0.0
          %v1891 = vmax.f32 %v1821, 0.0
          %v1892 = vmax.f32 %v1826, 0.0
          %v1893 = vmax.f32 %v1831, 0.0
          %v1894 = vmax.f32 %v1836, 0.0
          %v1895 = vmax.f32 %v1841, 0.0
          %v1896 = vmax.f32 %v1846, 0.0
          %v1897 = vmax.f32 %v1851, 0.0
          %v1898 = vmax.f32 %v1856, 0.0
          %v1899 = vmax.f32 %v1861, 0.0
          %v1900 = vmax.f32 %v1866, 0.0
          %v1901 = vmax.f32 %v1871, 0.0
          %v1902 = vmax.f32 %v1876, 0.0
          %v1903 = vmax.f32 %v1881, 0.0
          %v1904 = vmax.f32 %v1886, 0.0
          %v1905 = vld [vmem:[#allocation2] sm:$0xff]
          %v1906 = vld [vmem:[#allocation2 + $0x8] sm:$0xff]
          %v1907 = vld [vmem:[#allocation2 + $0x10] sm:$0xff]
          %v1908 = vld [vmem:[#allocation2 + $0x18] sm:$0xff]
          %v1909 = vld [vmem:[#allocation2 + $0x20] sm:$0xff]
          %v1910 = vld [vmem:[#allocation2 + $0x28] sm:$0xff]
          %v1911 = vld [vmem:[#allocation2 + $0x30] sm:$0xff]
          %v1912 = vld [vmem:[#allocation2 + $0x38] sm:$0xff]
          %v1913 = vld [vmem:[#allocation2 + $0x40] sm:$0xff]
          %v1914 = vld [vmem:[#allocation2 + $0x48] sm:$0xff]
          %v1915 = vld [vmem:[#allocation2 + $0x50] sm:$0xff]
          %v1916 = vld [vmem:[#allocation2 + $0x58] sm:$0xff]
          %v1917 = vld [vmem:[#allocation2 + $0x60] sm:$0xff]
          %v1918 = vld [vmem:[#allocation2 + $0x68] sm:$0xff]
          %v1919 = vld [vmem:[#allocation2 + $0x70] sm:$0xff]
          %v1920 = vld [vmem:[#allocation2 + $0x78] sm:$0xff]
          %v1921 = vmul.f32 %v1905, %v1650
          %v1922 = vmul.f32 %v1906, %v1656
          %v1923 = vmul.f32 %v1907, %v1662
          %v1924 = vmul.f32 %v1908, %v1668
          %v1925 = vmul.f32 %v1909, %v1674
          %v1926 = vmul.f32 %v1910, %v1680
          %v1927 = vmul.f32 %v1911, %v1686
          %v1928 = vmul.f32 %v1912, %v1692
          %v1929 = vmul.f32 %v1913, %v1698
          %v1930 = vmul.f32 %v1914, %v1704
          %v1931 = vmul.f32 %v1915, %v1710
          %v1932 = vmul.f32 %v1916, %v1716
          %v1933 = vmul.f32 %v1917, %v1722
          %v1934 = vmul.f32 %v1918, %v1728
          %v1935 = vmul.f32 %v1919, %v1734
          %v1936 = vmul.f32 %v1920, %v1740
          %v1937 = vld [vmem:[%s6] sm:$0xff]
          %v1938 = vld [vmem:[%s6 + $0x8] sm:$0xff]
          %v1939 = vld [vmem:[%s6 + $0x10] sm:$0xff]
          %v1940 = vld [vmem:[%s6 + $0x18] sm:$0xff]
          %v1941 = vld [vmem:[%s6 + $0x20] sm:$0xff]
          %v1942 = vld [vmem:[%s6 + $0x28] sm:$0xff]
          %v1943 = vld [vmem:[%s6 + $0x30] sm:$0xff]
          %v1944 = vld [vmem:[%s6 + $0x38] sm:$0xff]
          %v1945 = vld [vmem:[%s6 + $0x40] sm:$0xff]
          %v1946 = vld [vmem:[%s6 + $0x48] sm:$0xff]
          %v1947 = vld [vmem:[%s6 + $0x50] sm:$0xff]
          %v1948 = vld [vmem:[%s6 + $0x58] sm:$0xff]
          %v1949 = vld [vmem:[%s6 + $0x60] sm:$0xff]
          %v1950 = vld [vmem:[%s6 + $0x68] sm:$0xff]
          %v1951 = vld [vmem:[%s6 + $0x70] sm:$0xff]
          %v1952 = vld [vmem:[%s6 + $0x78] sm:$0xff]
          %v1953 = vld [vmem:[#allocation7] sm:$0x1]
          %v1955 = vlaneseq
          %v1956 = vshrl.u32 %v1955, 7
          %v1957 = vsub.s32 0, %v1956
          %v1958 = vrot.slane %v1953, %v1957
          %1960 = vmatprep.subr.mxu0 0.0
          %1961 = vmatpush1.msra.mxu0 %v1937
          %1962 = vmatprep.subr.mxu0 0.0
          %1963 = vmatpush1.msra.mxu0 %v1938
          %1964 = vmatprep.subr.mxu0 0.0
          %1965 = vmatpush1.msra.mxu0 %v1939
          %1966 = vmatprep.subr.mxu0 0.0
          %1967 = vmatpush1.msra.mxu0 %v1940
          %1968 = vmatprep.subr.mxu0 0.0
          %1969 = vmatpush1.msra.mxu0 %v1941
          %1970 = vmatprep.subr.mxu0 0.0
          %1971 = vmatpush1.msra.mxu0 %v1942
          %1972 = vmatprep.subr.mxu0 0.0
          %1973 = vmatpush1.msra.mxu0 %v1943
          %1974 = vmatprep.subr.mxu0 0.0
          %1975 = vmatpush1.msra.mxu0 %v1944
          %1976 = vmatprep.subr.mxu0 0.0
          %1977 = vmatpush1.msra.mxu0 %v1945
          %1978 = vmatprep.subr.mxu0 0.0
          %1979 = vmatpush1.msra.mxu0 %v1946
          %1980 = vmatprep.subr.mxu0 0.0
          %1981 = vmatpush1.msra.mxu0 %v1947
          %1982 = vmatprep.subr.mxu0 0.0
          %1983 = vmatpush1.msra.mxu0 %v1948
          %1984 = vmatprep.subr.mxu0 0.0
          %1985 = vmatpush1.msra.mxu0 %v1949
          %1986 = vmatprep.subr.mxu0 0.0
          %1987 = vmatpush1.msra.mxu0 %v1950
          %1988 = vmatprep.subr.mxu0 0.0
          %1989 = vmatpush1.msra.mxu0 %v1951
          %1990 = vmatprep.subr.mxu0 0.0
          %1991 = vmatpush1.msra.mxu0 %v1952
          %1992 = vmatprep.subr.mxu0 0.0
          %1993 = vmatpush1.msra.mxu0 0.0
          %1994 = vmatprep.subr.mxu0 0.0
          %1995 = vmatpush1.msra.mxu0 0.0
          %1996 = vmatprep.subr.mxu0 0.0
          %1997 = vmatpush1.msra.mxu0 0.0
          %1998 = vmatprep.subr.mxu0 0.0
          %1999 = vmatpush1.msra.mxu0 0.0
          %2000 = vmatprep.subr.mxu0 0.0
          %2001 = vmatpush1.msra.mxu0 0.0
          %2002 = vmatprep.subr.mxu0 0.0
          %2003 = vmatpush1.msra.mxu0 0.0
          %2004 = vmatprep.subr.mxu0 0.0
          %2005 = vmatpush1.msra.mxu0 0.0
          %2006 = vmatprep.subr.mxu0 0.0
          %2007 = vmatpush1.msra.mxu0 0.0
          %2008 = vmatprep.subr.mxu0 0.0
          %2009 = vmatpush1.msra.mxu0 0.0
          %2010 = vmatprep.subr.mxu0 0.0
          %2011 = vmatpush1.msra.mxu0 0.0
          %2012 = vmatprep.subr.mxu0 0.0
          %2013 = vmatpush1.msra.mxu0 0.0
          %2014 = vmatprep.subr.mxu0 0.0
          %2015 = vmatpush1.msra.mxu0 0.0
          %2016 = vmatprep.subr.mxu0 0.0
          %2017 = vmatpush1.msra.mxu0 0.0
          %2018 = vmatprep.subr.mxu0 0.0
          %2019 = vmatpush1.msra.mxu0 0.0
          %2020 = vmatprep.subr.mxu0 0.0
          %2021 = vmatpush1.msra.mxu0 0.0
          %2022 = vmatprep.subr.mxu0 0.0
          %2023 = vmatpush1.msra.mxu0 0.0
          %2024 = vmatprep.mubr.f32.mxu0 0.0
          %2025 = vmatmul.mubr.f32.gmra.mrb[0].mxu0 %v1921
          %v2026 = vpop.f32.mrb[0].mxu0
          %v2027 = vadd.f32 %v1958, %v2026
          %v2028 = vpop.f32.mrb[0].mxu0
          %2029 = vmatprep.mubr.f32.mxu0 0.0
          %2030 = vmatmul.mubr.f32.gmra.mrb[0].mxu0 %v1922
          %v2031 = vpop.f32.mrb[0].mxu0
          %v2032 = vadd.f32 %v1958, %v2031
          %v2033 = vpop.f32.mrb[0].mxu0
          %2034 = vmatprep.mubr.f32.mxu0 0.0
          %2035 = vmatmul.mubr.f32.gmra.mrb[0].mxu0 %v1923
          %v2036 = vpop.f32.mrb[0].mxu0
          %v2037 = vadd.f32 %v1958, %v2036
          %v2038 = vpop.f32.mrb[0].mxu0
          %2039 = vmatprep.mubr.f32.mxu0 0.0
          %2040 = vmatmul.mubr.f32.gmra.mrb[0].mxu0 %v1924
          %v2041 = vpop.f32.mrb[0].mxu0
          %v2042 = vadd.f32 %v1958, %v2041
          %v2043 = vpop.f32.mrb[0].mxu0
          %2044 = vmatprep.mubr.f32.mxu0 0.0
          %2045 = vmatmul.mubr.f32.gmra.mrb[0].mxu0 %v1925
          %v2046 = vpop.f32.mrb[0].mxu0
          %v2047 = vadd.f32 %v1958, %v2046
          %v2048 = vpop.f32.mrb[0].mxu0
          %2049 = vmatprep.mubr.f32.mxu0 0.0
          %2050 = vmatmul.mubr.f32.gmra.mrb[0].mxu0 %v1926
          %v2051 = vpop.f32.mrb[0].mxu0
          %v2052 = vadd.f32 %v1958, %v2051
          %v2053 = vpop.f32.mrb[0].mxu0
          %2054 = vmatprep.mubr.f32.mxu0 0.0
          %2055 = vmatmul.mubr.f32.gmra.mrb[0].mxu0 %v1927
          %v2056 = vpop.f32.mrb[0].mxu0
          %v2057 = vadd.f32 %v1958, %v2056
          %v2058 = vpop.f32.mrb[0].mxu0
          %2059 = vmatprep.mubr.f32.mxu0 0.0
          %2060 = vmatmul.mubr.f32.gmra.mrb[0].mxu0 %v1928
          %v2061 = vpop.f32.mrb[0].mxu0
          %v2062 = vadd.f32 %v1958, %v2061
          %v2063 = vpop.f32.mrb[0].mxu0
          %2064 = vmatprep.mubr.f32.mxu0 0.0
          %2065 = vmatmul.mubr.f32.gmra.mrb[0].mxu0 %v1929
          %v2066 = vpop.f32.mrb[0].mxu0
          %v2067 = vadd.f32 %v1958, %v2066
          %v2068 = vpop.f32.mrb[0].mxu0
          %2069 = vmatprep.mubr.f32.mxu0 0.0
          %2070 = vmatmul.mubr.f32.gmra.mrb[0].mxu0 %v1930
          %v2071 = vpop.f32.mrb[0].mxu0
          %v2072 = vadd.f32 %v1958, %v2071
          %v2073 = vpop.f32.mrb[0].mxu0
          %2074 = vmatprep.mubr.f32.mxu0 0.0
          %2075 = vmatmul.mubr.f32.gmra.mrb[0].mxu0 %v1931
          %v2076 = vpop.f32.mrb[0].mxu0
          %v2077 = vadd.f32 %v1958, %v2076
          %v2078 = vpop.f32.mrb[0].mxu0
          %2079 = vmatprep.mubr.f32.mxu0 0.0
          %2080 = vmatmul.mubr.f32.gmra.mrb[0].mxu0 %v1932
          %v2081 = vpop.f32.mrb[0].mxu0
          %v2082 = vadd.f32 %v1958, %v2081
          %v2083 = vpop.f32.mrb[0].mxu0
          %2084 = vmatprep.mubr.f32.mxu0 0.0
          %2085 = vmatmul.mubr.f32.gmra.mrb[0].mxu0 %v1933
          %v2086 = vpop.f32.mrb[0].mxu0
          %v2087 = vadd.f32 %v1958, %v2086
          %v2088 = vpop.f32.mrb[0].mxu0
          %2089 = vmatprep.mubr.f32.mxu0 0.0
          %2090 = vmatmul.mubr.f32.gmra.mrb[0].mxu0 %v1934
          %v2091 = vpop.f32.mrb[0].mxu0
          %v2092 = vadd.f32 %v1958, %v2091
          %v2093 = vpop.f32.mrb[0].mxu0
          %2094 = vmatprep.mubr.f32.mxu0 0.0
          %2095 = vmatmul.mubr.f32.gmra.mrb[0].mxu0 %v1935
          %v2096 = vpop.f32.mrb[0].mxu0
          %v2097 = vadd.f32 %v1958, %v2096
          %v2098 = vpop.f32.mrb[0].mxu0
          %2099 = vmatprep.mubr.f32.mxu0 0.0
          %2100 = vmatmul.mubr.f32.gmra.mrb[0].mxu0 %v1936
          %v2101 = vpop.f32.mrb[0].mxu0
          %v2102 = vadd.f32 %v1958, %v2101
          %v2103 = vpop.f32.mrb[0].mxu0
          %2104 = vdwg.mxu0
          %v2105 = vmul.f32 %v2027, %v1652
          %v2106 = vmul.f32 %v2032, %v1658
          %v2107 = vmul.f32 %v2037, %v1664
          %v2108 = vmul.f32 %v2042, %v1670
          %v2109 = vmul.f32 %v2047, %v1676
          %v2110 = vmul.f32 %v2052, %v1682
          %v2111 = vmul.f32 %v2057, %v1688
          %v2112 = vmul.f32 %v2062, %v1694
          %v2113 = vmul.f32 %v2067, %v1700
          %v2114 = vmul.f32 %v2072, %v1706
          %v2115 = vmul.f32 %v2077, %v1712
          %v2116 = vmul.f32 %v2082, %v1718
          %v2117 = vmul.f32 %v2087, %v1724
          %v2118 = vmul.f32 %v2092, %v1730
          %v2119 = vmul.f32 %v2097, %v1736
          %v2120 = vmul.f32 %v2102, %v1742
          %v2121 = vld [vmem:[%s8] sm:$0xff]
          %v2122 = vld [vmem:[%s8 + $0x8] sm:$0xff]
          %v2123 = vld [vmem:[%s8 + $0x10] sm:$0xff]
          %v2124 = vld [vmem:[%s8 + $0x18] sm:$0xff]
          %v2125 = vld [vmem:[%s8 + $0x20] sm:$0xff]
          %v2126 = vld [vmem:[%s8 + $0x28] sm:$0xff]
          %v2127 = vld [vmem:[%s8 + $0x30] sm:$0xff]
          %v2128 = vld [vmem:[%s8 + $0x38] sm:$0xff]
          %v2129 = vld [vmem:[%s8 + $0x40] sm:$0xff]
          %v2130 = vld [vmem:[%s8 + $0x48] sm:$0xff]
          %v2131 = vld [vmem:[%s8 + $0x50] sm:$0xff]
          %v2132 = vld [vmem:[%s8 + $0x58] sm:$0xff]
          %v2133 = vld [vmem:[%s8 + $0x60] sm:$0xff]
          %v2134 = vld [vmem:[%s8 + $0x68] sm:$0xff]
          %v2135 = vld [vmem:[%s8 + $0x70] sm:$0xff]
          %v2136 = vld [vmem:[%s8 + $0x78] sm:$0xff]
          %v2137 = vld [vmem:[#allocation9] sm:$0x1]
          %v2139 = vlaneseq
          %v2140 = vshrl.u32 %v2139, 7
          %v2141 = vsub.s32 0, %v2140
          %v2142 = vrot.slane %v2137, %v2141
          %2144 = vmatprep.subr.mxu0 0.0
          %2145 = vmatpush1.msra.mxu0 %v2121
          %2146 = vmatprep.subr.mxu0 0.0
          %2147 = vmatpush1.msra.mxu0 %v2122
          %2148 = vmatprep.subr.mxu0 0.0
          %2149 = vmatpush1.msra.mxu0 %v2123
          %2150 = vmatprep.subr.mxu0 0.0
          %2151 = vmatpush1.msra.mxu0 %v2124
          %2152 = vmatprep.subr.mxu0 0.0
          %2153 = vmatpush1.msra.mxu0 %v2125
          %2154 = vmatprep.subr.mxu0 0.0
          %2155 = vmatpush1.msra.mxu0 %v2126
          %2156 = vmatprep.subr.mxu0 0.0
          %2157 = vmatpush1.msra.mxu0 %v2127
          %2158 = vmatprep.subr.mxu0 0.0
          %2159 = vmatpush1.msra.mxu0 %v2128
          %2160 = vmatprep.subr.mxu0 0.0
          %2161 = vmatpush1.msra.mxu0 %v2129
          %2162 = vmatprep.subr.mxu0 0.0
          %2163 = vmatpush1.msra.mxu0 %v2130
          %2164 = vmatprep.subr.mxu0 0.0
          %2165 = vmatpush1.msra.mxu0 %v2131
          %2166 = vmatprep.subr.mxu0 0.0
          %2167 = vmatpush1.msra.mxu0 %v2132
          %2168 = vmatprep.subr.mxu0 0.0
          %2169 = vmatpush1.msra.mxu0 %v2133
          %2170 = vmatprep.subr.mxu0 0.0
          %2171 = vmatpush1.msra.mxu0 %v2134
          %2172 = vmatprep.subr.mxu0 0.0
          %2173 = vmatpush1.msra.mxu0 %v2135
          %2174 = vmatprep.subr.mxu0 0.0
          %2175 = vmatpush1.msra.mxu0 %v2136
          %2176 = vmatprep.subr.mxu0 0.0
          %2177 = vmatpush1.msra.mxu0 0.0
          %2178 = vmatprep.subr.mxu0 0.0
          %2179 = vmatpush1.msra.mxu0 0.0
          %2180 = vmatprep.subr.mxu0 0.0
          %2181 = vmatpush1.msra.mxu0 0.0
          %2182 = vmatprep.subr.mxu0 0.0
          %2183 = vmatpush1.msra.mxu0 0.0
          %2184 = vmatprep.subr.mxu0 0.0
          %2185 = vmatpush1.msra.mxu0 0.0
          %2186 = vmatprep.subr.mxu0 0.0
          %2187 = vmatpush1.msra.mxu0 0.0
          %2188 = vmatprep.subr.mxu0 0.0
          %2189 = vmatpush1.msra.mxu0 0.0
          %2190 = vmatprep.subr.mxu0 0.0
          %2191 = vmatpush1.msra.mxu0 0.0
          %2192 = vmatprep.subr.mxu0 0.0
          %2193 = vmatpush1.msra.mxu0 0.0
          %2194 = vmatprep.subr.mxu0 0.0
          %2195 = vmatpush1.msra.mxu0 0.0
          %2196 = vmatprep.subr.mxu0 0.0
          %2197 = vmatpush1.msra.mxu0 0.0
          %2198 = vmatprep.subr.mxu0 0.0
          %2199 = vmatpush1.msra.mxu0 0.0
          %2200 = vmatprep.subr.mxu0 0.0
          %2201 = vmatpush1.msra.mxu0 0.0
          %2202 = vmatprep.subr.mxu0 0.0
          %2203 = vmatpush1.msra.mxu0 0.0
          %2204 = vmatprep.subr.mxu0 0.0
          %2205 = vmatpush1.msra.mxu0 0.0
          %2206 = vmatprep.subr.mxu0 0.0
          %2207 = vmatpush1.msra.mxu0 0.0
          %2208 = vmatprep.mubr.f32.mxu0 0.0
          %2209 = vmatmul.mubr.f32.gmra.mrb[0].mxu0 %v2105
          %v2210 = vpop.f32.mrb[0].mxu0
          %v2211 = vadd.f32 %v2142, %v2210
          %v2212 = vpop.f32.mrb[0].mxu0
          %2213 = vmatprep.mubr.f32.mxu0 0.0
          %2214 = vmatmul.mubr.f32.gmra.mrb[0].mxu0 %v2106
          %v2215 = vpop.f32.mrb[0].mxu0
          %v2216 = vadd.f32 %v2142, %v2215
          %v2217 = vpop.f32.mrb[0].mxu0
          %2218 = vmatprep.mubr.f32.mxu0 0.0
          %2219 = vmatmul.mubr.f32.gmra.mrb[0].mxu0 %v2107
          %v2220 = vpop.f32.mrb[0].mxu0
          %v2221 = vadd.f32 %v2142, %v2220
          %v2222 = vpop.f32.mrb[0].mxu0
          %2223 = vmatprep.mubr.f32.mxu0 0.0
          %2224 = vmatmul.mubr.f32.gmra.mrb[0].mxu0 %v2108
          %v2225 = vpop.f32.mrb[0].mxu0
          %v2226 = vadd.f32 %v2142, %v2225
          %v2227 = vpop.f32.mrb[0].mxu0
          %2228 = vmatprep.mubr.f32.mxu0 0.0
          %2229 = vmatmul.mubr.f32.gmra.mrb[0].mxu0 %v2109
          %v2230 = vpop.f32.mrb[0].mxu0
          %v2231 = vadd.f32 %v2142, %v2230
          %v2232 = vpop.f32.mrb[0].mxu0
          %2233 = vmatprep.mubr.f32.mxu0 0.0
          %2234 = vmatmul.mubr.f32.gmra.mrb[0].mxu0 %v2110
          %v2235 = vpop.f32.mrb[0].mxu0
          %v2236 = vadd.f32 %v2142, %v2235
          %v2237 = vpop.f32.mrb[0].mxu0
          %2238 = vmatprep.mubr.f32.mxu0 0.0
          %2239 = vmatmul.mubr.f32.gmra.mrb[0].mxu0 %v2111
          %v2240 = vpop.f32.mrb[0].mxu0
          %v2241 = vadd.f32 %v2142, %v2240
          %v2242 = vpop.f32.mrb[0].mxu0
          %2243 = vmatprep.mubr.f32.mxu0 0.0
          %2244 = vmatmul.mubr.f32.gmra.mrb[0].mxu0 %v2112
          %v2245 = vpop.f32.mrb[0].mxu0
          %v2246 = vadd.f32 %v2142, %v2245
          %v2247 = vpop.f32.mrb[0].mxu0
          %2248 = vmatprep.mubr.f32.mxu0 0.0
          %2249 = vmatmul.mubr.f32.gmra.mrb[0].mxu0 %v2113
          %v2250 = vpop.f32.mrb[0].mxu0
          %v2251 = vadd.f32 %v2142, %v2250
          %v2252 = vpop.f32.mrb[0].mxu0
          %2253 = vmatprep.mubr.f32.mxu0 0.0
          %2254 = vmatmul.mubr.f32.gmra.mrb[0].mxu0 %v2114
          %v2255 = vpop.f32.mrb[0].mxu0
          %v2256 = vadd.f32 %v2142, %v2255
          %v2257 = vpop.f32.mrb[0].mxu0
          %2258 = vmatprep.mubr.f32.mxu0 0.0
          %2259 = vmatmul.mubr.f32.gmra.mrb[0].mxu0 %v2115
          %v2260 = vpop.f32.mrb[0].mxu0
          %v2261 = vadd.f32 %v2142, %v2260
          %v2262 = vpop.f32.mrb[0].mxu0
          %2263 = vmatprep.mubr.f32.mxu0 0.0
          %2264 = vmatmul.mubr.f32.gmra.mrb[0].mxu0 %v2116
          %v2265 = vpop.f32.mrb[0].mxu0
          %v2266 = vadd.f32 %v2142, %v2265
          %v2267 = vpop.f32.mrb[0].mxu0
          %2268 = vmatprep.mubr.f32.mxu0 0.0
          %2269 = vmatmul.mubr.f32.gmra.mrb[0].mxu0 %v2117
          %v2270 = vpop.f32.mrb[0].mxu0
          %v2271 = vadd.f32 %v2142, %v2270
          %v2272 = vpop.f32.mrb[0].mxu0
          %2273 = vmatprep.mubr.f32.mxu0 0.0
          %2274 = vmatmul.mubr.f32.gmra.mrb[0].mxu0 %v2118
          %v2275 = vpop.f32.mrb[0].mxu0
          %v2276 = vadd.f32 %v2142, %v2275
          %v2277 = vpop.f32.mrb[0].mxu0
          %2278 = vmatprep.mubr.f32.mxu0 0.0
          %2279 = vmatmul.mubr.f32.gmra.mrb[0].mxu0 %v2119
          %v2280 = vpop.f32.mrb[0].mxu0
          %v2281 = vadd.f32 %v2142, %v2280
          %v2282 = vpop.f32.mrb[0].mxu0
          %2283 = vmatprep.mubr.f32.mxu0 0.0
          %2284 = vmatmul.mubr.f32.gmra.mrb[0].mxu0 %v2120
          %v2285 = vpop.f32.mrb[0].mxu0
          %v2286 = vadd.f32 %v2142, %v2285
          %v2287 = vpop.f32.mrb[0].mxu0
          %2288 = vdwg.mxu0
          %v2289 = vld [vmem:[#allocation10] sm:$0x1]
          %v2291 = vlaneseq
          %v2292 = vshrl.u32 %v2291, 7
          %v2293 = vsub.s32 0, %v2292
          %v2294 = vrot.slane %v2289, %v2293
          %v2296 = vmul.f32 %v1889, %v2294
          %v2297 = vmul.f32 %v1890, %v2294
          %v2298 = vmul.f32 %v1891, %v2294
          %v2299 = vmul.f32 %v1892, %v2294
          %v2300 = vmul.f32 %v1893, %v2294
          %v2301 = vmul.f32 %v1894, %v2294
          %v2302 = vmul.f32 %v1895, %v2294
          %v2303 = vmul.f32 %v1896, %v2294
          %v2304 = vmul.f32 %v1897, %v2294
          %v2305 = vmul.f32 %v1898, %v2294
          %v2306 = vmul.f32 %v1899, %v2294
          %v2307 = vmul.f32 %v1900, %v2294
          %v2308 = vmul.f32 %v1901, %v2294
          %v2309 = vmul.f32 %v1902, %v2294
          %v2310 = vmul.f32 %v1903, %v2294
          %v2311 = vmul.f32 %v1904, %v2294
          %v2312 = vsel %vm1218, %v2296, 0.0
          %2313 = vadd.xlane.f32.xlu0 %v2312
          %v2314 = vpop.xlane.xlu0 %2313
          %v2315 = vsel %vm1218, %v2297, 0.0
          %2316 = vadd.xlane.f32.xlu0 %v2315
          %v2317 = vpop.xlane.xlu0 %2316
          %v2318 = vsel %vm1218, %v2298, 0.0
          %2319 = vadd.xlane.f32.xlu0 %v2318
          %v2320 = vpop.xlane.xlu0 %2319
          %v2321 = vsel %vm1218, %v2299, 0.0
          %2322 = vadd.xlane.f32.xlu0 %v2321
          %v2323 = vpop.xlane.xlu0 %2322
          %v2324 = vsel %vm1218, %v2300, 0.0
          %2325 = vadd.xlane.f32.xlu0 %v2324
          %v2326 = vpop.xlane.xlu0 %2325
          %v2327 = vsel %vm1218, %v2301, 0.0
          %2328 = vadd.xlane.f32.xlu0 %v2327
          %v2329 = vpop.xlane.xlu0 %2328
          %v2330 = vsel %vm1218, %v2302, 0.0
          %2331 = vadd.xlane.f32.xlu0 %v2330
          %v2332 = vpop.xlane.xlu0 %2331
          %v2333 = vsel %vm1218, %v2303, 0.0
          %2334 = vadd.xlane.f32.xlu0 %v2333
          %v2335 = vpop.xlane.xlu0 %2334
          %v2336 = vsel %vm1218, %v2304, 0.0
          %2337 = vadd.xlane.f32.xlu0 %v2336
          %v2338 = vpop.xlane.xlu0 %2337
          %v2339 = vsel %vm1218, %v2305, 0.0
          %2340 = vadd.xlane.f32.xlu0 %v2339
          %v2341 = vpop.xlane.xlu0 %2340
          %v2342 = vsel %vm1218, %v2306, 0.0
          %2343 = vadd.xlane.f32.xlu0 %v2342
          %v2344 = vpop.xlane.xlu0 %2343
          %v2345 = vsel %vm1218, %v2307, 0.0
          %2346 = vadd.xlane.f32.xlu0 %v2345
          %v2347 = vpop.xlane.xlu0 %2346
          %v2348 = vsel %vm1218, %v2308, 0.0
          %2349 = vadd.xlane.f32.xlu0 %v2348
          %v2350 = vpop.xlane.xlu0 %2349
          %v2351 = vsel %vm1218, %v2309, 0.0
          %2352 = vadd.xlane.f32.xlu0 %v2351
          %v2353 = vpop.xlane.xlu0 %2352
          %v2354 = vsel %vm1218, %v2310, 0.0
          %2355 = vadd.xlane.f32.xlu0 %v2354
          %v2356 = vpop.xlane.xlu0 %2355
          %v2357 = vsel %vm1218, %v2311, 0.0
          %2358 = vadd.xlane.f32.xlu0 %v2357
          %v2359 = vpop.xlane.xlu0 %2358
          %v2360 = vld [vmem:[#allocation3] sm:$0x1]
          %v2362 = vlaneseq
          %v2363 = vshrl.u32 %v2362, 7
          %v2364 = vsub.s32 0, %v2363
          %v2365 = vrot.slane %v2360, %v2364
          %v2367 = vadd.f32 %v2314, %v2365
          %v2368 = vadd.f32 %v2317, %v2365
          %v2369 = vadd.f32 %v2320, %v2365
          %v2370 = vadd.f32 %v2323, %v2365
          %v2371 = vadd.f32 %v2326, %v2365
          %v2372 = vadd.f32 %v2329, %v2365
          %v2373 = vadd.f32 %v2332, %v2365
          %v2374 = vadd.f32 %v2335, %v2365
          %v2375 = vadd.f32 %v2338, %v2365
          %v2376 = vadd.f32 %v2341, %v2365
          %v2377 = vadd.f32 %v2344, %v2365
          %v2378 = vadd.f32 %v2347, %v2365
          %v2379 = vadd.f32 %v2350, %v2365
          %v2380 = vadd.f32 %v2353, %v2365
          %v2381 = vadd.f32 %v2356, %v2365
          %v2382 = vadd.f32 %v2359, %v2365
          %v2383 = vxor.u32 %v2367, 2147483648
          %v2384 = vxor.u32 %v2368, 2147483648
          %v2385 = vxor.u32 %v2369, 2147483648
          %v2386 = vxor.u32 %v2370, 2147483648
          %v2387 = vxor.u32 %v2371, 2147483648
          %v2388 = vxor.u32 %v2372, 2147483648
          %v2389 = vxor.u32 %v2373, 2147483648
          %v2390 = vxor.u32 %v2374, 2147483648
          %v2391 = vxor.u32 %v2375, 2147483648
          %v2392 = vxor.u32 %v2376, 2147483648
          %v2393 = vxor.u32 %v2377, 2147483648
          %v2394 = vxor.u32 %v2378, 2147483648
          %v2395 = vxor.u32 %v2379, 2147483648
          %v2396 = vxor.u32 %v2380, 2147483648
          %v2397 = vxor.u32 %v2381, 2147483648
          %v2398 = vxor.u32 %v2382, 2147483648
          %v2399 = vmul.f32 %v2383, 1.442695
          %v2400 = vpow.pop %v2399
          %v2401 = vmul.f32 %v2384, 1.442695
          %v2402 = vpow.pop %v2401
          %v2403 = vmul.f32 %v2385, 1.442695
          %v2404 = vpow.pop %v2403
          %v2405 = vmul.f32 %v2386, 1.442695
          %v2406 = vpow.pop %v2405
          %v2407 = vmul.f32 %v2387, 1.442695
          %v2408 = vpow.pop %v2407
          %v2409 = vmul.f32 %v2388, 1.442695
          %v2410 = vpow.pop %v2409
          %v2411 = vmul.f32 %v2389, 1.442695
          %v2412 = vpow.pop %v2411
          %v2413 = vmul.f32 %v2390, 1.442695
          %v2414 = vpow.pop %v2413
          %v2415 = vmul.f32 %v2391, 1.442695
          %v2416 = vpow.pop %v2415
          %v2417 = vmul.f32 %v2392, 1.442695
          %v2418 = vpow.pop %v2417
          %v2419 = vmul.f32 %v2393, 1.442695
          %v2420 = vpow.pop %v2419
          %v2421 = vmul.f32 %v2394, 1.442695
          %v2422 = vpow.pop %v2421
          %v2423 = vmul.f32 %v2395, 1.442695
          %v2424 = vpow.pop %v2423
          %v2425 = vmul.f32 %v2396, 1.442695
          %v2426 = vpow.pop %v2425
          %v2427 = vmul.f32 %v2397, 1.442695
          %v2428 = vpow.pop %v2427
          %v2429 = vmul.f32 %v2398, 1.442695
          %v2430 = vpow.pop %v2429
          %v2431 = vadd.f32 %v2400, 1.0
          %v2432 = vadd.f32 %v2402, 1.0
          %v2433 = vadd.f32 %v2404, 1.0
          %v2434 = vadd.f32 %v2406, 1.0
          %v2435 = vadd.f32 %v2408, 1.0
          %v2436 = vadd.f32 %v2410, 1.0
          %v2437 = vadd.f32 %v2412, 1.0
          %v2438 = vadd.f32 %v2414, 1.0
          %v2439 = vadd.f32 %v2416, 1.0
          %v2440 = vadd.f32 %v2418, 1.0
          %v2441 = vadd.f32 %v2420, 1.0
          %v2442 = vadd.f32 %v2422, 1.0
          %v2443 = vadd.f32 %v2424, 1.0
          %v2444 = vadd.f32 %v2426, 1.0
          %v2445 = vadd.f32 %v2428, 1.0
          %v2446 = vadd.f32 %v2430, 1.0
          %v2447 = vrcp.pop %v2431
          %v2448 = vmul.f32 1.0, %v2447
          %v2449 = vrcp.pop %v2432
          %v2450 = vmul.f32 1.0, %v2449
          %v2451 = vrcp.pop %v2433
          %v2452 = vmul.f32 1.0, %v2451
          %v2453 = vrcp.pop %v2434
          %v2454 = vmul.f32 1.0, %v2453
          %v2455 = vrcp.pop %v2435
          %v2456 = vmul.f32 1.0, %v2455
          %v2457 = vrcp.pop %v2436
          %v2458 = vmul.f32 1.0, %v2457
          %v2459 = vrcp.pop %v2437
          %v2460 = vmul.f32 1.0, %v2459
          %v2461 = vrcp.pop %v2438
          %v2462 = vmul.f32 1.0, %v2461
          %v2463 = vrcp.pop %v2439
          %v2464 = vmul.f32 1.0, %v2463
          %v2465 = vrcp.pop %v2440
          %v2466 = vmul.f32 1.0, %v2465
          %v2467 = vrcp.pop %v2441
          %v2468 = vmul.f32 1.0, %v2467
          %v2469 = vrcp.pop %v2442
          %v2470 = vmul.f32 1.0, %v2469
          %v2471 = vrcp.pop %v2443
          %v2472 = vmul.f32 1.0, %v2471
          %v2473 = vrcp.pop %v2444
          %v2474 = vmul.f32 1.0, %v2473
          %v2475 = vrcp.pop %v2445
          %v2476 = vmul.f32 1.0, %v2475
          %v2477 = vrcp.pop %v2446
          %v2478 = vmul.f32 1.0, %v2477
          %2480 = vset.pattern.permute.xlu0 0
          %2481 = vperm.xlu0 %2480, %v2448
          %v2482 = vpop.permute.xlu0 %2481
          %2485 = vset.pattern.permute.xlu0 0
          %2486 = vperm.xlu0 %2485, %v2450
          %v2487 = vpop.permute.xlu0 %2486
          %2490 = vset.pattern.permute.xlu0 0
          %2491 = vperm.xlu0 %2490, %v2452
          %v2492 = vpop.permute.xlu0 %2491
          %2495 = vset.pattern.permute.xlu0 0
          %2496 = vperm.xlu0 %2495, %v2454
          %v2497 = vpop.permute.xlu0 %2496
          %2500 = vset.pattern.permute.xlu0 0
          %2501 = vperm.xlu0 %2500, %v2456
          %v2502 = vpop.permute.xlu0 %2501
          %2505 = vset.pattern.permute.xlu0 0
          %2506 = vperm.xlu0 %2505, %v2458
          %v2507 = vpop.permute.xlu0 %2506
          %2510 = vset.pattern.permute.xlu0 0
          %2511 = vperm.xlu0 %2510, %v2460
          %v2512 = vpop.permute.xlu0 %2511
          %2515 = vset.pattern.permute.xlu0 0
          %2516 = vperm.xlu0 %2515, %v2462
          %v2517 = vpop.permute.xlu0 %2516
          %2520 = vset.pattern.permute.xlu0 0
          %2521 = vperm.xlu0 %2520, %v2464
          %v2522 = vpop.permute.xlu0 %2521
          %2525 = vset.pattern.permute.xlu0 0
          %2526 = vperm.xlu0 %2525, %v2466
          %v2527 = vpop.permute.xlu0 %2526
          %2530 = vset.pattern.permute.xlu0 0
          %2531 = vperm.xlu0 %2530, %v2468
          %v2532 = vpop.permute.xlu0 %2531
          %2535 = vset.pattern.permute.xlu0 0
          %2536 = vperm.xlu0 %2535, %v2470
          %v2537 = vpop.permute.xlu0 %2536
          %2540 = vset.pattern.permute.xlu0 0
          %2541 = vperm.xlu0 %2540, %v2472
          %v2542 = vpop.permute.xlu0 %2541
          %2545 = vset.pattern.permute.xlu0 0
          %2546 = vperm.xlu0 %2545, %v2474
          %v2547 = vpop.permute.xlu0 %2546
          %2550 = vset.pattern.permute.xlu0 0
          %2551 = vperm.xlu0 %2550, %v2476
          %v2552 = vpop.permute.xlu0 %2551
          %2555 = vset.pattern.permute.xlu0 0
          %2556 = vperm.xlu0 %2555, %v2478
          %v2557 = vpop.permute.xlu0 %2556
          %v2559 = vmul.f32 %v2482, %v2211
          %v2560 = vmul.f32 %v2487, %v2216
          %v2561 = vmul.f32 %v2492, %v2221
          %v2562 = vmul.f32 %v2497, %v2226
          %v2563 = vmul.f32 %v2502, %v2231
          %v2564 = vmul.f32 %v2507, %v2236
          %v2565 = vmul.f32 %v2512, %v2241
          %v2566 = vmul.f32 %v2517, %v2246
          %v2567 = vmul.f32 %v2522, %v2251
          %v2568 = vmul.f32 %v2527, %v2256
          %v2569 = vmul.f32 %v2532, %v2261
          %v2570 = vmul.f32 %v2537, %v2266
          %v2571 = vmul.f32 %v2542, %v2271
          %v2572 = vmul.f32 %v2547, %v2276
          %v2573 = vmul.f32 %v2552, %v2281
          %v2574 = vmul.f32 %v2557, %v2286
          %v2575 = vsub.f32 1.0, %v2448
          %v2576 = vsub.f32 1.0, %v2450
          %v2577 = vsub.f32 1.0, %v2452
          %v2578 = vsub.f32 1.0, %v2454
          %v2579 = vsub.f32 1.0, %v2456
          %v2580 = vsub.f32 1.0, %v2458
          %v2581 = vsub.f32 1.0, %v2460
          %v2582 = vsub.f32 1.0, %v2462
          %v2583 = vsub.f32 1.0, %v2464
          %v2584 = vsub.f32 1.0, %v2466
          %v2585 = vsub.f32 1.0, %v2468
          %v2586 = vsub.f32 1.0, %v2470
          %v2587 = vsub.f32 1.0, %v2472
          %v2588 = vsub.f32 1.0, %v2474
          %v2589 = vsub.f32 1.0, %v2476
          %v2590 = vsub.f32 1.0, %v2478
          %2592 = vset.pattern.permute.xlu0 0
          %2593 = vperm.xlu0 %2592, %v2575
          %v2594 = vpop.permute.xlu0 %2593
          %2597 = vset.pattern.permute.xlu0 0
          %2598 = vperm.xlu0 %2597, %v2576
          %v2599 = vpop.permute.xlu0 %2598
          %2602 = vset.pattern.permute.xlu0 0
          %2603 = vperm.xlu0 %2602, %v2577
          %v2604 = vpop.permute.xlu0 %2603
          %2607 = vset.pattern.permute.xlu0 0
          %2608 = vperm.xlu0 %2607, %v2578
          %v2609 = vpop.permute.xlu0 %2608
          %2612 = vset.pattern.permute.xlu0 0
          %2613 = vperm.xlu0 %2612, %v2579
          %v2614 = vpop.permute.xlu0 %2613
          %2617 = vset.pattern.permute.xlu0 0
          %2618 = vperm.xlu0 %2617, %v2580
          %v2619 = vpop.permute.xlu0 %2618
          %2622 = vset.pattern.permute.xlu0 0
          %2623 = vperm.xlu0 %2622, %v2581
          %v2624 = vpop.permute.xlu0 %2623
          %2627 = vset.pattern.permute.xlu0 0
          %2628 = vperm.xlu0 %2627, %v2582
          %v2629 = vpop.permute.xlu0 %2628
          %2632 = vset.pattern.permute.xlu0 0
          %2633 = vperm.xlu0 %2632, %v2583
          %v2634 = vpop.permute.xlu0 %2633
          %2637 = vset.pattern.permute.xlu0 0
          %2638 = vperm.xlu0 %2637, %v2584
          %v2639 = vpop.permute.xlu0 %2638
          %2642 = vset.pattern.permute.xlu0 0
          %2643 = vperm.xlu0 %2642, %v2585
          %v2644 = vpop.permute.xlu0 %2643
          %2647 = vset.pattern.permute.xlu0 0
          %2648 = vperm.xlu0 %2647, %v2586
          %v2649 = vpop.permute.xlu0 %2648
          %2652 = vset.pattern.permute.xlu0 0
          %2653 = vperm.xlu0 %2652, %v2587
          %v2654 = vpop.permute.xlu0 %2653
          %2657 = vset.pattern.permute.xlu0 0
          %2658 = vperm.xlu0 %2657, %v2588
          %v2659 = vpop.permute.xlu0 %2658
          %2662 = vset.pattern.permute.xlu0 0
          %2663 = vperm.xlu0 %2662, %v2589
          %v2664 = vpop.permute.xlu0 %2663
          %2667 = vset.pattern.permute.xlu0 0
          %2668 = vperm.xlu0 %2667, %v2590
          %v2669 = vpop.permute.xlu0 %2668
          %v2671 = vmul.f32 %v2594, %v2211
          %v2672 = vmul.f32 %v2599, %v2216
          %v2673 = vmul.f32 %v2604, %v2221
          %v2674 = vmul.f32 %v2609, %v2226
          %v2675 = vmul.f32 %v2614, %v2231
          %v2676 = vmul.f32 %v2619, %v2236
          %v2677 = vmul.f32 %v2624, %v2241
          %v2678 = vmul.f32 %v2629, %v2246
          %v2679 = vmul.f32 %v2634, %v2251
          %v2680 = vmul.f32 %v2639, %v2256
          %v2681 = vmul.f32 %v2644, %v2261
          %v2682 = vmul.f32 %v2649, %v2266
          %v2683 = vmul.f32 %v2654, %v2271
          %v2684 = vmul.f32 %v2659, %v2276
          %v2685 = vmul.f32 %v2664, %v2281
          %v2686 = vmul.f32 %v2669, %v2286
          %2703 = vrot.lane.b32.xlu0 %v2671, 96
          %v2704 = vpop.permute.xlu0 %2703
          %2705 = vrot.lane.b32.xlu0 %v2672, 96
          %v2706 = vpop.permute.xlu0 %2705
          %2707 = vrot.lane.b32.xlu0 %v2673, 96
          %v2708 = vpop.permute.xlu0 %2707
          %2709 = vrot.lane.b32.xlu0 %v2674, 96
          %v2710 = vpop.permute.xlu0 %2709
          %2711 = vrot.lane.b32.xlu0 %v2675, 96
          %v2712 = vpop.permute.xlu0 %2711
          %2713 = vrot.lane.b32.xlu0 %v2676, 96
          %v2714 = vpop.permute.xlu0 %2713
          %2715 = vrot.lane.b32.xlu0 %v2677, 96
          %v2716 = vpop.permute.xlu0 %2715
          %2717 = vrot.lane.b32.xlu0 %v2678, 96
          %v2718 = vpop.permute.xlu0 %2717
          %2719 = vrot.lane.b32.xlu0 %v2679, 96
          %v2720 = vpop.permute.xlu0 %2719
          %2721 = vrot.lane.b32.xlu0 %v2680, 96
          %v2722 = vpop.permute.xlu0 %2721
          %2723 = vrot.lane.b32.xlu0 %v2681, 96
          %v2724 = vpop.permute.xlu0 %2723
          %2725 = vrot.lane.b32.xlu0 %v2682, 96
          %v2726 = vpop.permute.xlu0 %2725
          %2727 = vrot.lane.b32.xlu0 %v2683, 96
          %v2728 = vpop.permute.xlu0 %2727
          %2729 = vrot.lane.b32.xlu0 %v2684, 96
          %v2730 = vpop.permute.xlu0 %2729
          %2731 = vrot.lane.b32.xlu0 %v2685, 96
          %v2732 = vpop.permute.xlu0 %2731
          %2733 = vrot.lane.b32.xlu0 %v2686, 96
          %v2734 = vpop.permute.xlu0 %2733
          %v2751 = vadd.f32 %v2559, %v2704
          %v2752 = vadd.f32 %v2560, %v2706
          %v2753 = vadd.f32 %v2561, %v2708
          %v2754 = vadd.f32 %v2562, %v2710
          %v2755 = vadd.f32 %v2563, %v2712
          %v2756 = vadd.f32 %v2564, %v2714
          %v2757 = vadd.f32 %v2565, %v2716
          %v2758 = vadd.f32 %v2566, %v2718
          %v2759 = vadd.f32 %v2567, %v2720
          %v2760 = vadd.f32 %v2568, %v2722
          %v2761 = vadd.f32 %v2569, %v2724
          %v2762 = vadd.f32 %v2570, %v2726
          %v2763 = vadd.f32 %v2571, %v2728
          %v2764 = vadd.f32 %v2572, %v2730
          %v2765 = vadd.f32 %v2573, %v2732
          %v2766 = vadd.f32 %v2574, %v2734
          %2783 = vrot.lane.b32.xlu0 %v2211, 96
          %v2784 = vpop.permute.xlu0 %2783
          %2785 = vrot.lane.b32.xlu0 %v2216, 96
          %v2786 = vpop.permute.xlu0 %2785
          %2787 = vrot.lane.b32.xlu0 %v2221, 96
          %v2788 = vpop.permute.xlu0 %2787
          %2789 = vrot.lane.b32.xlu0 %v2226, 96
          %v2790 = vpop.permute.xlu0 %2789
          %2791 = vrot.lane.b32.xlu0 %v2231, 96
          %v2792 = vpop.permute.xlu0 %2791
          %2793 = vrot.lane.b32.xlu0 %v2236, 96
          %v2794 = vpop.permute.xlu0 %2793
          %2795 = vrot.lane.b32.xlu0 %v2241, 96
          %v2796 = vpop.permute.xlu0 %2795
          %2797 = vrot.lane.b32.xlu0 %v2246, 96
          %v2798 = vpop.permute.xlu0 %2797
          %2799 = vrot.lane.b32.xlu0 %v2251, 96
          %v2800 = vpop.permute.xlu0 %2799
          %2801 = vrot.lane.b32.xlu0 %v2256, 96
          %v2802 = vpop.permute.xlu0 %2801
          %2803 = vrot.lane.b32.xlu0 %v2261, 96
          %v2804 = vpop.permute.xlu0 %2803
          %2805 = vrot.lane.b32.xlu0 %v2266, 96
          %v2806 = vpop.permute.xlu0 %2805
          %2807 = vrot.lane.b32.xlu0 %v2271, 96
          %v2808 = vpop.permute.xlu0 %2807
          %2809 = vrot.lane.b32.xlu0 %v2276, 96
          %v2810 = vpop.permute.xlu0 %2809
          %2811 = vrot.lane.b32.xlu0 %v2281, 96
          %v2812 = vpop.permute.xlu0 %2811
          %2813 = vrot.lane.b32.xlu0 %v2286, 96
          %v2814 = vpop.permute.xlu0 %2813
          %v2831 = vadd.f32 %v2211, %v2784
          %v2832 = vadd.f32 %v2216, %v2786
          %v2833 = vadd.f32 %v2221, %v2788
          %v2834 = vadd.f32 %v2226, %v2790
          %v2835 = vadd.f32 %v2231, %v2792
          %v2836 = vadd.f32 %v2236, %v2794
          %v2837 = vadd.f32 %v2241, %v2796
          %v2838 = vadd.f32 %v2246, %v2798
          %v2839 = vadd.f32 %v2251, %v2800
          %v2840 = vadd.f32 %v2256, %v2802
          %v2841 = vadd.f32 %v2261, %v2804
          %v2842 = vadd.f32 %v2266, %v2806
          %v2843 = vadd.f32 %v2271, %v2808
          %v2844 = vadd.f32 %v2276, %v2810
          %v2845 = vadd.f32 %v2281, %v2812
          %v2846 = vadd.f32 %v2286, %v2814
          %2863 = vrot.lane.b32.xlu0 %v2751, 64
          %v2864 = vpop.permute.xlu0 %2863
          %2865 = vrot.lane.b32.xlu0 %v2752, 64
          %v2866 = vpop.permute.xlu0 %2865
          %2867 = vrot.lane.b32.xlu0 %v2753, 64
          %v2868 = vpop.permute.xlu0 %2867
          %2869 = vrot.lane.b32.xlu0 %v2754, 64
          %v2870 = vpop.permute.xlu0 %2869
          %2871 = vrot.lane.b32.xlu0 %v2755, 64
          %v2872 = vpop.permute.xlu0 %2871
          %2873 = vrot.lane.b32.xlu0 %v2756, 64
          %v2874 = vpop.permute.xlu0 %2873
          %2875 = vrot.lane.b32.xlu0 %v2757, 64
          %v2876 = vpop.permute.xlu0 %2875
          %2877 = vrot.lane.b32.xlu0 %v2758, 64
          %v2878 = vpop.permute.xlu0 %2877
          %2879 = vrot.lane.b32.xlu0 %v2759, 64
          %v2880 = vpop.permute.xlu0 %2879
          %2881 = vrot.lane.b32.xlu0 %v2760, 64
          %v2882 = vpop.permute.xlu0 %2881
          %2883 = vrot.lane.b32.xlu0 %v2761, 64
          %v2884 = vpop.permute.xlu0 %2883
          %2885 = vrot.lane.b32.xlu0 %v2762, 64
          %v2886 = vpop.permute.xlu0 %2885
          %2887 = vrot.lane.b32.xlu0 %v2763, 64
          %v2888 = vpop.permute.xlu0 %2887
          %2889 = vrot.lane.b32.xlu0 %v2764, 64
          %v2890 = vpop.permute.xlu0 %2889
          %2891 = vrot.lane.b32.xlu0 %v2765, 64
          %v2892 = vpop.permute.xlu0 %2891
          %2893 = vrot.lane.b32.xlu0 %v2766, 64
          %v2894 = vpop.permute.xlu0 %2893
          %v2911 = vadd.f32 %v2831, %v2864
          %v2912 = vadd.f32 %v2832, %v2866
          %v2913 = vadd.f32 %v2833, %v2868
          %v2914 = vadd.f32 %v2834, %v2870
          %v2915 = vadd.f32 %v2835, %v2872
          %v2916 = vadd.f32 %v2836, %v2874
          %v2917 = vadd.f32 %v2837, %v2876
          %v2918 = vadd.f32 %v2838, %v2878
          %v2919 = vadd.f32 %v2839, %v2880
          %v2920 = vadd.f32 %v2840, %v2882
          %v2921 = vadd.f32 %v2841, %v2884
          %v2922 = vadd.f32 %v2842, %v2886
          %v2923 = vadd.f32 %v2843, %v2888
          %v2924 = vadd.f32 %v2844, %v2890
          %v2925 = vadd.f32 %v2845, %v2892
          %v2926 = vadd.f32 %v2846, %v2894
          %2943 = vrot.lane.b32.xlu0 %v2911, 32
          %v2944 = vpop.permute.xlu0 %2943
          %2945 = vrot.lane.b32.xlu0 %v2912, 32
          %v2946 = vpop.permute.xlu0 %2945
          %2947 = vrot.lane.b32.xlu0 %v2913, 32
          %v2948 = vpop.permute.xlu0 %2947
          %2949 = vrot.lane.b32.xlu0 %v2914, 32
          %v2950 = vpop.permute.xlu0 %2949
          %2951 = vrot.lane.b32.xlu0 %v2915, 32
          %v2952 = vpop.permute.xlu0 %2951
          %2953 = vrot.lane.b32.xlu0 %v2916, 32
          %v2954 = vpop.permute.xlu0 %2953
          %2955 = vrot.lane.b32.xlu0 %v2917, 32
          %v2956 = vpop.permute.xlu0 %2955
          %2957 = vrot.lane.b32.xlu0 %v2918, 32
          %v2958 = vpop.permute.xlu0 %2957
          %2959 = vrot.lane.b32.xlu0 %v2919, 32
          %v2960 = vpop.permute.xlu0 %2959
          %2961 = vrot.lane.b32.xlu0 %v2920, 32
          %v2962 = vpop.permute.xlu0 %2961
          %2963 = vrot.lane.b32.xlu0 %v2921, 32
          %v2964 = vpop.permute.xlu0 %2963
          %2965 = vrot.lane.b32.xlu0 %v2922, 32
          %v2966 = vpop.permute.xlu0 %2965
          %2967 = vrot.lane.b32.xlu0 %v2923, 32
          %v2968 = vpop.permute.xlu0 %2967
          %2969 = vrot.lane.b32.xlu0 %v2924, 32
          %v2970 = vpop.permute.xlu0 %2969
          %2971 = vrot.lane.b32.xlu0 %v2925, 32
          %v2972 = vpop.permute.xlu0 %2971
          %2973 = vrot.lane.b32.xlu0 %v2926, 32
          %v2974 = vpop.permute.xlu0 %2973
          %v2991 = vadd.f32 %v1811, %v2944
          %v2992 = vadd.f32 %v1816, %v2946
          %v2993 = vadd.f32 %v1821, %v2948
          %v2994 = vadd.f32 %v1826, %v2950
          %v2995 = vadd.f32 %v1831, %v2952
          %v2996 = vadd.f32 %v1836, %v2954
          %v2997 = vadd.f32 %v1841, %v2956
          %v2998 = vadd.f32 %v1846, %v2958
          %v2999 = vadd.f32 %v1851, %v2960
          %v3000 = vadd.f32 %v1856, %v2962
          %v3001 = vadd.f32 %v1861, %v2964
          %v3002 = vadd.f32 %v1866, %v2966
          %v3003 = vadd.f32 %v1871, %v2968
          %v3004 = vadd.f32 %v1876, %v2970
          %v3005 = vadd.f32 %v1881, %v2972
          %v3006 = vadd.f32 %v1886, %v2974
          %v3007 = vmax.f32 %v2991, 0.0
          %v3008 = vmax.f32 %v2992, 0.0
          %v3009 = vmax.f32 %v2993, 0.0
          %v3010 = vmax.f32 %v2994, 0.0
          %v3011 = vmax.f32 %v2995, 0.0
          %v3012 = vmax.f32 %v2996, 0.0
          %v3013 = vmax.f32 %v2997, 0.0
          %v3014 = vmax.f32 %v2998, 0.0
          %v3015 = vmax.f32 %v2999, 0.0
          %v3016 = vmax.f32 %v3000, 0.0
          %v3017 = vmax.f32 %v3001, 0.0
          %v3018 = vmax.f32 %v3002, 0.0
          %v3019 = vmax.f32 %v3003, 0.0
          %v3020 = vmax.f32 %v3004, 0.0
          %v3021 = vmax.f32 %v3005, 0.0
          %v3022 = vmax.f32 %v3006, 0.0
          %3039 = vrot.lane.b32.xlu0 %v3007, 96
          %v3040 = vpop.permute.xlu0 %3039
          %3041 = vrot.lane.b32.xlu0 %v3008, 96
          %v3042 = vpop.permute.xlu0 %3041
          %3043 = vrot.lane.b32.xlu0 %v3009, 96
          %v3044 = vpop.permute.xlu0 %3043
          %3045 = vrot.lane.b32.xlu0 %v3010, 96
          %v3046 = vpop.permute.xlu0 %3045
          %3047 = vrot.lane.b32.xlu0 %v3011, 96
          %v3048 = vpop.permute.xlu0 %3047
          %3049 = vrot.lane.b32.xlu0 %v3012, 96
          %v3050 = vpop.permute.xlu0 %3049
          %3051 = vrot.lane.b32.xlu0 %v3013, 96
          %v3052 = vpop.permute.xlu0 %3051
          %3053 = vrot.lane.b32.xlu0 %v3014, 96
          %v3054 = vpop.permute.xlu0 %3053
          %3055 = vrot.lane.b32.xlu0 %v3015, 96
          %v3056 = vpop.permute.xlu0 %3055
          %3057 = vrot.lane.b32.xlu0 %v3016, 96
          %v3058 = vpop.permute.xlu0 %3057
          %3059 = vrot.lane.b32.xlu0 %v3017, 96
          %v3060 = vpop.permute.xlu0 %3059
          %3061 = vrot.lane.b32.xlu0 %v3018, 96
          %v3062 = vpop.permute.xlu0 %3061
          %3063 = vrot.lane.b32.xlu0 %v3019, 96
          %v3064 = vpop.permute.xlu0 %3063
          %3065 = vrot.lane.b32.xlu0 %v3020, 96
          %v3066 = vpop.permute.xlu0 %3065
          %3067 = vrot.lane.b32.xlu0 %v3021, 96
          %v3068 = vpop.permute.xlu0 %3067
          %3069 = vrot.lane.b32.xlu0 %v3022, 96
          %v3070 = vpop.permute.xlu0 %3069
          %3087 = vst.msk [vmem:[%s651] sm:$0xff] %vm1218, %v3040
          %3088 = vst.msk [vmem:[%s651 + $0x8] sm:$0xff] %vm1218, %v3042
          %3089 = vst.msk [vmem:[%s651 + $0x10] sm:$0xff] %vm1218, %v3044
          %3090 = vst.msk [vmem:[%s651 + $0x18] sm:$0xff] %vm1218, %v3046
          %3091 = vst.msk [vmem:[%s651 + $0x20] sm:$0xff] %vm1218, %v3048
          %3092 = vst.msk [vmem:[%s651 + $0x28] sm:$0xff] %vm1218, %v3050
          %3093 = vst.msk [vmem:[%s651 + $0x30] sm:$0xff] %vm1218, %v3052
          %3094 = vst.msk [vmem:[%s651 + $0x38] sm:$0xff] %vm1218, %v3054
          %3095 = vst.msk [vmem:[%s651 + $0x40] sm:$0xff] %vm1218, %v3056
          %3096 = vst.msk [vmem:[%s651 + $0x48] sm:$0xff] %vm1218, %v3058
          %3097 = vst.msk [vmem:[%s651 + $0x50] sm:$0xff] %vm1218, %v3060
          %3098 = vst.msk [vmem:[%s651 + $0x58] sm:$0xff] %vm1218, %v3062
          %3099 = vst.msk [vmem:[%s651 + $0x60] sm:$0xff] %vm1218, %v3064
          %3100 = vst.msk [vmem:[%s651 + $0x68] sm:$0xff] %vm1218, %v3066
          %3101 = vst.msk [vmem:[%s651 + $0x70] sm:$0xff] %vm1218, %v3068
          %3102 = vst.msk [vmem:[%s651 + $0x78] sm:$0xff] %vm1218, %v3070
        $region133: #{lasage_s_conv.1} parent=104 // pred_fallthru
          _
        %s3103 = smul.u32 16, %s32
        %p3104 = scmp.lt.s32.totalorder %s3103, 31
        %s3105 = scalar_select %p3104, %s3103, 31
        %s3106 = smul.addr %s3105, 8
        %s3107 = scalar_lea.vmem %s12, %s3106
        // Predicated region
        $region134: #{lasage_s_conv.1} parent=104 // pred_check
          %p3108 = pneg %p332
        $region135: #{lasage_s_conv.1} parent=104 // pred_check_branch
          %3110 = sbr.rel (%p3108) target = $region137
        $region136: #{lasage_s_conv.1} parent=104 // pred_region
          %s3111 = smul.u32 16, %s32
        $region137: #{lasage_s_conv.1} parent=104 // pred_fallthru
          _
      $region105: #{lasage_s_conv.1} parent=5 // pred_fallthru
        _
      %p3112 = scmp.le.s32.totalorder 2, %s23
      // Predicated region
      $region138: #{lasage_s_conv.1} parent=5 // pred_check
        %p3113 = pneg %p3112
      $region139: #{lasage_s_conv.1} parent=5 // pred_check_branch
        %3115 = sbr.rel (%p3113) target = $region141
      $region140: #{lasage_s_conv.1} parent=5 // pred_region
        %s3116 = ssub.s32 %s23, 2
        // Predicated region
        $region142: #{lasage_s_conv.1} parent=140 // pred_check
          %p3117 = pneg %p338
        $region143: #{lasage_s_conv.1} parent=140 // pred_check_branch
          %3119 = sbr.rel (%p3117) target = $region145
        $region144: #{lasage_s_conv.1} parent=140 // pred_region
          %s3120 = smul.u32 16, %s34
          %p3121 = scmp.lt.s32.totalorder %s3120, 31
          %s3122 = scalar_select %p3121, %s3120, 31
          %s3123 = smul.addr %s3122, 8
          %s3124 = scalar_lea.vmem %s12, %s3123
        $region145: #{lasage_s_conv.1} parent=140 // pred_fallthru
          _
      $region141: #{lasage_s_conv.1} parent=5 // pred_fallthru
        _
    $region6: #{lasage_s_conv.1} parent=1 // loop_footer
      %s27 = sadd.s32 1, %s23
    $region7: #{lasage_s_conv.1} parent=1 // loop_footer_branch
      %22 = sbr.rel target = $region3
    $region8: #{lasage_s_conv.1} parent=1 // loop_exit
      _
    %3125 = vsyncpa [#allocation6], 1
    %s3126 = scalar_lea.sflag [#allocation6], 1
    %3127 = vsyncpa %s3126, 1
    %3128 = vsyncpa [#allocation8], 1
    %3129 = vsyncpa [#allocation11], 1

</llo_original>
